<compile_context>
chip_gen: v7x
topology: tpu7x:2x2x1
jax: 0.10.0
libtpu: 0.0.40
codegen_flags: <defaults>
</compile_context>

<pallas_src>
import functools

import numpy as np
import jax
import jax.numpy as jnp
from jax.experimental import pallas as pl
from jax.experimental.pallas import tpu as pltpu


# ---------------------------------------------------------------------------
# Fused Pallas kernel: conv3x3+BN+ReLU -> conv3x3+BN -> +residual -> ReLU
# ---------------------------------------------------------------------------
def _basic_block_kernel(x_ref, w1_ref, b1_ref, w2_ref, b2_ref, mask_ref,
                        o_ref, acc_ref, out1_ref, *, Wp, P):
    """One image per grid step.

    x_ref    : (Cin, L)        bf16  zero-padded image, rows flattened w/ stride Wp
    w1_ref   : (9, Cout, Cin)  bf16  per-tap conv1 weights, BN1 scale folded in
    b1_ref   : (Cout, 1)       f32   BN1 shift
    w2_ref   : (9, Cout, Cout) bf16  per-tap conv2 weights, BN2 scale folded in
    b2_ref   : (Cout, 1)       f32   BN2 shift
    mask_ref : (1, P)          f32   1.0 where (col % Wp) < W else 0.0
    o_ref    : (Cout, P)       f32   output (junk width-pad columns sliced off later)
    acc_ref  : (Cout, P)       f32   VMEM accumulator scratch
    out1_ref : (Cout, L)       bf16  VMEM staging for zero-padded conv1 output
    """
    # ---- conv1 (+ folded BN1 scale): 9-tap shift-and-accumulate, K = Cin ----
    acc_ref[...] = jnp.zeros_like(acc_ref)
    for k in range(9):
        off = (k // 3) * Wp + (k % 3)
        acc_ref[...] += jnp.dot(w1_ref[k], x_ref[:, off:off + P],
                                preferred_element_type=jnp.float32)

    # BN1 shift + ReLU; zero the junk (width-pad) columns so they act as the
    # zero padding of conv1's output, then stage it in VMEM for conv2's taps.
    out1 = jnp.maximum(acc_ref[...] + b1_ref[...], 0.0) * mask_ref[...]
    out1_ref[...] = jnp.zeros_like(out1_ref)
    out1_ref[:, Wp + 1:Wp + 1 + P] = out1.astype(out1_ref.dtype)

    # ---- conv2 (+ folded BN2 scale) ----
    acc_ref[...] = jnp.zeros_like(acc_ref)
    for k in range(9):
        off = (k // 3) * Wp + (k % 3)
        acc_ref[...] += jnp.dot(w2_ref[k], out1_ref[:, off:off + P],
                                preferred_element_type=jnp.float32)

    # BN2 shift + identity residual (resident input tile) + ReLU (f32 epilogue).
    residual = x_ref[:, Wp + 1:Wp + 1 + P].astype(jnp.float32)
    o_ref[...] = jnp.maximum(acc_ref[...] + b2_ref[...] + residual,
                             0.0).astype(o_ref.dtype)


# ---------------------------------------------------------------------------
# Wrapper (plain-JAX glue: padding, BN folding, weight reshapes)
# ---------------------------------------------------------------------------
def _fold_bn(gamma, beta, mean, var, eps=1e-5):
    scale = gamma / jnp.sqrt(var + eps)
    shift = beta - mean * scale
    return scale, shift


def basic_block_forward(x_nchw, w1, w2, bn1, bn2):
    """BasicBlock forward (stride=1, downsample=None). NCHW in / NCHW out.
    w1: (planes, inplanes, 3, 3) OIHW; w2: (planes, planes, 3, 3) OIHW."""
    # TODO(synk): BatchNorm is eval-mode (running stats); the optional
    # `downsample` submodule and stride>1 are not modeled (module defaults).
    N, Cin, H, W = x_nchw.shape
    Cout = w1.shape[0]
    assert Cin == Cout, "identity residual path requires inplanes == planes"

    Hp, Wp = H + 2, W + 2
    P = H * Wp                                  # flattened output columns per image
    L = ((Hp * Wp + 2 + 127) // 128) * 128      # padded flat length (tap slices in-bounds)

    # Fold BN scale into the conv weights; reorder OIHW -> (tap=dy*3+dx, Cout, Cin).
    s1, b1 = _fold_bn(*bn1)
    s2, b2 = _fold_bn(*bn2)
    w1t = jnp.transpose(w1 * s1[:, None, None, None], (2, 3, 0, 1))
    w1t = w1t.reshape(9, Cout, Cin).astype(jnp.bfloat16)
    w2t = jnp.transpose(w2 * s2[:, None, None, None], (2, 3, 0, 1))
    w2t = w2t.reshape(9, Cout, Cout).astype(jnp.bfloat16)
    b1c = b1.reshape(Cout, 1).astype(jnp.float32)
    b2c = b2.reshape(Cout, 1).astype(jnp.float32)

    # Zero-pad spatially (pad=1), flatten rows (row stride Wp), pad the tail.
    xp = jnp.pad(x_nchw.astype(jnp.float32), ((0, 0), (0, 0), (1, 1), (1, 1)))
    xflat = xp.reshape(N, Cin, Hp * Wp)
    xflat = jnp.pad(xflat, ((0, 0), (0, 0), (0, L - Hp * Wp))).astype(jnp.bfloat16)

    # Valid-column mask: flat column p -> (h, w) = (p // Wp, p % Wp);
    # the last 2 columns of each row are junk from the width-pad trick.
    cols = jnp.arange(P, dtype=jnp.int32)
    mask = ((cols % Wp) < W).astype(jnp.float32).reshape(1, P)

    kernel = functools.partial(_basic_block_kernel, Wp=Wp, P=P)
    out_flat = pl.pallas_call(
        kernel,
        out_shape=jax.ShapeDtypeStruct((N, Cout, P), jnp.float32),
        grid=(N,),
        in_specs=[
            pl.BlockSpec((None, Cin, L), lambda n: (n, 0, 0)),    # x (one image/step)
            pl.BlockSpec((9, Cout, Cin), lambda n: (0, 0, 0)),    # w1 (resident)
            pl.BlockSpec((Cout, 1), lambda n: (0, 0)),            # b1
            pl.BlockSpec((9, Cout, Cout), lambda n: (0, 0, 0)),   # w2 (resident)
            pl.BlockSpec((Cout, 1), lambda n: (0, 0)),            # b2
            pl.BlockSpec((1, P), lambda n: (0, 0)),               # column mask
        ],
        out_specs=pl.BlockSpec((None, Cout, P), lambda n: (n, 0, 0)),
        scratch_shapes=[
            pltpu.VMEM((Cout, P), jnp.float32),    # f32 accumulator
            pltpu.VMEM((Cout, L), jnp.bfloat16),   # zero-padded conv1 output
        ],
        compiler_params=pltpu.CompilerParams(
            dimension_semantics=("parallel",)),     # megacore: shard batch on v7x
    )(xflat, w1t, b1c, w2t, b2c, mask)

    # (N, Cout, H*Wp) -> (N, Cout, H, Wp) -> drop the 2 junk columns per row.
    return out_flat.reshape(N, Cout, H, Wp)[:, :, :, :W]


# ---------------------------------------------------------------------------
# Deterministic parameter init (mirrors module __init__ shapes)
# ---------------------------------------------------------------------------
def init_params(key, inplanes, planes):
    k1, k2, k3, k4 = jax.random.split(key, 4)
    w1 = jax.random.normal(k1, (planes, inplanes, 3, 3), jnp.float32) / np.sqrt(9 * inplanes)
    w2 = jax.random.normal(k2, (planes, planes, 3, 3), jnp.float32) / np.sqrt(9 * planes)

    def bn_params(k, c):
        ka, kb, kc, kd = jax.random.split(k, 4)
        gamma = 1.0 + 0.1 * jax.random.normal(ka, (c,), jnp.float32)
        beta = 0.1 * jax.random.normal(kb, (c,), jnp.float32)
        mean = 0.1 * jax.random.normal(kc, (c,), jnp.float32)
        var = jax.random.uniform(kd, (c,), jnp.float32, minval=0.5, maxval=1.5)
        return gamma, beta, mean, var

    return w1, w2, bn_params(k3, planes), bn_params(k4, planes)


# ---------------------------------------------------------------------------
# Pure-JAX reference for correctness check
# ---------------------------------------------------------------------------
def reference_forward(x, w1, w2, bn1, bn2):
    def conv(x, w):
        return jax.lax.conv_general_dilated(
            x, w, window_strides=(1, 1), padding=((1, 1), (1, 1)),
            dimension_numbers=("NCHW", "OIHW", "NCHW"))

    def bn(x, p):
        gamma, beta, mean, var = p
        s = gamma / jnp.sqrt(var + 1e-5)
        return x * s[None, :, None, None] + (beta - mean * s)[None, :, None, None]

    out = jax.nn.relu(bn(conv(x, w1), bn1))
    out = bn(conv(out, w2), bn2)
    return jax.nn.relu(out + x)


if __name__ == "__main__":
    key = jax.random.PRNGKey(0)
    kx, kp = jax.random.split(key)

    N, C, H, W = 2, 4, 16, 16  # batch=2, inplanes=planes=4, spatial=16
    x = jax.random.normal(kx, (N, C, H, W), jnp.float32)
    w1, w2, bn1, bn2 = init_params(kp, C, C)

    fwd = jax.jit(basic_block_forward)
    out = jax.block_until_ready(fwd(x, w1, w2, bn1, bn2))

    ref = reference_forward(x, w1, w2, bn1, bn2)
    # Tolerance sized for the bf16 MXU operands (two chained convs at ~2^-8
    # relative rounding per operand); the accumulation/epilogue are f32.
    np.testing.assert_allclose(np.asarray(out), np.asarray(ref), rtol=5e-2, atol=5e-2)

    print("KERNEL_OK")
</pallas_src>

<mosaic_0001>
module attributes {stable_mosaic.version = 11 : i64} {
  func.func @_basic_block_kernel(%arg0: i32, %arg1: memref<1x4x384xbf16, #tpu.memory_space<vmem>>, %arg2: memref<9x4x4xbf16, #tpu.memory_space<vmem>>, %arg3: memref<4x1xf32, #tpu.memory_space<vmem>>, %arg4: memref<9x4x4xbf16, #tpu.memory_space<vmem>>, %arg5: memref<4x1xf32, #tpu.memory_space<vmem>>, %arg6: memref<1x288xf32, #tpu.memory_space<vmem>>, %arg7: memref<1x4x288xf32, #tpu.memory_space<vmem>>, %arg8: memref<4x288xf32, #tpu.memory_space<vmem>>, %arg9: memref<4x384xbf16, #tpu.memory_space<vmem>>) attributes {dimension_semantics = [#tpu.dimension_semantics<parallel>], iteration_bounds = array<i64: 2>, scalar_prefetch = 0 : i64, scratch_operands = 2 : i64, tpu.core_type = #tpu.core_type<tc>, window_params = [{transform_indices = @transform_0, window_bounds = array<i64: 1, 4, 384>}, {pipeline_mode = #tpu.pipeline_mode<synchronous>, transform_indices = @transform_1, window_bounds = array<i64: 9, 4, 4>}, {pipeline_mode = #tpu.pipeline_mode<synchronous>, transform_indices = @transform_2, window_bounds = array<i64: 4, 1>}, {pipeline_mode = #tpu.pipeline_mode<synchronous>, transform_indices = @transform_3, window_bounds = array<i64: 9, 4, 4>}, {pipeline_mode = #tpu.pipeline_mode<synchronous>, transform_indices = @transform_4, window_bounds = array<i64: 4, 1>}, {pipeline_mode = #tpu.pipeline_mode<synchronous>, transform_indices = @transform_5, window_bounds = array<i64: 1, 288>}, {transform_indices = @transform_6, window_bounds = array<i64: 1, 4, 288>}]} {
    %cst = arith.constant 0.000000e+00 : f32
    %0 = vector.broadcast %cst : f32 to vector<4x288xf32>
    %c0 = arith.constant 0 : index
    %c0_0 = arith.constant 0 : index
    %1 = vector.load %arg8[%c0, %c0_0] : memref<4x288xf32, #tpu.memory_space<vmem>>, vector<4x288xf32>
    tpu.vector_store %arg8[%c0, %c0_0], %0 {strides = array<i32>} : memref<4x288xf32, #tpu.memory_space<vmem>>, vector<4x288xf32>,
    %c0_1 = arith.constant 0 : index
    %c0_2 = arith.constant 0 : index
    %2 = vector.load %arg8[%c0_1, %c0_2] : memref<4x288xf32, #tpu.memory_space<vmem>>, vector<4x288xf32>
    %c0_3 = arith.constant 0 : index
    %c0_4 = arith.constant 0 : index
    %c0_5 = arith.constant 0 : index
    %3 = vector.load %arg2[%c0_3, %c0_4, %c0_5] : memref<9x4x4xbf16, #tpu.memory_space<vmem>>, vector<1x4x4xbf16>
    %4 = vector.shape_cast %3 : vector<1x4x4xbf16> to vector<4x4xbf16>
    %c0_6 = arith.constant 0 : index
    %c0_7 = arith.constant 0 : index
    %c0_8 = arith.constant 0 : index
    %5 = vector.load %arg1[%c0_6, %c0_7, %c0_8] : memref<1x4x384xbf16, #tpu.memory_space<vmem>>, vector<1x4x288xbf16>
    %6 = vector.shape_cast %5 : vector<1x4x288xbf16> to vector<4x288xbf16>
    %cst_9 = arith.constant dense<0.000000e+00> : vector<4x288xf32>
    %7 = tpu.matmul %4, %6, %cst_9 {dimension_numbers = #tpu.dot_dimension_numbers<[1], [0], [0], [1], [0, 0, 1, 1], [], []>} : vector<4x4xbf16>, vector<4x288xbf16>, vector<4x288xf32> -> vector<4x288xf32>
    %8 = arith.addf %2, %7 : vector<4x288xf32>
    %c0_10 = arith.constant 0 : index
    %c0_11 = arith.constant 0 : index
    %9 = vector.load %arg8[%c0_10, %c0_11] : memref<4x288xf32, #tpu.memory_space<vmem>>, vector<4x288xf32>
    tpu.vector_store %arg8[%c0_10, %c0_11], %8 {strides = array<i32>} : memref<4x288xf32, #tpu.memory_space<vmem>>, vector<4x288xf32>,
    %c0_12 = arith.constant 0 : index
    %c0_13 = arith.constant 0 : index
    %10 = vector.load %arg8[%c0_12, %c0_13] : memref<4x288xf32, #tpu.memory_space<vmem>>, vector<4x288xf32>
    %c1 = arith.constant 1 : index
    %c0_14 = arith.constant 0 : index
    %c0_15 = arith.constant 0 : index
    %11 = vector.load %arg2[%c1, %c0_14, %c0_15] : memref<9x4x4xbf16, #tpu.memory_space<vmem>>, vector<1x4x4xbf16>
    %12 = vector.shape_cast %11 : vector<1x4x4xbf16> to vector<4x4xbf16>
    %c0_16 = arith.constant 0 : index
    %c0_17 = arith.constant 0 : index
    %c1_18 = arith.constant 1 : index
    %13 = vector.load %arg1[%c0_16, %c0_17, %c1_18] : memref<1x4x384xbf16, #tpu.memory_space<vmem>>, vector<1x4x288xbf16>
    %14 = vector.shape_cast %13 : vector<1x4x288xbf16> to vector<4x288xbf16>
    %cst_19 = arith.constant dense<0.000000e+00> : vector<4x288xf32>
    %15 = tpu.matmul %12, %14, %cst_19 {dimension_numbers = #tpu.dot_dimension_numbers<[1], [0], [0], [1], [0, 0, 1, 1], [], []>} : vector<4x4xbf16>, vector<4x288xbf16>, vector<4x288xf32> -> vector<4x288xf32>
    %16 = arith.addf %10, %15 : vector<4x288xf32>
    %c0_20 = arith.constant 0 : index
    %c0_21 = arith.constant 0 : index
    %17 = vector.load %arg8[%c0_20, %c0_21] : memref<4x288xf32, #tpu.memory_space<vmem>>, vector<4x288xf32>
    tpu.vector_store %arg8[%c0_20, %c0_21], %16 {strides = array<i32>} : memref<4x288xf32, #tpu.memory_space<vmem>>, vector<4x288xf32>,
    %c0_22 = arith.constant 0 : index
    %c0_23 = arith.constant 0 : index
    %18 = vector.load %arg8[%c0_22, %c0_23] : memref<4x288xf32, #tpu.memory_space<vmem>>, vector<4x288xf32>
    %c2 = arith.constant 2 : index
    %c0_24 = arith.constant 0 : index
    %c0_25 = arith.constant 0 : index
    %19 = vector.load %arg2[%c2, %c0_24, %c0_25] : memref<9x4x4xbf16, #tpu.memory_space<vmem>>, vector<1x4x4xbf16>
    %20 = vector.shape_cast %19 : vector<1x4x4xbf16> to vector<4x4xbf16>
    %c0_26 = arith.constant 0 : index
    %c0_27 = arith.constant 0 : index
    %c2_28 = arith.constant 2 : index
    %21 = vector.load %arg1[%c0_26, %c0_27, %c2_28] : memref<1x4x384xbf16, #tpu.memory_space<vmem>>, vector<1x4x288xbf16>
    %22 = vector.shape_cast %21 : vector<1x4x288xbf16> to vector<4x288xbf16>
    %cst_29 = arith.constant dense<0.000000e+00> : vector<4x288xf32>
    %23 = tpu.matmul %20, %22, %cst_29 {dimension_numbers = #tpu.dot_dimension_numbers<[1], [0], [0], [1], [0, 0, 1, 1], [], []>} : vector<4x4xbf16>, vector<4x288xbf16>, vector<4x288xf32> -> vector<4x288xf32>
    %24 = arith.addf %18, %23 : vector<4x288xf32>
    %c0_30 = arith.constant 0 : index
    %c0_31 = arith.constant 0 : index
    %25 = vector.load %arg8[%c0_30, %c0_31] : memref<4x288xf32, #tpu.memory_space<vmem>>, vector<4x288xf32>
    tpu.vector_store %arg8[%c0_30, %c0_31], %24 {strides = array<i32>} : memref<4x288xf32, #tpu.memory_space<vmem>>, vector<4x288xf32>,
    %c0_32 = arith.constant 0 : index
    %c0_33 = arith.constant 0 : index
    %26 = vector.load %arg8[%c0_32, %c0_33] : memref<4x288xf32, #tpu.memory_space<vmem>>, vector<4x288xf32>
    %c3 = arith.constant 3 : index
    %c0_34 = arith.constant 0 : index
    %c0_35 = arith.constant 0 : index
    %27 = vector.load %arg2[%c3, %c0_34, %c0_35] : memref<9x4x4xbf16, #tpu.memory_space<vmem>>, vector<1x4x4xbf16>
    %28 = vector.shape_cast %27 : vector<1x4x4xbf16> to vector<4x4xbf16>
    %c0_36 = arith.constant 0 : index
    %c0_37 = arith.constant 0 : index
    %c18 = arith.constant 18 : index
    %29 = vector.load %arg1[%c0_36, %c0_37, %c18] : memref<1x4x384xbf16, #tpu.memory_space<vmem>>, vector<1x4x288xbf16>
    %30 = vector.shape_cast %29 : vector<1x4x288xbf16> to vector<4x288xbf16>
    %cst_38 = arith.constant dense<0.000000e+00> : vector<4x288xf32>
    %31 = tpu.matmul %28, %30, %cst_38 {dimension_numbers = #tpu.dot_dimension_numbers<[1], [0], [0], [1], [0, 0, 1, 1], [], []>} : vector<4x4xbf16>, vector<4x288xbf16>, vector<4x288xf32> -> vector<4x288xf32>
    %32 = arith.addf %26, %31 : vector<4x288xf32>
    %c0_39 = arith.constant 0 : index
    %c0_40 = arith.constant 0 : index
    %33 = vector.load %arg8[%c0_39, %c0_40] : memref<4x288xf32, #tpu.memory_space<vmem>>, vector<4x288xf32>
    tpu.vector_store %arg8[%c0_39, %c0_40], %32 {strides = array<i32>} : memref<4x288xf32, #tpu.memory_space<vmem>>, vector<4x288xf32>,
    %c0_41 = arith.constant 0 : index
    %c0_42 = arith.constant 0 : index
    %34 = vector.load %arg8[%c0_41, %c0_42] : memref<4x288xf32, #tpu.memory_space<vmem>>, vector<4x288xf32>
    %c4 = arith.constant 4 : index
    %c0_43 = arith.constant 0 : index
    %c0_44 = arith.constant 0 : index
    %35 = vector.load %arg2[%c4, %c0_43, %c0_44] : memref<9x4x4xbf16, #tpu.memory_space<vmem>>, vector<1x4x4xbf16>
    %36 = vector.shape_cast %35 : vector<1x4x4xbf16> to vector<4x4xbf16>
    %c0_45 = arith.constant 0 : index
    %c0_46 = arith.constant 0 : index
    %c19 = arith.constant 19 : index
    %37 = vector.load %arg1[%c0_45, %c0_46, %c19] : memref<1x4x384xbf16, #tpu.memory_space<vmem>>, vector<1x4x288xbf16>
    %38 = vector.shape_cast %37 : vector<1x4x288xbf16> to vector<4x288xbf16>
    %cst_47 = arith.constant dense<0.000000e+00> : vector<4x288xf32>
    %39 = tpu.matmul %36, %38, %cst_47 {dimension_numbers = #tpu.dot_dimension_numbers<[1], [0], [0], [1], [0, 0, 1, 1], [], []>} : vector<4x4xbf16>, vector<4x288xbf16>, vector<4x288xf32> -> vector<4x288xf32>
    %40 = arith.addf %34, %39 : vector<4x288xf32>
    %c0_48 = arith.constant 0 : index
    %c0_49 = arith.constant 0 : index
    %41 = vector.load %arg8[%c0_48, %c0_49] : memref<4x288xf32, #tpu.memory_space<vmem>>, vector<4x288xf32>
    tpu.vector_store %arg8[%c0_48, %c0_49], %40 {strides = array<i32>} : memref<4x288xf32, #tpu.memory_space<vmem>>, vector<4x288xf32>,
    %c0_50 = arith.constant 0 : index
    %c0_51 = arith.constant 0 : index
    %42 = vector.load %arg8[%c0_50, %c0_51] : memref<4x288xf32, #tpu.memory_space<vmem>>, vector<4x288xf32>
    %c5 = arith.constant 5 : index
    %c0_52 = arith.constant 0 : index
    %c0_53 = arith.constant 0 : index
    %43 = vector.load %arg2[%c5, %c0_52, %c0_53] : memref<9x4x4xbf16, #tpu.memory_space<vmem>>, vector<1x4x4xbf16>
    %44 = vector.shape_cast %43 : vector<1x4x4xbf16> to vector<4x4xbf16>
    %c0_54 = arith.constant 0 : index
    %c0_55 = arith.constant 0 : index
    %c20 = arith.constant 20 : index
    %45 = vector.load %arg1[%c0_54, %c0_55, %c20] : memref<1x4x384xbf16, #tpu.memory_space<vmem>>, vector<1x4x288xbf16>
    %46 = vector.shape_cast %45 : vector<1x4x288xbf16> to vector<4x288xbf16>
    %cst_56 = arith.constant dense<0.000000e+00> : vector<4x288xf32>
    %47 = tpu.matmul %44, %46, %cst_56 {dimension_numbers = #tpu.dot_dimension_numbers<[1], [0], [0], [1], [0, 0, 1, 1], [], []>} : vector<4x4xbf16>, vector<4x288xbf16>, vector<4x288xf32> -> vector<4x288xf32>
    %48 = arith.addf %42, %47 : vector<4x288xf32>
    %c0_57 = arith.constant 0 : index
    %c0_58 = arith.constant 0 : index
    %49 = vector.load %arg8[%c0_57, %c0_58] : memref<4x288xf32, #tpu.memory_space<vmem>>, vector<4x288xf32>
    tpu.vector_store %arg8[%c0_57, %c0_58], %48 {strides = array<i32>} : memref<4x288xf32, #tpu.memory_space<vmem>>, vector<4x288xf32>,
    %c0_59 = arith.constant 0 : index
    %c0_60 = arith.constant 0 : index
    %50 = vector.load %arg8[%c0_59, %c0_60] : memref<4x288xf32, #tpu.memory_space<vmem>>, vector<4x288xf32>
    %c6 = arith.constant 6 : index
    %c0_61 = arith.constant 0 : index
    %c0_62 = arith.constant 0 : index
    %51 = vector.load %arg2[%c6, %c0_61, %c0_62] : memref<9x4x4xbf16, #tpu.memory_space<vmem>>, vector<1x4x4xbf16>
    %52 = vector.shape_cast %51 : vector<1x4x4xbf16> to vector<4x4xbf16>
    %c0_63 = arith.constant 0 : index
    %c0_64 = arith.constant 0 : index
    %c36 = arith.constant 36 : index
    %53 = vector.load %arg1[%c0_63, %c0_64, %c36] : memref<1x4x384xbf16, #tpu.memory_space<vmem>>, vector<1x4x288xbf16>
    %54 = vector.shape_cast %53 : vector<1x4x288xbf16> to vector<4x288xbf16>
    %cst_65 = arith.constant dense<0.000000e+00> : vector<4x288xf32>
    %55 = tpu.matmul %52, %54, %cst_65 {dimension_numbers = #tpu.dot_dimension_numbers<[1], [0], [0], [1], [0, 0, 1, 1], [], []>} : vector<4x4xbf16>, vector<4x288xbf16>, vector<4x288xf32> -> vector<4x288xf32>
    %56 = arith.addf %50, %55 : vector<4x288xf32>
    %c0_66 = arith.constant 0 : index
    %c0_67 = arith.constant 0 : index
    %57 = vector.load %arg8[%c0_66, %c0_67] : memref<4x288xf32, #tpu.memory_space<vmem>>, vector<4x288xf32>
    tpu.vector_store %arg8[%c0_66, %c0_67], %56 {strides = array<i32>} : memref<4x288xf32, #tpu.memory_space<vmem>>, vector<4x288xf32>,
    %c0_68 = arith.constant 0 : index
    %c0_69 = arith.constant 0 : index
    %58 = vector.load %arg8[%c0_68, %c0_69] : memref<4x288xf32, #tpu.memory_space<vmem>>, vector<4x288xf32>
    %c7 = arith.constant 7 : index
    %c0_70 = arith.constant 0 : index
    %c0_71 = arith.constant 0 : index
    %59 = vector.load %arg2[%c7, %c0_70, %c0_71] : memref<9x4x4xbf16, #tpu.memory_space<vmem>>, vector<1x4x4xbf16>
    %60 = vector.shape_cast %59 : vector<1x4x4xbf16> to vector<4x4xbf16>
    %c0_72 = arith.constant 0 : index
    %c0_73 = arith.constant 0 : index
    %c37 = arith.constant 37 : index
    %61 = vector.load %arg1[%c0_72, %c0_73, %c37] : memref<1x4x384xbf16, #tpu.memory_space<vmem>>, vector<1x4x288xbf16>
    %62 = vector.shape_cast %61 : vector<1x4x288xbf16> to vector<4x288xbf16>
    %cst_74 = arith.constant dense<0.000000e+00> : vector<4x288xf32>
    %63 = tpu.matmul %60, %62, %cst_74 {dimension_numbers = #tpu.dot_dimension_numbers<[1], [0], [0], [1], [0, 0, 1, 1], [], []>} : vector<4x4xbf16>, vector<4x288xbf16>, vector<4x288xf32> -> vector<4x288xf32>
    %64 = arith.addf %58, %63 : vector<4x288xf32>
    %c0_75 = arith.constant 0 : index
    %c0_76 = arith.constant 0 : index
    %65 = vector.load %arg8[%c0_75, %c0_76] : memref<4x288xf32, #tpu.memory_space<vmem>>, vector<4x288xf32>
    tpu.vector_store %arg8[%c0_75, %c0_76], %64 {strides = array<i32>} : memref<4x288xf32, #tpu.memory_space<vmem>>, vector<4x288xf32>,
    %c0_77 = arith.constant 0 : index
    %c0_78 = arith.constant 0 : index
    %66 = vector.load %arg8[%c0_77, %c0_78] : memref<4x288xf32, #tpu.memory_space<vmem>>, vector<4x288xf32>
    %c8 = arith.constant 8 : index
    %c0_79 = arith.constant 0 : index
    %c0_80 = arith.constant 0 : index
    %67 = vector.load %arg2[%c8, %c0_79, %c0_80] : memref<9x4x4xbf16, #tpu.memory_space<vmem>>, vector<1x4x4xbf16>
    %68 = vector.shape_cast %67 : vector<1x4x4xbf16> to vector<4x4xbf16>
    %c0_81 = arith.constant 0 : index
    %c0_82 = arith.constant 0 : index
    %c38 = arith.constant 38 : index
    %69 = vector.load %arg1[%c0_81, %c0_82, %c38] : memref<1x4x384xbf16, #tpu.memory_space<vmem>>, vector<1x4x288xbf16>
    %70 = vector.shape_cast %69 : vector<1x4x288xbf16> to vector<4x288xbf16>
    %cst_83 = arith.constant dense<0.000000e+00> : vector<4x288xf32>
    %71 = tpu.matmul %68, %70, %cst_83 {dimension_numbers = #tpu.dot_dimension_numbers<[1], [0], [0], [1], [0, 0, 1, 1], [], []>} : vector<4x4xbf16>, vector<4x288xbf16>, vector<4x288xf32> -> vector<4x288xf32>
    %72 = arith.addf %66, %71 : vector<4x288xf32>
    %c0_84 = arith.constant 0 : index
    %c0_85 = arith.constant 0 : index
    %73 = vector.load %arg8[%c0_84, %c0_85] : memref<4x288xf32, #tpu.memory_space<vmem>>, vector<4x288xf32>
    tpu.vector_store %arg8[%c0_84, %c0_85], %72 {strides = array<i32>} : memref<4x288xf32, #tpu.memory_space<vmem>>, vector<4x288xf32>,
    %c0_86 = arith.constant 0 : index
    %c0_87 = arith.constant 0 : index
    %74 = vector.load %arg8[%c0_86, %c0_87] : memref<4x288xf32, #tpu.memory_space<vmem>>, vector<4x288xf32>
    %c0_88 = arith.constant 0 : index
    %c0_89 = arith.constant 0 : index
    %75 = vector.load %arg3[%c0_88, %c0_89] : memref<4x1xf32, #tpu.memory_space<vmem>>, vector<4x1xf32>
    %76 = vector.broadcast %75 : vector<4x1xf32> to vector<4x288xf32>
    %77 = arith.addf %74, %76 : vector<4x288xf32>
    %cst_90 = arith.constant 0.000000e+00 : f32
    %78 = vector.broadcast %cst_90 : f32 to vector<4x288xf32>
    %79 = arith.maximumf %77, %78 : vector<4x288xf32>
    %c0_91 = arith.constant 0 : index
    %c0_92 = arith.constant 0 : index
    %80 = vector.load %arg6[%c0_91, %c0_92] : memref<1x288xf32, #tpu.memory_space<vmem>>, vector<1x288xf32>
    %81 = vector.broadcast %80 : vector<1x288xf32> to vector<4x288xf32>
    %82 = arith.mulf %79, %81 : vector<4x288xf32>
    %cst_93 = arith.constant 0.000000e+00 : bf16
    %83 = vector.broadcast %cst_93 : bf16 to vector<4x384xbf16>
    %c0_94 = arith.constant 0 : index
    %c0_95 = arith.constant 0 : index
    %84 = vector.load %arg9[%c0_94, %c0_95] : memref<4x384xbf16, #tpu.memory_space<vmem>>, vector<4x384xbf16>
    tpu.vector_store %arg9[%c0_94, %c0_95], %83 {strides = array<i32>} : memref<4x384xbf16, #tpu.memory_space<vmem>>, vector<4x384xbf16>,
    %85 = arith.truncf %82 : vector<4x288xf32> to vector<4x288xbf16>
    %c0_96 = arith.constant 0 : index
    %c19_97 = arith.constant 19 : index
    %86 = vector.load %arg9[%c0_96, %c19_97] : memref<4x384xbf16, #tpu.memory_space<vmem>>, vector<4x288xbf16>
    tpu.vector_store %arg9[%c0_96, %c19_97], %85 {strides = array<i32>} : memref<4x384xbf16, #tpu.memory_space<vmem>>, vector<4x288xbf16>,
    %cst_98 = arith.constant 0.000000e+00 : f32
    %87 = vector.broadcast %cst_98 : f32 to vector<4x288xf32>
    %c0_99 = arith.constant 0 : index
    %c0_100 = arith.constant 0 : index
    %88 = vector.load %arg8[%c0_99, %c0_100] : memref<4x288xf32, #tpu.memory_space<vmem>>, vector<4x288xf32>
    tpu.vector_store %arg8[%c0_99, %c0_100], %87 {strides = array<i32>} : memref<4x288xf32, #tpu.memory_space<vmem>>, vector<4x288xf32>,
    %c0_101 = arith.constant 0 : index
    %c0_102 = arith.constant 0 : index
    %89 = vector.load %arg8[%c0_101, %c0_102] : memref<4x288xf32, #tpu.memory_space<vmem>>, vector<4x288xf32>
    %c0_103 = arith.constant 0 : index
    %c0_104 = arith.constant 0 : index
    %c0_105 = arith.constant 0 : index
    %90 = vector.load %arg4[%c0_103, %c0_104, %c0_105] : memref<9x4x4xbf16, #tpu.memory_space<vmem>>, vector<1x4x4xbf16>
    %91 = vector.shape_cast %90 : vector<1x4x4xbf16> to vector<4x4xbf16>
    %c0_106 = arith.constant 0 : index
    %c0_107 = arith.constant 0 : index
    %92 = vector.load %arg9[%c0_106, %c0_107] : memref<4x384xbf16, #tpu.memory_space<vmem>>, vector<4x288xbf16>
    %cst_108 = arith.constant dense<0.000000e+00> : vector<4x288xf32>
    %93 = tpu.matmul %91, %92, %cst_108 {dimension_numbers = #tpu.dot_dimension_numbers<[1], [0], [0], [1], [0, 0, 1, 1], [], []>} : vector<4x4xbf16>, vector<4x288xbf16>, vector<4x288xf32> -> vector<4x288xf32>
    %94 = arith.addf %89, %93 : vector<4x288xf32>
    %c0_109 = arith.constant 0 : index
    %c0_110 = arith.constant 0 : index
    %95 = vector.load %arg8[%c0_109, %c0_110] : memref<4x288xf32, #tpu.memory_space<vmem>>, vector<4x288xf32>
    tpu.vector_store %arg8[%c0_109, %c0_110], %94 {strides = array<i32>} : memref<4x288xf32, #tpu.memory_space<vmem>>, vector<4x288xf32>,
    %c0_111 = arith.constant 0 : index
    %c0_112 = arith.constant 0 : index
    %96 = vector.load %arg8[%c0_111, %c0_112] : memref<4x288xf32, #tpu.memory_space<vmem>>, vector<4x288xf32>
    %c1_113 = arith.constant 1 : index
    %c0_114 = arith.constant 0 : index
    %c0_115 = arith.constant 0 : index
    %97 = vector.load %arg4[%c1_113, %c0_114, %c0_115] : memref<9x4x4xbf16, #tpu.memory_space<vmem>>, vector<1x4x4xbf16>
    %98 = vector.shape_cast %97 : vector<1x4x4xbf16> to vector<4x4xbf16>
    %c0_116 = arith.constant 0 : index
    %c1_117 = arith.constant 1 : index
    %99 = vector.load %arg9[%c0_116, %c1_117] : memref<4x384xbf16, #tpu.memory_space<vmem>>, vector<4x288xbf16>
    %cst_118 = arith.constant dense<0.000000e+00> : vector<4x288xf32>
    %100 = tpu.matmul %98, %99, %cst_118 {dimension_numbers = #tpu.dot_dimension_numbers<[1], [0], [0], [1], [0, 0, 1, 1], [], []>} : vector<4x4xbf16>, vector<4x288xbf16>, vector<4x288xf32> -> vector<4x288xf32>
    %101 = arith.addf %96, %100 : vector<4x288xf32>
    %c0_119 = arith.constant 0 : index
    %c0_120 = arith.constant 0 : index
    %102 = vector.load %arg8[%c0_119, %c0_120] : memref<4x288xf32, #tpu.memory_space<vmem>>, vector<4x288xf32>
    tpu.vector_store %arg8[%c0_119, %c0_120], %101 {strides = array<i32>} : memref<4x288xf32, #tpu.memory_space<vmem>>, vector<4x288xf32>,
    %c0_121 = arith.constant 0 : index
    %c0_122 = arith.constant 0 : index
    %103 = vector.load %arg8[%c0_121, %c0_122] : memref<4x288xf32, #tpu.memory_space<vmem>>, vector<4x288xf32>
    %c2_123 = arith.constant 2 : index
    %c0_124 = arith.constant 0 : index
    %c0_125 = arith.constant 0 : index
    %104 = vector.load %arg4[%c2_123, %c0_124, %c0_125] : memref<9x4x4xbf16, #tpu.memory_space<vmem>>, vector<1x4x4xbf16>
    %105 = vector.shape_cast %104 : vector<1x4x4xbf16> to vector<4x4xbf16>
    %c0_126 = arith.constant 0 : index
    %c2_127 = arith.constant 2 : index
    %106 = vector.load %arg9[%c0_126, %c2_127] : memref<4x384xbf16, #tpu.memory_space<vmem>>, vector<4x288xbf16>
    %cst_128 = arith.constant dense<0.000000e+00> : vector<4x288xf32>
    %107 = tpu.matmul %105, %106, %cst_128 {dimension_numbers = #tpu.dot_dimension_numbers<[1], [0], [0], [1], [0, 0, 1, 1], [], []>} : vector<4x4xbf16>, vector<4x288xbf16>, vector<4x288xf32> -> vector<4x288xf32>
    %108 = arith.addf %103, %107 : vector<4x288xf32>
    %c0_129 = arith.constant 0 : index
    %c0_130 = arith.constant 0 : index
    %109 = vector.load %arg8[%c0_129, %c0_130] : memref<4x288xf32, #tpu.memory_space<vmem>>, vector<4x288xf32>
    tpu.vector_store %arg8[%c0_129, %c0_130], %108 {strides = array<i32>} : memref<4x288xf32, #tpu.memory_space<vmem>>, vector<4x288xf32>,
    %c0_131 = arith.constant 0 : index
    %c0_132 = arith.constant 0 : index
    %110 = vector.load %arg8[%c0_131, %c0_132] : memref<4x288xf32, #tpu.memory_space<vmem>>, vector<4x288xf32>
    %c3_133 = arith.constant 3 : index
    %c0_134 = arith.constant 0 : index
    %c0_135 = arith.constant 0 : index
    %111 = vector.load %arg4[%c3_133, %c0_134, %c0_135] : memref<9x4x4xbf16, #tpu.memory_space<vmem>>, vector<1x4x4xbf16>
    %112 = vector.shape_cast %111 : vector<1x4x4xbf16> to vector<4x4xbf16>
    %c0_136 = arith.constant 0 : index
    %c18_137 = arith.constant 18 : index
    %113 = vector.load %arg9[%c0_136, %c18_137] : memref<4x384xbf16, #tpu.memory_space<vmem>>, vector<4x288xbf16>
    %cst_138 = arith.constant dense<0.000000e+00> : vector<4x288xf32>
    %114 = tpu.matmul %112, %113, %cst_138 {dimension_numbers = #tpu.dot_dimension_numbers<[1], [0], [0], [1], [0, 0, 1, 1], [], []>} : vector<4x4xbf16>, vector<4x288xbf16>, vector<4x288xf32> -> vector<4x288xf32>
    %115 = arith.addf %110, %114 : vector<4x288xf32>
    %c0_139 = arith.constant 0 : index
    %c0_140 = arith.constant 0 : index
    %116 = vector.load %arg8[%c0_139, %c0_140] : memref<4x288xf32, #tpu.memory_space<vmem>>, vector<4x288xf32>
    tpu.vector_store %arg8[%c0_139, %c0_140], %115 {strides = array<i32>} : memref<4x288xf32, #tpu.memory_space<vmem>>, vector<4x288xf32>,
    %c0_141 = arith.constant 0 : index
    %c0_142 = arith.constant 0 : index
    %117 = vector.load %arg8[%c0_141, %c0_142] : memref<4x288xf32, #tpu.memory_space<vmem>>, vector<4x288xf32>
    %c4_143 = arith.constant 4 : index
    %c0_144 = arith.constant 0 : index
    %c0_145 = arith.constant 0 : index
    %118 = vector.load %arg4[%c4_143, %c0_144, %c0_145] : memref<9x4x4xbf16, #tpu.memory_space<vmem>>, vector<1x4x4xbf16>
    %119 = vector.shape_cast %118 : vector<1x4x4xbf16> to vector<4x4xbf16>
    %c0_146 = arith.constant 0 : index
    %c19_147 = arith.constant 19 : index
    %120 = vector.load %arg9[%c0_146, %c19_147] : memref<4x384xbf16, #tpu.memory_space<vmem>>, vector<4x288xbf16>
    %cst_148 = arith.constant dense<0.000000e+00> : vector<4x288xf32>
    %121 = tpu.matmul %119, %120, %cst_148 {dimension_numbers = #tpu.dot_dimension_numbers<[1], [0], [0], [1], [0, 0, 1, 1], [], []>} : vector<4x4xbf16>, vector<4x288xbf16>, vector<4x288xf32> -> vector<4x288xf32>
    %122 = arith.addf %117, %121 : vector<4x288xf32>
    %c0_149 = arith.constant 0 : index
    %c0_150 = arith.constant 0 : index
    %123 = vector.load %arg8[%c0_149, %c0_150] : memref<4x288xf32, #tpu.memory_space<vmem>>, vector<4x288xf32>
    tpu.vector_store %arg8[%c0_149, %c0_150], %122 {strides = array<i32>} : memref<4x288xf32, #tpu.memory_space<vmem>>, vector<4x288xf32>,
    %c0_151 = arith.constant 0 : index
    %c0_152 = arith.constant 0 : index
    %124 = vector.load %arg8[%c0_151, %c0_152] : memref<4x288xf32, #tpu.memory_space<vmem>>, vector<4x288xf32>
    %c5_153 = arith.constant 5 : index
    %c0_154 = arith.constant 0 : index
    %c0_155 = arith.constant 0 : index
    %125 = vector.load %arg4[%c5_153, %c0_154, %c0_155] : memref<9x4x4xbf16, #tpu.memory_space<vmem>>, vector<1x4x4xbf16>
    %126 = vector.shape_cast %125 : vector<1x4x4xbf16> to vector<4x4xbf16>
    %c0_156 = arith.constant 0 : index
    %c20_157 = arith.constant 20 : index
    %127 = vector.load %arg9[%c0_156, %c20_157] : memref<4x384xbf16, #tpu.memory_space<vmem>>, vector<4x288xbf16>
    %cst_158 = arith.constant dense<0.000000e+00> : vector<4x288xf32>
    %128 = tpu.matmul %126, %127, %cst_158 {dimension_numbers = #tpu.dot_dimension_numbers<[1], [0], [0], [1], [0, 0, 1, 1], [], []>} : vector<4x4xbf16>, vector<4x288xbf16>, vector<4x288xf32> -> vector<4x288xf32>
    %129 = arith.addf %124, %128 : vector<4x288xf32>
    %c0_159 = arith.constant 0 : index
    %c0_160 = arith.constant 0 : index
    %130 = vector.load %arg8[%c0_159, %c0_160] : memref<4x288xf32, #tpu.memory_space<vmem>>, vector<4x288xf32>
    tpu.vector_store %arg8[%c0_159, %c0_160], %129 {strides = array<i32>} : memref<4x288xf32, #tpu.memory_space<vmem>>, vector<4x288xf32>,
    %c0_161 = arith.constant 0 : index
    %c0_162 = arith.constant 0 : index
    %131 = vector.load %arg8[%c0_161, %c0_162] : memref<4x288xf32, #tpu.memory_space<vmem>>, vector<4x288xf32>
    %c6_163 = arith.constant 6 : index
    %c0_164 = arith.constant 0 : index
    %c0_165 = arith.constant 0 : index
    %132 = vector.load %arg4[%c6_163, %c0_164, %c0_165] : memref<9x4x4xbf16, #tpu.memory_space<vmem>>, vector<1x4x4xbf16>
    %133 = vector.shape_cast %132 : vector<1x4x4xbf16> to vector<4x4xbf16>
    %c0_166 = arith.constant 0 : index
    %c36_167 = arith.constant 36 : index
    %134 = vector.load %arg9[%c0_166, %c36_167] : memref<4x384xbf16, #tpu.memory_space<vmem>>, vector<4x288xbf16>
    %cst_168 = arith.constant dense<0.000000e+00> : vector<4x288xf32>
    %135 = tpu.matmul %133, %134, %cst_168 {dimension_numbers = #tpu.dot_dimension_numbers<[1], [0], [0], [1], [0, 0, 1, 1], [], []>} : vector<4x4xbf16>, vector<4x288xbf16>, vector<4x288xf32> -> vector<4x288xf32>
    %136 = arith.addf %131, %135 : vector<4x288xf32>
    %c0_169 = arith.constant 0 : index
    %c0_170 = arith.constant 0 : index
    %137 = vector.load %arg8[%c0_169, %c0_170] : memref<4x288xf32, #tpu.memory_space<vmem>>, vector<4x288xf32>
    tpu.vector_store %arg8[%c0_169, %c0_170], %136 {strides = array<i32>} : memref<4x288xf32, #tpu.memory_space<vmem>>, vector<4x288xf32>,
    %c0_171 = arith.constant 0 : index
    %c0_172 = arith.constant 0 : index
    %138 = vector.load %arg8[%c0_171, %c0_172] : memref<4x288xf32, #tpu.memory_space<vmem>>, vector<4x288xf32>
    %c7_173 = arith.constant 7 : index
    %c0_174 = arith.constant 0 : index
    %c0_175 = arith.constant 0 : index
    %139 = vector.load %arg4[%c7_173, %c0_174, %c0_175] : memref<9x4x4xbf16, #tpu.memory_space<vmem>>, vector<1x4x4xbf16>
    %140 = vector.shape_cast %139 : vector<1x4x4xbf16> to vector<4x4xbf16>
    %c0_176 = arith.constant 0 : index
    %c37_177 = arith.constant 37 : index
    %141 = vector.load %arg9[%c0_176, %c37_177] : memref<4x384xbf16, #tpu.memory_space<vmem>>, vector<4x288xbf16>
    %cst_178 = arith.constant dense<0.000000e+00> : vector<4x288xf32>
    %142 = tpu.matmul %140, %141, %cst_178 {dimension_numbers = #tpu.dot_dimension_numbers<[1], [0], [0], [1], [0, 0, 1, 1], [], []>} : vector<4x4xbf16>, vector<4x288xbf16>, vector<4x288xf32> -> vector<4x288xf32>
    %143 = arith.addf %138, %142 : vector<4x288xf32>
    %c0_179 = arith.constant 0 : index
    %c0_180 = arith.constant 0 : index
    %144 = vector.load %arg8[%c0_179, %c0_180] : memref<4x288xf32, #tpu.memory_space<vmem>>, vector<4x288xf32>
    tpu.vector_store %arg8[%c0_179, %c0_180], %143 {strides = array<i32>} : memref<4x288xf32, #tpu.memory_space<vmem>>, vector<4x288xf32>,
    %c0_181 = arith.constant 0 : index
    %c0_182 = arith.constant 0 : index
    %145 = vector.load %arg8[%c0_181, %c0_182] : memref<4x288xf32, #tpu.memory_space<vmem>>, vector<4x288xf32>
    %c8_183 = arith.constant 8 : index
    %c0_184 = arith.constant 0 : index
    %c0_185 = arith.constant 0 : index
    %146 = vector.load %arg4[%c8_183, %c0_184, %c0_185] : memref<9x4x4xbf16, #tpu.memory_space<vmem>>, vector<1x4x4xbf16>
    %147 = vector.shape_cast %146 : vector<1x4x4xbf16> to vector<4x4xbf16>
    %c0_186 = arith.constant 0 : index
    %c38_187 = arith.constant 38 : index
    %148 = vector.load %arg9[%c0_186, %c38_187] : memref<4x384xbf16, #tpu.memory_space<vmem>>, vector<4x288xbf16>
    %cst_188 = arith.constant dense<0.000000e+00> : vector<4x288xf32>
    %149 = tpu.matmul %147, %148, %cst_188 {dimension_numbers = #tpu.dot_dimension_numbers<[1], [0], [0], [1], [0, 0, 1, 1], [], []>} : vector<4x4xbf16>, vector<4x288xbf16>, vector<4x288xf32> -> vector<4x288xf32>
    %150 = arith.addf %145, %149 : vector<4x288xf32>
    %c0_189 = arith.constant 0 : index
    %c0_190 = arith.constant 0 : index
    %151 = vector.load %arg8[%c0_189, %c0_190] : memref<4x288xf32, #tpu.memory_space<vmem>>, vector<4x288xf32>
    tpu.vector_store %arg8[%c0_189, %c0_190], %150 {strides = array<i32>} : memref<4x288xf32, #tpu.memory_space<vmem>>, vector<4x288xf32>,
    %c0_191 = arith.constant 0 : index
    %c0_192 = arith.constant 0 : index
    %c19_193 = arith.constant 19 : index
    %152 = vector.load %arg1[%c0_191, %c0_192, %c19_193] : memref<1x4x384xbf16, #tpu.memory_space<vmem>>, vector<1x4x288xbf16>
    %153 = vector.shape_cast %152 : vector<1x4x288xbf16> to vector<4x288xbf16>
    %154 = arith.extf %153 : vector<4x288xbf16> to vector<4x288xf32>
    %c0_194 = arith.constant 0 : index
    %c0_195 = arith.constant 0 : index
    %155 = vector.load %arg8[%c0_194, %c0_195] : memref<4x288xf32, #tpu.memory_space<vmem>>, vector<4x288xf32>
    %c0_196 = arith.constant 0 : index
    %c0_197 = arith.constant 0 : index
    %156 = vector.load %arg5[%c0_196, %c0_197] : memref<4x1xf32, #tpu.memory_space<vmem>>, vector<4x1xf32>
    %157 = vector.broadcast %156 : vector<4x1xf32> to vector<4x288xf32>
    %158 = arith.addf %155, %157 : vector<4x288xf32>
    %159 = arith.addf %158, %154 : vector<4x288xf32>
    %cst_198 = arith.constant 0.000000e+00 : f32
    %160 = vector.broadcast %cst_198 : f32 to vector<4x288xf32>
    %161 = arith.maximumf %159, %160 : vector<4x288xf32>
    %c0_199 = arith.constant 0 : index
    %c0_200 = arith.constant 0 : index
    %c0_201 = arith.constant 0 : index
    %162 = vector.load %arg7[%c0_199, %c0_200, %c0_201] : memref<1x4x288xf32, #tpu.memory_space<vmem>>, vector<1x4x288xf32>
    %163 = vector.shape_cast %162 : vector<1x4x288xf32> to vector<4x288xf32>
    %164 = vector.shape_cast %161 : vector<4x288xf32> to vector<1x4x288xf32>
    tpu.vector_store %arg7[%c0_199, %c0_200, %c0_201], %164 {strides = array<i32>} : memref<1x4x288xf32, #tpu.memory_space<vmem>>, vector<1x4x288xf32>,
    return
  }
  func.func @transform_0(%arg0: i32) -> (i32, i32, i32) {
    %c0_i32 = arith.constant 0 : i32
    %c0_i32_0 = arith.constant 0 : i32
    %c0_i32_1 = arith.constant 0 : i32
    return %arg0, %c0_i32, %c0_i32_0 : i32, i32, i32
  }
  func.func @transform_1(%arg0: i32) -> (i32, i32, i32) {
    %c0_i32 = arith.constant 0 : i32
    %c0_i32_0 = arith.constant 0 : i32
    %c0_i32_1 = arith.constant 0 : i32
    %c0_i32_2 = arith.constant 0 : i32
    return %c0_i32, %c0_i32_0, %c0_i32_1 : i32, i32, i32
  }
  func.func @transform_2(%arg0: i32) -> (i32, i32) {
    %c0_i32 = arith.constant 0 : i32
    %c0_i32_0 = arith.constant 0 : i32
    %c0_i32_1 = arith.constant 0 : i32
    return %c0_i32, %c0_i32_0 : i32, i32
  }
  func.func @transform_3(%arg0: i32) -> (i32, i32, i32) {
    %c0_i32 = arith.constant 0 : i32
    %c0_i32_0 = arith.constant 0 : i32
    %c0_i32_1 = arith.constant 0 : i32
    %c0_i32_2 = arith.constant 0 : i32
    return %c0_i32, %c0_i32_0, %c0_i32_1 : i32, i32, i32
  }
  func.func @transform_4(%arg0: i32) -> (i32, i32) {
    %c0_i32 = arith.constant 0 : i32
    %c0_i32_0 = arith.constant 0 : i32
    %c0_i32_1 = arith.constant 0 : i32
    return %c0_i32, %c0_i32_0 : i32, i32
  }
  func.func @transform_5(%arg0: i32) -> (i32, i32) {
    %c0_i32 = arith.constant 0 : i32
    %c0_i32_0 = arith.constant 0 : i32
    %c0_i32_1 = arith.constant 0 : i32
    return %c0_i32, %c0_i32_0 : i32, i32
  }
  func.func @transform_6(%arg0: i32) -> (i32, i32, i32) {
    %c0_i32 = arith.constant 0 : i32
    %c0_i32_0 = arith.constant 0 : i32
    %c0_i32_1 = arith.constant 0 : i32
    return %arg0, %c0_i32, %c0_i32_0 : i32, i32, i32
  }
}

</mosaic_0001>

<llo_original>
// kernel: basic_block_forward.1
$region0: #{basic_block_forward.1}
  #allocation0 [shape = 'u32[]', space=smem, size = 0x4, offset = 0x4, fixed_abs, tag = 'smem constant byte address 0x4 - core index']
  #allocation1 [shape = 'u32[144,128]{1,0:T(1,128)}', space=vmem, size = 0x12000, scoped, tag = 'internal scratch']
  #allocation2 [shape = 'f32[4,288]{1,0:T(4,128)}', space=vmem, size = 0x1800, scoped, tag = 'scratch operand']
  #allocation3 [shape = 'bf16[4,384]{1,0:T(4,128)(2,1)}', space=vmem, size = 0xc00, scoped, tag = 'scratch operand']
  %s0 = inlined_call_operand.vmem [shape: bf16[2,4,384], index: 0, kind: input, shape index: {}]
  %s1 = inlined_call_operand.vmem [shape: bf16[9,4,4], index: 1, kind: input, shape index: {}]
  %s2 = inlined_call_operand.vmem [shape: f32[4,1], index: 2, kind: input, shape index: {}]
  %s3 = inlined_call_operand.vmem [shape: bf16[9,4,4], index: 3, kind: input, shape index: {}]
  %s4 = inlined_call_operand.vmem [shape: f32[4,1], index: 4, kind: input, shape index: {}]
  %s5 = inlined_call_operand.vmem [shape: f32[1,288], index: 5, kind: input, shape index: {}]
  %s6 = inlined_call_operand.vmem [shape: f32[2,4,288], index: 6, kind: output, shape index: {}]
  %s7 = sld [smem:[#allocation0]]
  $region57: #{basic_block_forward.1} parent=0
    _
  %s9 = ssub.s32 1, %s7
  %s10 = scalar_select 0, %s9, %s7
  loop: start=0, step=1, limit=4
  $region2: #{basic_block_forward.1} parent=0 // loop_pre_header
    _
  $region3: #{basic_block_forward.1} parent=0 // loop_header
    %s12 = sphi 0, %s16
    %p13 = scmp.ge.s32.totalorder %s12, 4
    %s22 = sphi 0, %s24
    %s25 = sphi 0, %s22
    %s26 = sphi 0, %s25
    %s42 = sphi 0, %s26
    %s46 = sphi 0, %s46
    %s48 = sphi 0, %s46
    %s49 = sphi 0, %s48
    %s63 = sphi 0, %s49
    %s67 = sphi 0, %s67
    %s69 = sphi 0, %s67
    %s70 = sphi 0, %s69
    %s84 = sphi 0, %s70
    %s88 = sphi 0, %s88
    %s90 = sphi 0, %s88
    %s91 = sphi 0, %s90
    %s105 = sphi 0, %s91
    %s109 = sphi 0, %s109
    %s111 = sphi 0, %s109
    %s112 = sphi 0, %s111
    %s126 = sphi 0, %s112
    %s130 = sphi 0, %s130
    %s132 = sphi 0, %s130
    %s133 = sphi 0, %s132
    %s147 = sphi 0, %s133
    %s153 = sphi 0, %s155
    %s156 = sphi 0, %s153
    %s157 = sphi 0, %s156
    %s173 = sphi 0, %s157
  $region4: #{basic_block_forward.1} parent=0 // loop_header_branch
    %15 = sbr.rel (%p13) target = $region8
  $region5: #{basic_block_forward.1} parent=0 // loop_body
    %s17 = ssub.s32 %s12, 1
    %s18 = ssub.s32 %s12, 2
    %s19 = sadd.s32 %s12, 1
    %s20 = ssub.s32 %s12, %s19
    %p21 = scmp.eq.s32.totalorder %s20, 0
    %s23 = sadd.s32 %s22, 1
    %s24 = scalar_select %p21, %s22, %s23
    %p27 = pneg %p21
    %p28 = scmp.eq.s32.totalorder %s12, 1
    %p29 = por %p27, %p28
    %p30 = scmp.ne.s32.totalorder %s22, %s25
    %p31 = scmp.eq.s32.totalorder %s12, 0
    %p32 = por %p30, %p31
    %p33 = scmp.ne.s32.totalorder %s22, %s25
    %p34 = scmp.eq.s32.totalorder %s17, 1
    %p35 = por %p33, %p34
    %p36 = scmp.ne.s32.totalorder %s25, %s26
    %p37 = scmp.eq.s32.totalorder %s17, 0
    %p38 = por %p36, %p37
    %p39 = scmp.ne.s32.totalorder %s25, %s26
    %p40 = scmp.eq.s32.totalorder %s18, 1
    %p41 = por %p39, %p40
    %p43 = scmp.ne.s32.totalorder %s26, %s42
    %p44 = scmp.eq.s32.totalorder %s18, 0
    %p45 = por %p43, %p44
    %s47 = sadd.s32 %s46, 1
    %p50 = scmp.eq.s32.totalorder %s12, 1
    %p51 = scmp.ne.s32.totalorder %s46, %s48
    %p52 = scmp.eq.s32.totalorder %s12, 0
    %p53 = por %p51, %p52
    %p54 = scmp.ne.s32.totalorder %s46, %s48
    %p55 = scmp.eq.s32.totalorder %s17, 1
    %p56 = por %p54, %p55
    %p57 = scmp.ne.s32.totalorder %s48, %s49
    %p58 = scmp.eq.s32.totalorder %s17, 0
    %p59 = por %p57, %p58
    %p60 = scmp.ne.s32.totalorder %s48, %s49
    %p61 = scmp.eq.s32.totalorder %s18, 1
    %p62 = por %p60, %p61
    %p64 = scmp.ne.s32.totalorder %s49, %s63
    %p65 = scmp.eq.s32.totalorder %s18, 0
    %p66 = por %p64, %p65
    %s68 = sadd.s32 %s67, 1
    %p71 = scmp.eq.s32.totalorder %s12, 1
    %p72 = scmp.ne.s32.totalorder %s67, %s69
    %p73 = scmp.eq.s32.totalorder %s12, 0
    %p74 = por %p72, %p73
    %p75 = scmp.ne.s32.totalorder %s67, %s69
    %p76 = scmp.eq.s32.totalorder %s17, 1
    %p77 = por %p75, %p76
    %p78 = scmp.ne.s32.totalorder %s69, %s70
    %p79 = scmp.eq.s32.totalorder %s17, 0
    %p80 = por %p78, %p79
    %p81 = scmp.ne.s32.totalorder %s69, %s70
    %p82 = scmp.eq.s32.totalorder %s18, 1
    %p83 = por %p81, %p82
    %p85 = scmp.ne.s32.totalorder %s70, %s84
    %p86 = scmp.eq.s32.totalorder %s18, 0
    %p87 = por %p85, %p86
    %s89 = sadd.s32 %s88, 1
    %p92 = scmp.eq.s32.totalorder %s12, 1
    %p93 = scmp.ne.s32.totalorder %s88, %s90
    %p94 = scmp.eq.s32.totalorder %s12, 0
    %p95 = por %p93, %p94
    %p96 = scmp.ne.s32.totalorder %s88, %s90
    %p97 = scmp.eq.s32.totalorder %s17, 1
    %p98 = por %p96, %p97
    %p99 = scmp.ne.s32.totalorder %s90, %s91
    %p100 = scmp.eq.s32.totalorder %s17, 0
    %p101 = por %p99, %p100
    %p102 = scmp.ne.s32.totalorder %s90, %s91
    %p103 = scmp.eq.s32.totalorder %s18, 1
    %p104 = por %p102, %p103
    %p106 = scmp.ne.s32.totalorder %s91, %s105
    %p107 = scmp.eq.s32.totalorder %s18, 0
    %p108 = por %p106, %p107
    %s110 = sadd.s32 %s109, 1
    %p113 = scmp.eq.s32.totalorder %s12, 1
    %p114 = scmp.ne.s32.totalorder %s109, %s111
    %p115 = scmp.eq.s32.totalorder %s12, 0
    %p116 = por %p114, %p115
    %p117 = scmp.ne.s32.totalorder %s109, %s111
    %p118 = scmp.eq.s32.totalorder %s17, 1
    %p119 = por %p117, %p118
    %p120 = scmp.ne.s32.totalorder %s111, %s112
    %p121 = scmp.eq.s32.totalorder %s17, 0
    %p122 = por %p120, %p121
    %p123 = scmp.ne.s32.totalorder %s111, %s112
    %p124 = scmp.eq.s32.totalorder %s18, 1
    %p125 = por %p123, %p124
    %p127 = scmp.ne.s32.totalorder %s112, %s126
    %p128 = scmp.eq.s32.totalorder %s18, 0
    %p129 = por %p127, %p128
    %s131 = sadd.s32 %s130, 1
    %p134 = scmp.eq.s32.totalorder %s12, 1
    %p135 = scmp.ne.s32.totalorder %s130, %s132
    %p136 = scmp.eq.s32.totalorder %s12, 0
    %p137 = por %p135, %p136
    %p138 = scmp.ne.s32.totalorder %s130, %s132
    %p139 = scmp.eq.s32.totalorder %s17, 1
    %p140 = por %p138, %p139
    %p141 = scmp.ne.s32.totalorder %s132, %s133
    %p142 = scmp.eq.s32.totalorder %s17, 0
    %p143 = por %p141, %p142
    %p144 = scmp.ne.s32.totalorder %s132, %s133
    %p145 = scmp.eq.s32.totalorder %s18, 1
    %p146 = por %p144, %p145
    %p148 = scmp.ne.s32.totalorder %s133, %s147
    %p149 = scmp.eq.s32.totalorder %s18, 0
    %p150 = por %p148, %p149
    %s151 = ssub.s32 %s12, %s19
    %p152 = scmp.eq.s32.totalorder %s151, 0
    %s154 = sadd.s32 %s153, 1
    %s155 = scalar_select %p152, %s153, %s154
    %p158 = pneg %p152
    %p159 = scmp.eq.s32.totalorder %s12, 1
    %p160 = por %p158, %p159
    %p161 = scmp.ne.s32.totalorder %s153, %s156
    %p162 = scmp.eq.s32.totalorder %s12, 0
    %p163 = por %p161, %p162
    %p164 = scmp.ne.s32.totalorder %s153, %s156
    %p165 = scmp.eq.s32.totalorder %s17, 1
    %p166 = por %p164, %p165
    %p167 = scmp.ne.s32.totalorder %s156, %s157
    %p168 = scmp.eq.s32.totalorder %s17, 0
    %p169 = por %p167, %p168
    %p170 = scmp.ne.s32.totalorder %s156, %s157
    %p171 = scmp.eq.s32.totalorder %s18, 1
    %p172 = por %p170, %p171
    %p174 = scmp.ne.s32.totalorder %s157, %s173
    %p175 = scmp.eq.s32.totalorder %s18, 0
    %p176 = por %p174, %p175
    %p177 = scmp.le.s32.totalorder 1, %s12
    %p178 = scmp.lt.s32.totalorder %s12, 3
    %p179 = pnand %p177, %p178
    %p180 = pneg %p179
    // Predicated region
    $region9: #{basic_block_forward.1} parent=5 // pred_check
      _
    $region10: #{basic_block_forward.1} parent=5 // pred_check_branch
      %182 = sbr.rel (%p179) target = $region12
    $region11: #{basic_block_forward.1} parent=5 // pred_region
      %s183 = ssub.s32 %s12, 1
      // Predicated region
      $region13: #{basic_block_forward.1} parent=11 // pred_check
        %p184 = pneg %p59
      $region14: #{basic_block_forward.1} parent=11 // pred_check_branch
        %186 = sbr.rel (%p184) target = $region16
      $region15: #{basic_block_forward.1} parent=11 // pred_region
        _
      $region16: #{basic_block_forward.1} parent=11 // pred_fallthru
        _
      // Predicated region
      $region17: #{basic_block_forward.1} parent=11 // pred_check
        %p187 = pneg %p80
      $region18: #{basic_block_forward.1} parent=11 // pred_check_branch
        %189 = sbr.rel (%p187) target = $region20
      $region19: #{basic_block_forward.1} parent=11 // pred_region
        _
      $region20: #{basic_block_forward.1} parent=11 // pred_fallthru
        _
      // Predicated region
      $region21: #{basic_block_forward.1} parent=11 // pred_check
        %p190 = pneg %p101
      $region22: #{basic_block_forward.1} parent=11 // pred_check_branch
        %192 = sbr.rel (%p190) target = $region24
      $region23: #{basic_block_forward.1} parent=11 // pred_region
        _
      $region24: #{basic_block_forward.1} parent=11 // pred_fallthru
        _
      // Predicated region
      $region25: #{basic_block_forward.1} parent=11 // pred_check
        %p193 = pneg %p122
      $region26: #{basic_block_forward.1} parent=11 // pred_check_branch
        %195 = sbr.rel (%p193) target = $region28
      $region27: #{basic_block_forward.1} parent=11 // pred_region
        _
      $region28: #{basic_block_forward.1} parent=11 // pred_fallthru
        _
      // Predicated region
      $region29: #{basic_block_forward.1} parent=11 // pred_check
        %p196 = pneg %p143
      $region30: #{basic_block_forward.1} parent=11 // pred_check_branch
        %198 = sbr.rel (%p196) target = $region32
      $region31: #{basic_block_forward.1} parent=11 // pred_region
        _
      $region32: #{basic_block_forward.1} parent=11 // pred_fallthru
        _
    $region12: #{basic_block_forward.1} parent=5 // pred_fallthru
      _
    %p199 = scmp.lt.s32.totalorder %s12, 2
    // Predicated region
    $region33: #{basic_block_forward.1} parent=5 // pred_check
      %p200 = pneg %p199
    $region34: #{basic_block_forward.1} parent=5 // pred_check_branch
      %202 = sbr.rel (%p200) target = $region36
    $region35: #{basic_block_forward.1} parent=5 // pred_region
      // Predicated region
      $region37: #{basic_block_forward.1} parent=35 // pred_check
        %p203 = pneg %p32
      $region38: #{basic_block_forward.1} parent=35 // pred_check_branch
        %205 = sbr.rel (%p203) target = $region40
      $region39: #{basic_block_forward.1} parent=35 // pred_region
        %p206 = scmp.lt.s32.totalorder %s12, 1
        %s207 = scalar_select %p206, %s12, 1
        %s208 = smul.addr %s207, 3
        %s209 = smul.addr %s208, 2
        %s210 = scalar_lea.vmem %s0, %s209
      $region40: #{basic_block_forward.1} parent=35 // pred_fallthru
        _
    $region36: #{basic_block_forward.1} parent=5 // pred_fallthru
      _
    %p211 = scmp.le.s32.totalorder 1, %s12
    %p212 = scmp.lt.s32.totalorder %s12, 3
    %p213 = pnand %p211, %p212
    %p214 = pneg %p213
    // Predicated region
    $region41: #{basic_block_forward.1} parent=5 // pred_check
      _
    $region42: #{basic_block_forward.1} parent=5 // pred_check_branch
      %216 = sbr.rel (%p213) target = $region44
    $region43: #{basic_block_forward.1} parent=5 // pred_region
      %s217 = ssub.s32 %s12, 1
      %p218 = scmp.lt.s32.totalorder %s17, 1
      %s219 = scalar_select %p218, %s17, 1
      %s220 = smul.addr %s219, 3
      %s221 = smul.addr %s220, 2
      %s222 = scalar_lea.vmem %s0, %s221
      %p223 = pneg %p38
      %p224 = pneg %p35
      %p225 = pneg %p59
      %p226 = pneg %p56
      %p227 = pneg %p80
      %p228 = pneg %p77
      %p229 = pneg %p101
      %p230 = pneg %p98
      %p231 = pneg %p122
      %p232 = pneg %p119
      %p233 = pneg %p143
      %p234 = pneg %p140
      %p235 = pneg %p169
      %p236 = pneg %p166
      %p237 = scmp.lt.s32.totalorder %s17, 1
      %s238 = scalar_select %p237, %s17, 1
      %s239 = smul.addr %s238, 3
      %s240 = smul.addr %s239, 4
      %s241 = scalar_lea.vmem %s6, %s240
      %p242 = scmp.lt.s32.totalorder %s17, 1
      %s243 = scalar_select %p242, %s17, 1
      %s244 = smul.addr %s243, 3
      %s245 = smul.addr %s244, 2
      %s246 = scalar_lea.vmem %s0, %s245
      %p247 = scmp.lt.s32.totalorder %s17, 1
      %s248 = scalar_select %p247, %s17, 1
      %s249 = smul.addr %s248, 3
      %s250 = smul.addr %s249, 4
      %s251 = scalar_lea.vmem %s6, %s250
      %253 = vst [vmem:[#allocation2] sm:$0xff] 0.0
      %vm254 = vcmask 257024
      %255 = vst.msk [vmem:[#allocation2 + $0x8] sm:$0xf] %vm254, 0.0
      %v256 = vld [vmem:[#allocation2] sm:$0xff]
      %v257 = vld [vmem:[#allocation2 + $0x8] sm:$0xf]
      %v258 = vld [vmem:[%s1] sm:$0x3]
      %v259 = vld [vmem:[%s246] sm:$0x3f]
      %v261 = vcombine.high %v259, %v259
      %v263 = vunpack.c.l.s4 1983009808
      %v264 = vunpack.c.0.s8 %v263
      %v265 = vlaneseq
      %v266 = vshrl.u32 %v265, 7
      %v267 = vsub.s32 %v264, %v266
      %v268 = vrot.slane %v259, %v267
      %v270 = vunpack.c.l.s4 1983009808
      %v271 = vunpack.c.0.s8 %v270
      %v272 = vlaneseq
      %v273 = vshrl.u32 %v272, 7
      %v274 = vsub.s32 %v271, %v273
      %v275 = vrot.slane %v261, %v274
      %v276 = vcombine.high %v268, %v268
      %vm277 = vcmask 31744
      %v279 = vsel %vm277, %v258, 0
      %vm281 = vcmask 1041408
      %v283 = vsel %vm281, %v268, 0
      %v286 = vsel %vm281, %v276, 0
      %v289 = vsel %vm281, %v275, 0
      %291 = vmatprep.subr.bf16.mxu0 %v286
      %292 = vmatpush1.bf16.msra.mxu0 %v283
      %293 = vmatprep.subr.bf16.mxu0 0
      %294 = vmatpush1.bf16.msra.mxu0 0
      %295 = vmatprep.subr.bf16.mxu0 0
      %296 = vmatpush1.bf16.msra.mxu0 0
      %297 = vmatprep.subr.bf16.mxu0 0
      %298 = vmatpush1.bf16.msra.mxu0 0
      %299 = vmatprep.subr.bf16.mxu0 0
      %300 = vmatpush1.bf16.msra.mxu0 0
      %301 = vmatprep.subr.bf16.mxu0 0
      %302 = vmatpush1.bf16.msra.mxu0 0
      %303 = vmatprep.subr.bf16.mxu0 0
      %304 = vmatpush1.bf16.msra.mxu0 0
      %305 = vmatprep.subr.bf16.mxu0 0
      %306 = vmatpush1.bf16.msra.mxu0 0
      %307 = vmatprep.subr.bf16.mxu0 0
      %308 = vmatpush1.bf16.msra.mxu0 0
      %309 = vmatprep.subr.bf16.mxu0 0
      %310 = vmatpush1.bf16.msra.mxu0 0
      %311 = vmatprep.subr.bf16.mxu0 0
      %312 = vmatpush1.bf16.msra.mxu0 0
      %313 = vmatprep.subr.bf16.mxu0 0
      %314 = vmatpush1.bf16.msra.mxu0 0
      %315 = vmatprep.subr.bf16.mxu0 0
      %316 = vmatpush1.bf16.msra.mxu0 0
      %317 = vmatprep.subr.bf16.mxu0 0
      %318 = vmatpush1.bf16.msra.mxu0 0
      %319 = vmatprep.subr.bf16.mxu0 0
      %320 = vmatpush1.bf16.msra.mxu0 0
      %321 = vmatprep.subr.bf16.mxu0 0
      %322 = vmatpush1.bf16.msra.mxu0 0
      %323 = vmatprep.mubr.bf16.mxu0 0
      %324 = vmatmul.mubr.bf16.gmra.mrb[0].mxu0 %v279
      %v325 = vpop.f32.mrb[0].mxu0
      %v326 = vadd.f32 0.0, %v325
      %v327 = vpop.f32.mrb[0].mxu0
      %v328 = vadd.f32 0.0, %v327
      %v329 = vpop.f32.mrb[0].mxu0
      %v330 = vpop.f32.mrb[0].mxu0
      %331 = vdwg.mxu0
      %332 = vmatprep.subr.bf16.mxu0 0
      %333 = vmatpush1.bf16.msra.mxu0 %v289
      %334 = vmatprep.subr.bf16.mxu0 0
      %335 = vmatpush1.bf16.msra.mxu0 0
      %336 = vmatprep.subr.bf16.mxu0 0
      %337 = vmatpush1.bf16.msra.mxu0 0
      %338 = vmatprep.subr.bf16.mxu0 0
      %339 = vmatpush1.bf16.msra.mxu0 0
      %340 = vmatprep.subr.bf16.mxu0 0
      %341 = vmatpush1.bf16.msra.mxu0 0
      %342 = vmatprep.subr.bf16.mxu0 0
      %343 = vmatpush1.bf16.msra.mxu0 0
      %344 = vmatprep.subr.bf16.mxu0 0
      %345 = vmatpush1.bf16.msra.mxu0 0
      %346 = vmatprep.subr.bf16.mxu0 0
      %347 = vmatpush1.bf16.msra.mxu0 0
      %348 = vmatprep.subr.bf16.mxu0 0
      %349 = vmatpush1.bf16.msra.mxu0 0
      %350 = vmatprep.subr.bf16.mxu0 0
      %351 = vmatpush1.bf16.msra.mxu0 0
      %352 = vmatprep.subr.bf16.mxu0 0
      %353 = vmatpush1.bf16.msra.mxu0 0
      %354 = vmatprep.subr.bf16.mxu0 0
      %355 = vmatpush1.bf16.msra.mxu0 0
      %356 = vmatprep.subr.bf16.mxu0 0
      %357 = vmatpush1.bf16.msra.mxu0 0
      %358 = vmatprep.subr.bf16.mxu0 0
      %359 = vmatpush1.bf16.msra.mxu0 0
      %360 = vmatprep.subr.bf16.mxu0 0
      %361 = vmatpush1.bf16.msra.mxu0 0
      %362 = vmatprep.subr.bf16.mxu0 0
      %363 = vmatpush1.bf16.msra.mxu0 0
      %364 = vmatprep.mubr.bf16.mxu0 0
      %365 = vmatmul.mubr.bf16.gmra.mrb[0].mxu0 %v279
      %v366 = vpop.f32.mrb[0].mxu0
      %v367 = vadd.f32 0.0, %v366
      %v368 = vpop.f32.mrb[0].mxu0
      %v369 = vpop.f32.mrb[0].mxu0
      %v370 = vpop.f32.mrb[0].mxu0
      %371 = vdwg.mxu0
      %v374 = vcombine.low %v326, %v328
      %v376 = vadd.f32 %v256, %v374
      %v377 = vadd.f32 %v257, %v367
      %378 = vst [vmem:[#allocation2] sm:$0xff] %v376
      %379 = vst.msk [vmem:[#allocation2 + $0x8] sm:$0xf] %vm254, %v377
      %v380 = vld [vmem:[#allocation2] sm:$0xff]
      %v381 = vld [vmem:[#allocation2 + $0x8] sm:$0xf]
      %s382 = scalar_lea.vmem %s1, 2
      %v383 = vld [vmem:[%s382] sm:$0x3]
      %v384 = vld [vmem:[%s246] sm:$0x3f]
      %v386 = vcombine.high %v384, %v384
      %v388 = vunpack.c.l.s4 1983009808
      %v389 = vunpack.c.0.s8 %v388
      %v390 = vlaneseq
      %v391 = vshrl.u32 %v390, 7
      %v392 = vsub.s32 %v389, %v391
      %v393 = vrot.slane %v384, %v392
      %v395 = vunpack.c.l.s4 1983009808
      %v396 = vunpack.c.0.s8 %v395
      %v397 = vlaneseq
      %v398 = vshrl.u32 %v397, 7
      %v399 = vsub.s32 %v396, %v398
      %v400 = vrot.slane %v386, %v399
      %v401 = vcombine.high %v393, %v393
      %402 = vrot.lane.b32.xlu0 %v393, 127
      %v403 = vpop.permute.xlu0 %402
      %404 = vrot.lane.b32.xlu0 %v401, 127
      %v405 = vpop.permute.xlu0 %404
      %406 = vrot.lane.b32.xlu0 %v400, 127
      %v407 = vpop.permute.xlu0 %406
      %vm408 = vcmask 1039360
      %v409 = vsel %vm408, %v403, %v405
      %v410 = vsel %vm408, %v405, %v407
      %v412 = vsel %vm277, %v383, 0
      %v415 = vsel %vm281, %v409, 0
      %v418 = vsel %vm281, %v410, 0
      %v421 = vsel %vm281, %v407, 0
      %423 = vmatprep.subr.bf16.mxu0 %v418
      %424 = vmatpush1.bf16.msra.mxu0 %v415
      %425 = vmatprep.subr.bf16.mxu0 0
      %426 = vmatpush1.bf16.msra.mxu0 0
      %427 = vmatprep.subr.bf16.mxu0 0
      %428 = vmatpush1.bf16.msra.mxu0 0
      %429 = vmatprep.subr.bf16.mxu0 0
      %430 = vmatpush1.bf16.msra.mxu0 0
      %431 = vmatprep.subr.bf16.mxu0 0
      %432 = vmatpush1.bf16.msra.mxu0 0
      %433 = vmatprep.subr.bf16.mxu0 0
      %434 = vmatpush1.bf16.msra.mxu0 0
      %435 = vmatprep.subr.bf16.mxu0 0
      %436 = vmatpush1.bf16.msra.mxu0 0
      %437 = vmatprep.subr.bf16.mxu0 0
      %438 = vmatpush1.bf16.msra.mxu0 0
      %439 = vmatprep.subr.bf16.mxu0 0
      %440 = vmatpush1.bf16.msra.mxu0 0
      %441 = vmatprep.subr.bf16.mxu0 0
      %442 = vmatpush1.bf16.msra.mxu0 0
      %443 = vmatprep.subr.bf16.mxu0 0
      %444 = vmatpush1.bf16.msra.mxu0 0
      %445 = vmatprep.subr.bf16.mxu0 0
      %446 = vmatpush1.bf16.msra.mxu0 0
      %447 = vmatprep.subr.bf16.mxu0 0
      %448 = vmatpush1.bf16.msra.mxu0 0
      %449 = vmatprep.subr.bf16.mxu0 0
      %450 = vmatpush1.bf16.msra.mxu0 0
      %451 = vmatprep.subr.bf16.mxu0 0
      %452 = vmatpush1.bf16.msra.mxu0 0
      %453 = vmatprep.subr.bf16.mxu0 0
      %454 = vmatpush1.bf16.msra.mxu0 0
      %455 = vmatprep.mubr.bf16.mxu0 0
      %456 = vmatmul.mubr.bf16.gmra.mrb[0].mxu0 %v412
      %v457 = vpop.f32.mrb[0].mxu0
      %v458 = vadd.f32 0.0, %v457
      %v459 = vpop.f32.mrb[0].mxu0
      %v460 = vadd.f32 0.0, %v459
      %v461 = vpop.f32.mrb[0].mxu0
      %v462 = vpop.f32.mrb[0].mxu0
      %463 = vdwg.mxu0
      %464 = vmatprep.subr.bf16.mxu0 0
      %465 = vmatpush1.bf16.msra.mxu0 %v421
      %466 = vmatprep.subr.bf16.mxu0 0
      %467 = vmatpush1.bf16.msra.mxu0 0
      %468 = vmatprep.subr.bf16.mxu0 0
      %469 = vmatpush1.bf16.msra.mxu0 0
      %470 = vmatprep.subr.bf16.mxu0 0
      %471 = vmatpush1.bf16.msra.mxu0 0
      %472 = vmatprep.subr.bf16.mxu0 0
      %473 = vmatpush1.bf16.msra.mxu0 0
      %474 = vmatprep.subr.bf16.mxu0 0
      %475 = vmatpush1.bf16.msra.mxu0 0
      %476 = vmatprep.subr.bf16.mxu0 0
      %477 = vmatpush1.bf16.msra.mxu0 0
      %478 = vmatprep.subr.bf16.mxu0 0
      %479 = vmatpush1.bf16.msra.mxu0 0
      %480 = vmatprep.subr.bf16.mxu0 0
      %481 = vmatpush1.bf16.msra.mxu0 0
      %482 = vmatprep.subr.bf16.mxu0 0
      %483 = vmatpush1.bf16.msra.mxu0 0
      %484 = vmatprep.subr.bf16.mxu0 0
      %485 = vmatpush1.bf16.msra.mxu0 0
      %486 = vmatprep.subr.bf16.mxu0 0
      %487 = vmatpush1.bf16.msra.mxu0 0
      %488 = vmatprep.subr.bf16.mxu0 0
      %489 = vmatpush1.bf16.msra.mxu0 0
      %490 = vmatprep.subr.bf16.mxu0 0
      %491 = vmatpush1.bf16.msra.mxu0 0
      %492 = vmatprep.subr.bf16.mxu0 0
      %493 = vmatpush1.bf16.msra.mxu0 0
      %494 = vmatprep.subr.bf16.mxu0 0
      %495 = vmatpush1.bf16.msra.mxu0 0
      %496 = vmatprep.mubr.bf16.mxu0 0
      %497 = vmatmul.mubr.bf16.gmra.mrb[0].mxu0 %v412
      %v498 = vpop.f32.mrb[0].mxu0
      %v499 = vadd.f32 0.0, %v498
      %v500 = vpop.f32.mrb[0].mxu0
      %v501 = vpop.f32.mrb[0].mxu0
      %v502 = vpop.f32.mrb[0].mxu0
      %503 = vdwg.mxu0
      %v506 = vcombine.low %v458, %v460
      %v508 = vadd.f32 %v380, %v506
      %v509 = vadd.f32 %v381, %v499
      %510 = vst [vmem:[#allocation2] sm:$0xff] %v508
      %511 = vst.msk [vmem:[#allocation2 + $0x8] sm:$0xf] %vm254, %v509
      %v512 = vld [vmem:[#allocation2] sm:$0xff]
      %v513 = vld [vmem:[#allocation2 + $0x8] sm:$0xf]
      %s514 = scalar_lea.vmem %s1, 4
      %v515 = vld [vmem:[%s514] sm:$0x3]
      %v516 = vld [vmem:[%s246] sm:$0x3f]
      %v518 = vcombine.high %v516, %v516
      %v520 = vunpack.c.l.s4 1983009808
      %v521 = vunpack.c.0.s8 %v520
      %v522 = vlaneseq
      %v523 = vshrl.u32 %v522, 7
      %v524 = vsub.s32 %v521, %v523
      %v525 = vrot.slane %v516, %v524
      %v527 = vunpack.c.l.s4 1983009808
      %v528 = vunpack.c.0.s8 %v527
      %v529 = vlaneseq
      %v530 = vshrl.u32 %v529, 7
      %v531 = vsub.s32 %v528, %v530
      %v532 = vrot.slane %v518, %v531
      %v533 = vcombine.high %v525, %v525
      %534 = vrot.lane.b32.xlu0 %v525, 126
      %v535 = vpop.permute.xlu0 %534
      %536 = vrot.lane.b32.xlu0 %v533, 126
      %v537 = vpop.permute.xlu0 %536
      %538 = vrot.lane.b32.xlu0 %v532, 126
      %v539 = vpop.permute.xlu0 %538
      %vm540 = vcmask 1031168
      %v541 = vsel %vm540, %v535, %v537
      %v542 = vsel %vm540, %v537, %v539
      %v544 = vsel %vm277, %v515, 0
      %v547 = vsel %vm281, %v541, 0
      %v550 = vsel %vm281, %v542, 0
      %v553 = vsel %vm281, %v539, 0
      %555 = vmatprep.subr.bf16.mxu0 %v550
      %556 = vmatpush1.bf16.msra.mxu0 %v547
      %557 = vmatprep.subr.bf16.mxu0 0
      %558 = vmatpush1.bf16.msra.mxu0 0
      %559 = vmatprep.subr.bf16.mxu0 0
      %560 = vmatpush1.bf16.msra.mxu0 0
      %561 = vmatprep.subr.bf16.mxu0 0
      %562 = vmatpush1.bf16.msra.mxu0 0
      %563 = vmatprep.subr.bf16.mxu0 0
      %564 = vmatpush1.bf16.msra.mxu0 0
      %565 = vmatprep.subr.bf16.mxu0 0
      %566 = vmatpush1.bf16.msra.mxu0 0
      %567 = vmatprep.subr.bf16.mxu0 0
      %568 = vmatpush1.bf16.msra.mxu0 0
      %569 = vmatprep.subr.bf16.mxu0 0
      %570 = vmatpush1.bf16.msra.mxu0 0
      %571 = vmatprep.subr.bf16.mxu0 0
      %572 = vmatpush1.bf16.msra.mxu0 0
      %573 = vmatprep.subr.bf16.mxu0 0
      %574 = vmatpush1.bf16.msra.mxu0 0
      %575 = vmatprep.subr.bf16.mxu0 0
      %576 = vmatpush1.bf16.msra.mxu0 0
      %577 = vmatprep.subr.bf16.mxu0 0
      %578 = vmatpush1.bf16.msra.mxu0 0
      %579 = vmatprep.subr.bf16.mxu0 0
      %580 = vmatpush1.bf16.msra.mxu0 0
      %581 = vmatprep.subr.bf16.mxu0 0
      %582 = vmatpush1.bf16.msra.mxu0 0
      %583 = vmatprep.subr.bf16.mxu0 0
      %584 = vmatpush1.bf16.msra.mxu0 0
      %585 = vmatprep.subr.bf16.mxu0 0
      %586 = vmatpush1.bf16.msra.mxu0 0
      %587 = vmatprep.mubr.bf16.mxu0 0
      %588 = vmatmul.mubr.bf16.gmra.mrb[0].mxu0 %v544
      %v589 = vpop.f32.mrb[0].mxu0
      %v590 = vadd.f32 0.0, %v589
      %v591 = vpop.f32.mrb[0].mxu0
      %v592 = vadd.f32 0.0, %v591
      %v593 = vpop.f32.mrb[0].mxu0
      %v594 = vpop.f32.mrb[0].mxu0
      %595 = vdwg.mxu0
      %596 = vmatprep.subr.bf16.mxu0 0
      %597 = vmatpush1.bf16.msra.mxu0 %v553
      %598 = vmatprep.subr.bf16.mxu0 0
      %599 = vmatpush1.bf16.msra.mxu0 0
      %600 = vmatprep.subr.bf16.mxu0 0
      %601 = vmatpush1.bf16.msra.mxu0 0
      %602 = vmatprep.subr.bf16.mxu0 0
      %603 = vmatpush1.bf16.msra.mxu0 0
      %604 = vmatprep.subr.bf16.mxu0 0
      %605 = vmatpush1.bf16.msra.mxu0 0
      %606 = vmatprep.subr.bf16.mxu0 0
      %607 = vmatpush1.bf16.msra.mxu0 0
      %608 = vmatprep.subr.bf16.mxu0 0
      %609 = vmatpush1.bf16.msra.mxu0 0
      %610 = vmatprep.subr.bf16.mxu0 0
      %611 = vmatpush1.bf16.msra.mxu0 0
      %612 = vmatprep.subr.bf16.mxu0 0
      %613 = vmatpush1.bf16.msra.mxu0 0
      %614 = vmatprep.subr.bf16.mxu0 0
      %615 = vmatpush1.bf16.msra.mxu0 0
      %616 = vmatprep.subr.bf16.mxu0 0
      %617 = vmatpush1.bf16.msra.mxu0 0
      %618 = vmatprep.subr.bf16.mxu0 0
      %619 = vmatpush1.bf16.msra.mxu0 0
      %620 = vmatprep.subr.bf16.mxu0 0
      %621 = vmatpush1.bf16.msra.mxu0 0
      %622 = vmatprep.subr.bf16.mxu0 0
      %623 = vmatpush1.bf16.msra.mxu0 0
      %624 = vmatprep.subr.bf16.mxu0 0
      %625 = vmatpush1.bf16.msra.mxu0 0
      %626 = vmatprep.subr.bf16.mxu0 0
      %627 = vmatpush1.bf16.msra.mxu0 0
      %628 = vmatprep.mubr.bf16.mxu0 0
      %629 = vmatmul.mubr.bf16.gmra.mrb[0].mxu0 %v544
      %v630 = vpop.f32.mrb[0].mxu0
      %v631 = vadd.f32 0.0, %v630
      %v632 = vpop.f32.mrb[0].mxu0
      %v633 = vpop.f32.mrb[0].mxu0
      %v634 = vpop.f32.mrb[0].mxu0
      %635 = vdwg.mxu0
      %v638 = vcombine.low %v590, %v592
      %v640 = vadd.f32 %v512, %v638
      %v641 = vadd.f32 %v513, %v631
      %642 = vst [vmem:[#allocation2] sm:$0xff] %v640
      %643 = vst.msk [vmem:[#allocation2 + $0x8] sm:$0xf] %vm254, %v641
      %v644 = vld [vmem:[#allocation2] sm:$0xff]
      %v645 = vld [vmem:[#allocation2 + $0x8] sm:$0xf]
      %s646 = scalar_lea.vmem %s1, 6
      %v647 = vld [vmem:[%s646] sm:$0x3]
      %v648 = vld [vmem:[%s246] sm:$0x3f]
      %v650 = vcombine.high %v648, %v648
      %v652 = vunpack.c.l.s4 1983009808
      %v653 = vunpack.c.0.s8 %v652
      %v654 = vlaneseq
      %v655 = vshrl.u32 %v654, 7
      %v656 = vsub.s32 %v653, %v655
      %v657 = vrot.slane %v648, %v656
      %v659 = vunpack.c.l.s4 1983009808
      %v660 = vunpack.c.0.s8 %v659
      %v661 = vlaneseq
      %v662 = vshrl.u32 %v661, 7
      %v663 = vsub.s32 %v660, %v662
      %v664 = vrot.slane %v650, %v663
      %v665 = vcombine.high %v657, %v657
      %666 = vrot.lane.b32.xlu0 %v657, 110
      %v667 = vpop.permute.xlu0 %666
      %668 = vrot.lane.b32.xlu0 %v665, 110
      %v669 = vpop.permute.xlu0 %668
      %670 = vrot.lane.b32.xlu0 %v664, 110
      %v671 = vpop.permute.xlu0 %670
      %vm672 = vcmask 900096
      %v673 = vsel %vm672, %v667, %v669
      %v674 = vsel %vm672, %v669, %v671
      %v676 = vsel %vm277, %v647, 0
      %v679 = vsel %vm281, %v673, 0
      %v682 = vsel %vm281, %v674, 0
      %v685 = vsel %vm281, %v671, 0
      %687 = vmatprep.subr.bf16.mxu0 %v682
      %688 = vmatpush1.bf16.msra.mxu0 %v679
      %689 = vmatprep.subr.bf16.mxu0 0
      %690 = vmatpush1.bf16.msra.mxu0 0
      %691 = vmatprep.subr.bf16.mxu0 0
      %692 = vmatpush1.bf16.msra.mxu0 0
      %693 = vmatprep.subr.bf16.mxu0 0
      %694 = vmatpush1.bf16.msra.mxu0 0
      %695 = vmatprep.subr.bf16.mxu0 0
      %696 = vmatpush1.bf16.msra.mxu0 0
      %697 = vmatprep.subr.bf16.mxu0 0
      %698 = vmatpush1.bf16.msra.mxu0 0
      %699 = vmatprep.subr.bf16.mxu0 0
      %700 = vmatpush1.bf16.msra.mxu0 0
      %701 = vmatprep.subr.bf16.mxu0 0
      %702 = vmatpush1.bf16.msra.mxu0 0
      %703 = vmatprep.subr.bf16.mxu0 0
      %704 = vmatpush1.bf16.msra.mxu0 0
      %705 = vmatprep.subr.bf16.mxu0 0
      %706 = vmatpush1.bf16.msra.mxu0 0
      %707 = vmatprep.subr.bf16.mxu0 0
      %708 = vmatpush1.bf16.msra.mxu0 0
      %709 = vmatprep.subr.bf16.mxu0 0
      %710 = vmatpush1.bf16.msra.mxu0 0
      %711 = vmatprep.subr.bf16.mxu0 0
      %712 = vmatpush1.bf16.msra.mxu0 0
      %713 = vmatprep.subr.bf16.mxu0 0
      %714 = vmatpush1.bf16.msra.mxu0 0
      %715 = vmatprep.subr.bf16.mxu0 0
      %716 = vmatpush1.bf16.msra.mxu0 0
      %717 = vmatprep.subr.bf16.mxu0 0
      %718 = vmatpush1.bf16.msra.mxu0 0
      %719 = vmatprep.mubr.bf16.mxu0 0
      %720 = vmatmul.mubr.bf16.gmra.mrb[0].mxu0 %v676
      %v721 = vpop.f32.mrb[0].mxu0
      %v722 = vadd.f32 0.0, %v721
      %v723 = vpop.f32.mrb[0].mxu0
      %v724 = vadd.f32 0.0, %v723
      %v725 = vpop.f32.mrb[0].mxu0
      %v726 = vpop.f32.mrb[0].mxu0
      %727 = vdwg.mxu0
      %728 = vmatprep.subr.bf16.mxu0 0
      %729 = vmatpush1.bf16.msra.mxu0 %v685
      %730 = vmatprep.subr.bf16.mxu0 0
      %731 = vmatpush1.bf16.msra.mxu0 0
      %732 = vmatprep.subr.bf16.mxu0 0
      %733 = vmatpush1.bf16.msra.mxu0 0
      %734 = vmatprep.subr.bf16.mxu0 0
      %735 = vmatpush1.bf16.msra.mxu0 0
      %736 = vmatprep.subr.bf16.mxu0 0
      %737 = vmatpush1.bf16.msra.mxu0 0
      %738 = vmatprep.subr.bf16.mxu0 0
      %739 = vmatpush1.bf16.msra.mxu0 0
      %740 = vmatprep.subr.bf16.mxu0 0
      %741 = vmatpush1.bf16.msra.mxu0 0
      %742 = vmatprep.subr.bf16.mxu0 0
      %743 = vmatpush1.bf16.msra.mxu0 0
      %744 = vmatprep.subr.bf16.mxu0 0
      %745 = vmatpush1.bf16.msra.mxu0 0
      %746 = vmatprep.subr.bf16.mxu0 0
      %747 = vmatpush1.bf16.msra.mxu0 0
      %748 = vmatprep.subr.bf16.mxu0 0
      %749 = vmatpush1.bf16.msra.mxu0 0
      %750 = vmatprep.subr.bf16.mxu0 0
      %751 = vmatpush1.bf16.msra.mxu0 0
      %752 = vmatprep.subr.bf16.mxu0 0
      %753 = vmatpush1.bf16.msra.mxu0 0
      %754 = vmatprep.subr.bf16.mxu0 0
      %755 = vmatpush1.bf16.msra.mxu0 0
      %756 = vmatprep.subr.bf16.mxu0 0
      %757 = vmatpush1.bf16.msra.mxu0 0
      %758 = vmatprep.subr.bf16.mxu0 0
      %759 = vmatpush1.bf16.msra.mxu0 0
      %760 = vmatprep.mubr.bf16.mxu0 0
      %761 = vmatmul.mubr.bf16.gmra.mrb[0].mxu0 %v676
      %v762 = vpop.f32.mrb[0].mxu0
      %v763 = vadd.f32 0.0, %v762
      %v764 = vpop.f32.mrb[0].mxu0
      %v765 = vpop.f32.mrb[0].mxu0
      %v766 = vpop.f32.mrb[0].mxu0
      %767 = vdwg.mxu0
      %v770 = vcombine.low %v722, %v724
      %v772 = vadd.f32 %v644, %v770
      %v773 = vadd.f32 %v645, %v763
      %774 = vst [vmem:[#allocation2] sm:$0xff] %v772
      %775 = vst.msk [vmem:[#allocation2 + $0x8] sm:$0xf] %vm254, %v773
      %v776 = vld [vmem:[#allocation2] sm:$0xff]
      %v777 = vld [vmem:[#allocation2 + $0x8] sm:$0xf]
      %s778 = scalar_lea.vmem %s1, 8
      %v779 = vld [vmem:[%s778] sm:$0x3]
      %v780 = vld [vmem:[%s246] sm:$0x3f]
      %v782 = vcombine.high %v780, %v780
      %v784 = vunpack.c.l.s4 1983009808
      %v785 = vunpack.c.0.s8 %v784
      %v786 = vlaneseq
      %v787 = vshrl.u32 %v786, 7
      %v788 = vsub.s32 %v785, %v787
      %v789 = vrot.slane %v780, %v788
      %v791 = vunpack.c.l.s4 1983009808
      %v792 = vunpack.c.0.s8 %v791
      %v793 = vlaneseq
      %v794 = vshrl.u32 %v793, 7
      %v795 = vsub.s32 %v792, %v794
      %v796 = vrot.slane %v782, %v795
      %v797 = vcombine.high %v789, %v789
      %798 = vrot.lane.b32.xlu0 %v789, 109
      %v799 = vpop.permute.xlu0 %798
      %800 = vrot.lane.b32.xlu0 %v797, 109
      %v801 = vpop.permute.xlu0 %800
      %802 = vrot.lane.b32.xlu0 %v796, 109
      %v803 = vpop.permute.xlu0 %802
      %vm804 = vcmask 891904
      %v805 = vsel %vm804, %v799, %v801
      %v806 = vsel %vm804, %v801, %v803
      %v808 = vsel %vm277, %v779, 0
      %v811 = vsel %vm281, %v805, 0
      %v814 = vsel %vm281, %v806, 0
      %v817 = vsel %vm281, %v803, 0
      %819 = vmatprep.subr.bf16.mxu0 %v814
      %820 = vmatpush1.bf16.msra.mxu0 %v811
      %821 = vmatprep.subr.bf16.mxu0 0
      %822 = vmatpush1.bf16.msra.mxu0 0
      %823 = vmatprep.subr.bf16.mxu0 0
      %824 = vmatpush1.bf16.msra.mxu0 0
      %825 = vmatprep.subr.bf16.mxu0 0
      %826 = vmatpush1.bf16.msra.mxu0 0
      %827 = vmatprep.subr.bf16.mxu0 0
      %828 = vmatpush1.bf16.msra.mxu0 0
      %829 = vmatprep.subr.bf16.mxu0 0
      %830 = vmatpush1.bf16.msra.mxu0 0
      %831 = vmatprep.subr.bf16.mxu0 0
      %832 = vmatpush1.bf16.msra.mxu0 0
      %833 = vmatprep.subr.bf16.mxu0 0
      %834 = vmatpush1.bf16.msra.mxu0 0
      %835 = vmatprep.subr.bf16.mxu0 0
      %836 = vmatpush1.bf16.msra.mxu0 0
      %837 = vmatprep.subr.bf16.mxu0 0
      %838 = vmatpush1.bf16.msra.mxu0 0
      %839 = vmatprep.subr.bf16.mxu0 0
      %840 = vmatpush1.bf16.msra.mxu0 0
      %841 = vmatprep.subr.bf16.mxu0 0
      %842 = vmatpush1.bf16.msra.mxu0 0
      %843 = vmatprep.subr.bf16.mxu0 0
      %844 = vmatpush1.bf16.msra.mxu0 0
      %845 = vmatprep.subr.bf16.mxu0 0
      %846 = vmatpush1.bf16.msra.mxu0 0
      %847 = vmatprep.subr.bf16.mxu0 0
      %848 = vmatpush1.bf16.msra.mxu0 0
      %849 = vmatprep.subr.bf16.mxu0 0
      %850 = vmatpush1.bf16.msra.mxu0 0
      %851 = vmatprep.mubr.bf16.mxu0 0
      %852 = vmatmul.mubr.bf16.gmra.mrb[0].mxu0 %v808
      %v853 = vpop.f32.mrb[0].mxu0
      %v854 = vadd.f32 0.0, %v853
      %v855 = vpop.f32.mrb[0].mxu0
      %v856 = vadd.f32 0.0, %v855
      %v857 = vpop.f32.mrb[0].mxu0
      %v858 = vpop.f32.mrb[0].mxu0
      %859 = vdwg.mxu0
      %860 = vmatprep.subr.bf16.mxu0 0
      %861 = vmatpush1.bf16.msra.mxu0 %v817
      %862 = vmatprep.subr.bf16.mxu0 0
      %863 = vmatpush1.bf16.msra.mxu0 0
      %864 = vmatprep.subr.bf16.mxu0 0
      %865 = vmatpush1.bf16.msra.mxu0 0
      %866 = vmatprep.subr.bf16.mxu0 0
      %867 = vmatpush1.bf16.msra.mxu0 0
      %868 = vmatprep.subr.bf16.mxu0 0
      %869 = vmatpush1.bf16.msra.mxu0 0
      %870 = vmatprep.subr.bf16.mxu0 0
      %871 = vmatpush1.bf16.msra.mxu0 0
      %872 = vmatprep.subr.bf16.mxu0 0
      %873 = vmatpush1.bf16.msra.mxu0 0
      %874 = vmatprep.subr.bf16.mxu0 0
      %875 = vmatpush1.bf16.msra.mxu0 0
      %876 = vmatprep.subr.bf16.mxu0 0
      %877 = vmatpush1.bf16.msra.mxu0 0
      %878 = vmatprep.subr.bf16.mxu0 0
      %879 = vmatpush1.bf16.msra.mxu0 0
      %880 = vmatprep.subr.bf16.mxu0 0
      %881 = vmatpush1.bf16.msra.mxu0 0
      %882 = vmatprep.subr.bf16.mxu0 0
      %883 = vmatpush1.bf16.msra.mxu0 0
      %884 = vmatprep.subr.bf16.mxu0 0
      %885 = vmatpush1.bf16.msra.mxu0 0
      %886 = vmatprep.subr.bf16.mxu0 0
      %887 = vmatpush1.bf16.msra.mxu0 0
      %888 = vmatprep.subr.bf16.mxu0 0
      %889 = vmatpush1.bf16.msra.mxu0 0
      %890 = vmatprep.subr.bf16.mxu0 0
      %891 = vmatpush1.bf16.msra.mxu0 0
      %892 = vmatprep.mubr.bf16.mxu0 0
      %893 = vmatmul.mubr.bf16.gmra.mrb[0].mxu0 %v808
      %v894 = vpop.f32.mrb[0].mxu0
      %v895 = vadd.f32 0.0, %v894
      %v896 = vpop.f32.mrb[0].mxu0
      %v897 = vpop.f32.mrb[0].mxu0
      %v898 = vpop.f32.mrb[0].mxu0
      %899 = vdwg.mxu0
      %v902 = vcombine.low %v854, %v856
      %v904 = vadd.f32 %v776, %v902
      %v905 = vadd.f32 %v777, %v895
      %906 = vst [vmem:[#allocation2] sm:$0xff] %v904
      %907 = vst.msk [vmem:[#allocation2 + $0x8] sm:$0xf] %vm254, %v905
      %v908 = vld [vmem:[#allocation2] sm:$0xff]
      %v909 = vld [vmem:[#allocation2 + $0x8] sm:$0xf]
      %s910 = scalar_lea.vmem %s1, 10
      %v911 = vld [vmem:[%s910] sm:$0x3]
      %v912 = vld [vmem:[%s246] sm:$0x3f]
      %v914 = vcombine.high %v912, %v912
      %v916 = vunpack.c.l.s4 1983009808
      %v917 = vunpack.c.0.s8 %v916
      %v918 = vlaneseq
      %v919 = vshrl.u32 %v918, 7
      %v920 = vsub.s32 %v917, %v919
      %v921 = vrot.slane %v912, %v920
      %v923 = vunpack.c.l.s4 1983009808
      %v924 = vunpack.c.0.s8 %v923
      %v925 = vlaneseq
      %v926 = vshrl.u32 %v925, 7
      %v927 = vsub.s32 %v924, %v926
      %v928 = vrot.slane %v914, %v927
      %v929 = vcombine.high %v921, %v921
      %930 = vrot.lane.b32.xlu0 %v921, 108
      %v931 = vpop.permute.xlu0 %930
      %932 = vrot.lane.b32.xlu0 %v929, 108
      %v933 = vpop.permute.xlu0 %932
      %934 = vrot.lane.b32.xlu0 %v928, 108
      %v935 = vpop.permute.xlu0 %934
      %vm936 = vcmask 883712
      %v937 = vsel %vm936, %v931, %v933
      %v938 = vsel %vm936, %v933, %v935
      %v940 = vsel %vm277, %v911, 0
      %v943 = vsel %vm281, %v937, 0
      %v946 = vsel %vm281, %v938, 0
      %v949 = vsel %vm281, %v935, 0
      %951 = vmatprep.subr.bf16.mxu0 %v946
      %952 = vmatpush1.bf16.msra.mxu0 %v943
      %953 = vmatprep.subr.bf16.mxu0 0
      %954 = vmatpush1.bf16.msra.mxu0 0
      %955 = vmatprep.subr.bf16.mxu0 0
      %956 = vmatpush1.bf16.msra.mxu0 0
      %957 = vmatprep.subr.bf16.mxu0 0
      %958 = vmatpush1.bf16.msra.mxu0 0
      %959 = vmatprep.subr.bf16.mxu0 0
      %960 = vmatpush1.bf16.msra.mxu0 0
      %961 = vmatprep.subr.bf16.mxu0 0
      %962 = vmatpush1.bf16.msra.mxu0 0
      %963 = vmatprep.subr.bf16.mxu0 0
      %964 = vmatpush1.bf16.msra.mxu0 0
      %965 = vmatprep.subr.bf16.mxu0 0
      %966 = vmatpush1.bf16.msra.mxu0 0
      %967 = vmatprep.subr.bf16.mxu0 0
      %968 = vmatpush1.bf16.msra.mxu0 0
      %969 = vmatprep.subr.bf16.mxu0 0
      %970 = vmatpush1.bf16.msra.mxu0 0
      %971 = vmatprep.subr.bf16.mxu0 0
      %972 = vmatpush1.bf16.msra.mxu0 0
      %973 = vmatprep.subr.bf16.mxu0 0
      %974 = vmatpush1.bf16.msra.mxu0 0
      %975 = vmatprep.subr.bf16.mxu0 0
      %976 = vmatpush1.bf16.msra.mxu0 0
      %977 = vmatprep.subr.bf16.mxu0 0
      %978 = vmatpush1.bf16.msra.mxu0 0
      %979 = vmatprep.subr.bf16.mxu0 0
      %980 = vmatpush1.bf16.msra.mxu0 0
      %981 = vmatprep.subr.bf16.mxu0 0
      %982 = vmatpush1.bf16.msra.mxu0 0
      %983 = vmatprep.mubr.bf16.mxu0 0
      %984 = vmatmul.mubr.bf16.gmra.mrb[0].mxu0 %v940
      %v985 = vpop.f32.mrb[0].mxu0
      %v986 = vadd.f32 0.0, %v985
      %v987 = vpop.f32.mrb[0].mxu0
      %v988 = vadd.f32 0.0, %v987
      %v989 = vpop.f32.mrb[0].mxu0
      %v990 = vpop.f32.mrb[0].mxu0
      %991 = vdwg.mxu0
      %992 = vmatprep.subr.bf16.mxu0 0
      %993 = vmatpush1.bf16.msra.mxu0 %v949
      %994 = vmatprep.subr.bf16.mxu0 0
      %995 = vmatpush1.bf16.msra.mxu0 0
      %996 = vmatprep.subr.bf16.mxu0 0
      %997 = vmatpush1.bf16.msra.mxu0 0
      %998 = vmatprep.subr.bf16.mxu0 0
      %999 = vmatpush1.bf16.msra.mxu0 0
      %1000 = vmatprep.subr.bf16.mxu0 0
      %1001 = vmatpush1.bf16.msra.mxu0 0
      %1002 = vmatprep.subr.bf16.mxu0 0
      %1003 = vmatpush1.bf16.msra.mxu0 0
      %1004 = vmatprep.subr.bf16.mxu0 0
      %1005 = vmatpush1.bf16.msra.mxu0 0
      %1006 = vmatprep.subr.bf16.mxu0 0
      %1007 = vmatpush1.bf16.msra.mxu0 0
      %1008 = vmatprep.subr.bf16.mxu0 0
      %1009 = vmatpush1.bf16.msra.mxu0 0
      %1010 = vmatprep.subr.bf16.mxu0 0
      %1011 = vmatpush1.bf16.msra.mxu0 0
      %1012 = vmatprep.subr.bf16.mxu0 0
      %1013 = vmatpush1.bf16.msra.mxu0 0
      %1014 = vmatprep.subr.bf16.mxu0 0
      %1015 = vmatpush1.bf16.msra.mxu0 0
      %1016 = vmatprep.subr.bf16.mxu0 0
      %1017 = vmatpush1.bf16.msra.mxu0 0
      %1018 = vmatprep.subr.bf16.mxu0 0
      %1019 = vmatpush1.bf16.msra.mxu0 0
      %1020 = vmatprep.subr.bf16.mxu0 0
      %1021 = vmatpush1.bf16.msra.mxu0 0
      %1022 = vmatprep.subr.bf16.mxu0 0
      %1023 = vmatpush1.bf16.msra.mxu0 0
      %1024 = vmatprep.mubr.bf16.mxu0 0
      %1025 = vmatmul.mubr.bf16.gmra.mrb[0].mxu0 %v940
      %v1026 = vpop.f32.mrb[0].mxu0
      %v1027 = vadd.f32 0.0, %v1026
      %v1028 = vpop.f32.mrb[0].mxu0
      %v1029 = vpop.f32.mrb[0].mxu0
      %v1030 = vpop.f32.mrb[0].mxu0
      %1031 = vdwg.mxu0
      %v1034 = vcombine.low %v986, %v988
      %v1036 = vadd.f32 %v908, %v1034
      %v1037 = vadd.f32 %v909, %v1027
      %1038 = vst [vmem:[#allocation2] sm:$0xff] %v1036
      %1039 = vst.msk [vmem:[#allocation2 + $0x8] sm:$0xf] %vm254, %v1037
      %v1040 = vld [vmem:[#allocation2] sm:$0xff]
      %v1041 = vld [vmem:[#allocation2 + $0x8] sm:$0xf]
      %s1042 = scalar_lea.vmem %s1, 12
      %v1043 = vld [vmem:[%s1042] sm:$0x3]
      %v1044 = vld [vmem:[%s246] sm:$0x3f]
      %v1046 = vcombine.high %v1044, %v1044
      %v1048 = vunpack.c.l.s4 1983009808
      %v1049 = vunpack.c.0.s8 %v1048
      %v1050 = vlaneseq
      %v1051 = vshrl.u32 %v1050, 7
      %v1052 = vsub.s32 %v1049, %v1051
      %v1053 = vrot.slane %v1044, %v1052
      %v1055 = vunpack.c.l.s4 1983009808
      %v1056 = vunpack.c.0.s8 %v1055
      %v1057 = vlaneseq
      %v1058 = vshrl.u32 %v1057, 7
      %v1059 = vsub.s32 %v1056, %v1058
      %v1060 = vrot.slane %v1046, %v1059
      %v1061 = vcombine.high %v1053, %v1053
      %1062 = vrot.lane.b32.xlu0 %v1053, 92
      %v1063 = vpop.permute.xlu0 %1062
      %1064 = vrot.lane.b32.xlu0 %v1061, 92
      %v1065 = vpop.permute.xlu0 %1064
      %1066 = vrot.lane.b32.xlu0 %v1060, 92
      %v1067 = vpop.permute.xlu0 %1066
      %vm1068 = vcmask 752640
      %v1069 = vsel %vm1068, %v1063, %v1065
      %v1070 = vsel %vm1068, %v1065, %v1067
      %v1072 = vsel %vm277, %v1043, 0
      %v1075 = vsel %vm281, %v1069, 0
      %v1078 = vsel %vm281, %v1070, 0
      %v1081 = vsel %vm281, %v1067, 0
      %1083 = vmatprep.subr.bf16.mxu0 %v1078
      %1084 = vmatpush1.bf16.msra.mxu0 %v1075
      %1085 = vmatprep.subr.bf16.mxu0 0
      %1086 = vmatpush1.bf16.msra.mxu0 0
      %1087 = vmatprep.subr.bf16.mxu0 0
      %1088 = vmatpush1.bf16.msra.mxu0 0
      %1089 = vmatprep.subr.bf16.mxu0 0
      %1090 = vmatpush1.bf16.msra.mxu0 0
      %1091 = vmatprep.subr.bf16.mxu0 0
      %1092 = vmatpush1.bf16.msra.mxu0 0
      %1093 = vmatprep.subr.bf16.mxu0 0
      %1094 = vmatpush1.bf16.msra.mxu0 0
      %1095 = vmatprep.subr.bf16.mxu0 0
      %1096 = vmatpush1.bf16.msra.mxu0 0
      %1097 = vmatprep.subr.bf16.mxu0 0
      %1098 = vmatpush1.bf16.msra.mxu0 0
      %1099 = vmatprep.subr.bf16.mxu0 0
      %1100 = vmatpush1.bf16.msra.mxu0 0
      %1101 = vmatprep.subr.bf16.mxu0 0
      %1102 = vmatpush1.bf16.msra.mxu0 0
      %1103 = vmatprep.subr.bf16.mxu0 0
      %1104 = vmatpush1.bf16.msra.mxu0 0
      %1105 = vmatprep.subr.bf16.mxu0 0
      %1106 = vmatpush1.bf16.msra.mxu0 0
      %1107 = vmatprep.subr.bf16.mxu0 0
      %1108 = vmatpush1.bf16.msra.mxu0 0
      %1109 = vmatprep.subr.bf16.mxu0 0
      %1110 = vmatpush1.bf16.msra.mxu0 0
      %1111 = vmatprep.subr.bf16.mxu0 0
      %1112 = vmatpush1.bf16.msra.mxu0 0
      %1113 = vmatprep.subr.bf16.mxu0 0
      %1114 = vmatpush1.bf16.msra.mxu0 0
      %1115 = vmatprep.mubr.bf16.mxu0 0
      %1116 = vmatmul.mubr.bf16.gmra.mrb[0].mxu0 %v1072
      %v1117 = vpop.f32.mrb[0].mxu0
      %v1118 = vadd.f32 0.0, %v1117
      %v1119 = vpop.f32.mrb[0].mxu0
      %v1120 = vadd.f32 0.0, %v1119
      %v1121 = vpop.f32.mrb[0].mxu0
      %v1122 = vpop.f32.mrb[0].mxu0
      %1123 = vdwg.mxu0
      %1124 = vmatprep.subr.bf16.mxu0 0
      %1125 = vmatpush1.bf16.msra.mxu0 %v1081
      %1126 = vmatprep.subr.bf16.mxu0 0
      %1127 = vmatpush1.bf16.msra.mxu0 0
      %1128 = vmatprep.subr.bf16.mxu0 0
      %1129 = vmatpush1.bf16.msra.mxu0 0
      %1130 = vmatprep.subr.bf16.mxu0 0
      %1131 = vmatpush1.bf16.msra.mxu0 0
      %1132 = vmatprep.subr.bf16.mxu0 0
      %1133 = vmatpush1.bf16.msra.mxu0 0
      %1134 = vmatprep.subr.bf16.mxu0 0
      %1135 = vmatpush1.bf16.msra.mxu0 0
      %1136 = vmatprep.subr.bf16.mxu0 0
      %1137 = vmatpush1.bf16.msra.mxu0 0
      %1138 = vmatprep.subr.bf16.mxu0 0
      %1139 = vmatpush1.bf16.msra.mxu0 0
      %1140 = vmatprep.subr.bf16.mxu0 0
      %1141 = vmatpush1.bf16.msra.mxu0 0
      %1142 = vmatprep.subr.bf16.mxu0 0
      %1143 = vmatpush1.bf16.msra.mxu0 0
      %1144 = vmatprep.subr.bf16.mxu0 0
      %1145 = vmatpush1.bf16.msra.mxu0 0
      %1146 = vmatprep.subr.bf16.mxu0 0
      %1147 = vmatpush1.bf16.msra.mxu0 0
      %1148 = vmatprep.subr.bf16.mxu0 0
      %1149 = vmatpush1.bf16.msra.mxu0 0
      %1150 = vmatprep.subr.bf16.mxu0 0
      %1151 = vmatpush1.bf16.msra.mxu0 0
      %1152 = vmatprep.subr.bf16.mxu0 0
      %1153 = vmatpush1.bf16.msra.mxu0 0
      %1154 = vmatprep.subr.bf16.mxu0 0
      %1155 = vmatpush1.bf16.msra.mxu0 0
      %1156 = vmatprep.mubr.bf16.mxu0 0
      %1157 = vmatmul.mubr.bf16.gmra.mrb[0].mxu0 %v1072
      %v1158 = vpop.f32.mrb[0].mxu0
      %v1159 = vadd.f32 0.0, %v1158
      %v1160 = vpop.f32.mrb[0].mxu0
      %v1161 = vpop.f32.mrb[0].mxu0
      %v1162 = vpop.f32.mrb[0].mxu0
      %1163 = vdwg.mxu0
      %v1166 = vcombine.low %v1118, %v1120
      %v1168 = vadd.f32 %v1040, %v1166
      %v1169 = vadd.f32 %v1041, %v1159
      %1170 = vst [vmem:[#allocation2] sm:$0xff] %v1168
      %1171 = vst.msk [vmem:[#allocation2 + $0x8] sm:$0xf] %vm254, %v1169
      %v1172 = vld [vmem:[#allocation2] sm:$0xff]
      %v1173 = vld [vmem:[#allocation2 + $0x8] sm:$0xf]
      %s1174 = scalar_lea.vmem %s1, 14
      %v1175 = vld [vmem:[%s1174] sm:$0x3]
      %v1176 = vld [vmem:[%s246] sm:$0x3f]
      %v1178 = vcombine.high %v1176, %v1176
      %v1180 = vunpack.c.l.s4 1983009808
      %v1181 = vunpack.c.0.s8 %v1180
      %v1182 = vlaneseq
      %v1183 = vshrl.u32 %v1182, 7
      %v1184 = vsub.s32 %v1181, %v1183
      %v1185 = vrot.slane %v1176, %v1184
      %v1187 = vunpack.c.l.s4 1983009808
      %v1188 = vunpack.c.0.s8 %v1187
      %v1189 = vlaneseq
      %v1190 = vshrl.u32 %v1189, 7
      %v1191 = vsub.s32 %v1188, %v1190
      %v1192 = vrot.slane %v1178, %v1191
      %v1193 = vcombine.high %v1185, %v1185
      %1194 = vrot.lane.b32.xlu0 %v1185, 91
      %v1195 = vpop.permute.xlu0 %1194
      %1196 = vrot.lane.b32.xlu0 %v1193, 91
      %v1197 = vpop.permute.xlu0 %1196
      %1198 = vrot.lane.b32.xlu0 %v1192, 91
      %v1199 = vpop.permute.xlu0 %1198
      %vm1200 = vcmask 744448
      %v1201 = vsel %vm1200, %v1195, %v1197
      %v1202 = vsel %vm1200, %v1197, %v1199
      %v1204 = vsel %vm277, %v1175, 0
      %v1207 = vsel %vm281, %v1201, 0
      %v1210 = vsel %vm281, %v1202, 0
      %v1213 = vsel %vm281, %v1199, 0
      %1215 = vmatprep.subr.bf16.mxu0 %v1210
      %1216 = vmatpush1.bf16.msra.mxu0 %v1207
      %1217 = vmatprep.subr.bf16.mxu0 0
      %1218 = vmatpush1.bf16.msra.mxu0 0
      %1219 = vmatprep.subr.bf16.mxu0 0
      %1220 = vmatpush1.bf16.msra.mxu0 0
      %1221 = vmatprep.subr.bf16.mxu0 0
      %1222 = vmatpush1.bf16.msra.mxu0 0
      %1223 = vmatprep.subr.bf16.mxu0 0
      %1224 = vmatpush1.bf16.msra.mxu0 0
      %1225 = vmatprep.subr.bf16.mxu0 0
      %1226 = vmatpush1.bf16.msra.mxu0 0
      %1227 = vmatprep.subr.bf16.mxu0 0
      %1228 = vmatpush1.bf16.msra.mxu0 0
      %1229 = vmatprep.subr.bf16.mxu0 0
      %1230 = vmatpush1.bf16.msra.mxu0 0
      %1231 = vmatprep.subr.bf16.mxu0 0
      %1232 = vmatpush1.bf16.msra.mxu0 0
      %1233 = vmatprep.subr.bf16.mxu0 0
      %1234 = vmatpush1.bf16.msra.mxu0 0
      %1235 = vmatprep.subr.bf16.mxu0 0
      %1236 = vmatpush1.bf16.msra.mxu0 0
      %1237 = vmatprep.subr.bf16.mxu0 0
      %1238 = vmatpush1.bf16.msra.mxu0 0
      %1239 = vmatprep.subr.bf16.mxu0 0
      %1240 = vmatpush1.bf16.msra.mxu0 0
      %1241 = vmatprep.subr.bf16.mxu0 0
      %1242 = vmatpush1.bf16.msra.mxu0 0
      %1243 = vmatprep.subr.bf16.mxu0 0
      %1244 = vmatpush1.bf16.msra.mxu0 0
      %1245 = vmatprep.subr.bf16.mxu0 0
      %1246 = vmatpush1.bf16.msra.mxu0 0
      %1247 = vmatprep.mubr.bf16.mxu0 0
      %1248 = vmatmul.mubr.bf16.gmra.mrb[0].mxu0 %v1204
      %v1249 = vpop.f32.mrb[0].mxu0
      %v1250 = vadd.f32 0.0, %v1249
      %v1251 = vpop.f32.mrb[0].mxu0
      %v1252 = vadd.f32 0.0, %v1251
      %v1253 = vpop.f32.mrb[0].mxu0
      %v1254 = vpop.f32.mrb[0].mxu0
      %1255 = vdwg.mxu0
      %1256 = vmatprep.subr.bf16.mxu0 0
      %1257 = vmatpush1.bf16.msra.mxu0 %v1213
      %1258 = vmatprep.subr.bf16.mxu0 0
      %1259 = vmatpush1.bf16.msra.mxu0 0
      %1260 = vmatprep.subr.bf16.mxu0 0
      %1261 = vmatpush1.bf16.msra.mxu0 0
      %1262 = vmatprep.subr.bf16.mxu0 0
      %1263 = vmatpush1.bf16.msra.mxu0 0
      %1264 = vmatprep.subr.bf16.mxu0 0
      %1265 = vmatpush1.bf16.msra.mxu0 0
      %1266 = vmatprep.subr.bf16.mxu0 0
      %1267 = vmatpush1.bf16.msra.mxu0 0
      %1268 = vmatprep.subr.bf16.mxu0 0
      %1269 = vmatpush1.bf16.msra.mxu0 0
      %1270 = vmatprep.subr.bf16.mxu0 0
      %1271 = vmatpush1.bf16.msra.mxu0 0
      %1272 = vmatprep.subr.bf16.mxu0 0
      %1273 = vmatpush1.bf16.msra.mxu0 0
      %1274 = vmatprep.subr.bf16.mxu0 0
      %1275 = vmatpush1.bf16.msra.mxu0 0
      %1276 = vmatprep.subr.bf16.mxu0 0
      %1277 = vmatpush1.bf16.msra.mxu0 0
      %1278 = vmatprep.subr.bf16.mxu0 0
      %1279 = vmatpush1.bf16.msra.mxu0 0
      %1280 = vmatprep.subr.bf16.mxu0 0
      %1281 = vmatpush1.bf16.msra.mxu0 0
      %1282 = vmatprep.subr.bf16.mxu0 0
      %1283 = vmatpush1.bf16.msra.mxu0 0
      %1284 = vmatprep.subr.bf16.mxu0 0
      %1285 = vmatpush1.bf16.msra.mxu0 0
      %1286 = vmatprep.subr.bf16.mxu0 0
      %1287 = vmatpush1.bf16.msra.mxu0 0
      %1288 = vmatprep.mubr.bf16.mxu0 0
      %1289 = vmatmul.mubr.bf16.gmra.mrb[0].mxu0 %v1204
      %v1290 = vpop.f32.mrb[0].mxu0
      %v1291 = vadd.f32 0.0, %v1290
      %v1292 = vpop.f32.mrb[0].mxu0
      %v1293 = vpop.f32.mrb[0].mxu0
      %v1294 = vpop.f32.mrb[0].mxu0
      %1295 = vdwg.mxu0
      %v1298 = vcombine.low %v1250, %v1252
      %v1300 = vadd.f32 %v1172, %v1298
      %v1301 = vadd.f32 %v1173, %v1291
      %1302 = vst [vmem:[#allocation2] sm:$0xff] %v1300
      %1303 = vst.msk [vmem:[#allocation2 + $0x8] sm:$0xf] %vm254, %v1301
      %v1304 = vld [vmem:[#allocation2] sm:$0xff]
      %v1305 = vld [vmem:[#allocation2 + $0x8] sm:$0xf]
      %s1306 = scalar_lea.vmem %s1, 16
      %v1307 = vld [vmem:[%s1306] sm:$0x3]
      %v1308 = vld [vmem:[%s246] sm:$0x3f]
      %v1310 = vcombine.high %v1308, %v1308
      %v1312 = vunpack.c.l.s4 1983009808
      %v1313 = vunpack.c.0.s8 %v1312
      %v1314 = vlaneseq
      %v1315 = vshrl.u32 %v1314, 7
      %v1316 = vsub.s32 %v1313, %v1315
      %v1317 = vrot.slane %v1308, %v1316
      %v1319 = vunpack.c.l.s4 1983009808
      %v1320 = vunpack.c.0.s8 %v1319
      %v1321 = vlaneseq
      %v1322 = vshrl.u32 %v1321, 7
      %v1323 = vsub.s32 %v1320, %v1322
      %v1324 = vrot.slane %v1310, %v1323
      %v1325 = vcombine.high %v1317, %v1317
      %1326 = vrot.lane.b32.xlu0 %v1317, 90
      %v1327 = vpop.permute.xlu0 %1326
      %1328 = vrot.lane.b32.xlu0 %v1325, 90
      %v1329 = vpop.permute.xlu0 %1328
      %1330 = vrot.lane.b32.xlu0 %v1324, 90
      %v1331 = vpop.permute.xlu0 %1330
      %vm1332 = vcmask 736256
      %v1333 = vsel %vm1332, %v1327, %v1329
      %v1334 = vsel %vm1332, %v1329, %v1331
      %v1336 = vsel %vm277, %v1307, 0
      %v1339 = vsel %vm281, %v1333, 0
      %v1342 = vsel %vm281, %v1334, 0
      %v1345 = vsel %vm281, %v1331, 0
      %1347 = vmatprep.subr.bf16.mxu0 %v1342
      %1348 = vmatpush1.bf16.msra.mxu0 %v1339
      %1349 = vmatprep.subr.bf16.mxu0 0
      %1350 = vmatpush1.bf16.msra.mxu0 0
      %1351 = vmatprep.subr.bf16.mxu0 0
      %1352 = vmatpush1.bf16.msra.mxu0 0
      %1353 = vmatprep.subr.bf16.mxu0 0
      %1354 = vmatpush1.bf16.msra.mxu0 0
      %1355 = vmatprep.subr.bf16.mxu0 0
      %1356 = vmatpush1.bf16.msra.mxu0 0
      %1357 = vmatprep.subr.bf16.mxu0 0
      %1358 = vmatpush1.bf16.msra.mxu0 0
      %1359 = vmatprep.subr.bf16.mxu0 0
      %1360 = vmatpush1.bf16.msra.mxu0 0
      %1361 = vmatprep.subr.bf16.mxu0 0
      %1362 = vmatpush1.bf16.msra.mxu0 0
      %1363 = vmatprep.subr.bf16.mxu0 0
      %1364 = vmatpush1.bf16.msra.mxu0 0
      %1365 = vmatprep.subr.bf16.mxu0 0
      %1366 = vmatpush1.bf16.msra.mxu0 0
      %1367 = vmatprep.subr.bf16.mxu0 0
      %1368 = vmatpush1.bf16.msra.mxu0 0
      %1369 = vmatprep.subr.bf16.mxu0 0
      %1370 = vmatpush1.bf16.msra.mxu0 0
      %1371 = vmatprep.subr.bf16.mxu0 0
      %1372 = vmatpush1.bf16.msra.mxu0 0
      %1373 = vmatprep.subr.bf16.mxu0 0
      %1374 = vmatpush1.bf16.msra.mxu0 0
      %1375 = vmatprep.subr.bf16.mxu0 0
      %1376 = vmatpush1.bf16.msra.mxu0 0
      %1377 = vmatprep.subr.bf16.mxu0 0
      %1378 = vmatpush1.bf16.msra.mxu0 0
      %1379 = vmatprep.mubr.bf16.mxu0 0
      %1380 = vmatmul.mubr.bf16.gmra.mrb[0].mxu0 %v1336
      %v1381 = vpop.f32.mrb[0].mxu0
      %v1382 = vadd.f32 0.0, %v1381
      %v1383 = vpop.f32.mrb[0].mxu0
      %v1384 = vadd.f32 0.0, %v1383
      %v1385 = vpop.f32.mrb[0].mxu0
      %v1386 = vpop.f32.mrb[0].mxu0
      %1387 = vdwg.mxu0
      %1388 = vmatprep.subr.bf16.mxu0 0
      %1389 = vmatpush1.bf16.msra.mxu0 %v1345
      %1390 = vmatprep.subr.bf16.mxu0 0
      %1391 = vmatpush1.bf16.msra.mxu0 0
      %1392 = vmatprep.subr.bf16.mxu0 0
      %1393 = vmatpush1.bf16.msra.mxu0 0
      %1394 = vmatprep.subr.bf16.mxu0 0
      %1395 = vmatpush1.bf16.msra.mxu0 0
      %1396 = vmatprep.subr.bf16.mxu0 0
      %1397 = vmatpush1.bf16.msra.mxu0 0
      %1398 = vmatprep.subr.bf16.mxu0 0
      %1399 = vmatpush1.bf16.msra.mxu0 0
      %1400 = vmatprep.subr.bf16.mxu0 0
      %1401 = vmatpush1.bf16.msra.mxu0 0
      %1402 = vmatprep.subr.bf16.mxu0 0
      %1403 = vmatpush1.bf16.msra.mxu0 0
      %1404 = vmatprep.subr.bf16.mxu0 0
      %1405 = vmatpush1.bf16.msra.mxu0 0
      %1406 = vmatprep.subr.bf16.mxu0 0
      %1407 = vmatpush1.bf16.msra.mxu0 0
      %1408 = vmatprep.subr.bf16.mxu0 0
      %1409 = vmatpush1.bf16.msra.mxu0 0
      %1410 = vmatprep.subr.bf16.mxu0 0
      %1411 = vmatpush1.bf16.msra.mxu0 0
      %1412 = vmatprep.subr.bf16.mxu0 0
      %1413 = vmatpush1.bf16.msra.mxu0 0
      %1414 = vmatprep.subr.bf16.mxu0 0
      %1415 = vmatpush1.bf16.msra.mxu0 0
      %1416 = vmatprep.subr.bf16.mxu0 0
      %1417 = vmatpush1.bf16.msra.mxu0 0
      %1418 = vmatprep.subr.bf16.mxu0 0
      %1419 = vmatpush1.bf16.msra.mxu0 0
      %1420 = vmatprep.mubr.bf16.mxu0 0
      %1421 = vmatmul.mubr.bf16.gmra.mrb[0].mxu0 %v1336
      %v1422 = vpop.f32.mrb[0].mxu0
      %v1423 = vadd.f32 0.0, %v1422
      %v1424 = vpop.f32.mrb[0].mxu0
      %v1425 = vpop.f32.mrb[0].mxu0
      %v1426 = vpop.f32.mrb[0].mxu0
      %1427 = vdwg.mxu0
      %v1430 = vcombine.low %v1382, %v1384
      %v1432 = vadd.f32 %v1304, %v1430
      %v1433 = vadd.f32 %v1305, %v1423
      %1434 = vst [vmem:[#allocation2] sm:$0xff] %v1432
      %1435 = vst.msk [vmem:[#allocation2 + $0x8] sm:$0xf] %vm254, %v1433
      %v1436 = vld [vmem:[#allocation2] sm:$0xff]
      %v1437 = vld [vmem:[#allocation2 + $0x8] sm:$0xf]
      %v1438 = vld [vmem:[%s2] sm:$0xf]
      %1440 = vset.pattern.permute.xlu0 0
      %1441 = vperm.xlu0 %1440, %v1438
      %v1442 = vpop.permute.xlu0 %1441
      %v1444 = vunpack.c.l.s4 839922192
      %v1445 = vunpack.c.0.s8 %v1444
      %v1446 = vlaneseq
      %v1447 = vshrl.u32 %v1446, 7
      %v1448 = vsub.s32 %v1445, %v1447
      %v1449 = vrot.slane %v1442, %v1448
      %v1451 = vadd.f32 %v1436, %v1449
      %v1452 = vadd.f32 %v1437, %v1449
      %v1453 = vmax.f32 %v1451, 0.0
      %v1454 = vmax.f32 %v1452, 0.0
      %v1455 = vld [vmem:[%s5] sm:$0x7]
      %v1457 = vlaneseq
      %v1458 = vshrl.u32 %v1457, 7
      %v1459 = vsub.s32 0, %v1458
      %v1460 = vrot.slane %v1455, %v1459
      %v1461 = vlaneseq
      %v1462 = vshrl.u32 %v1461, 7
      %v1463 = vsub.s32 1, %v1462
      %v1464 = vrot.slane %v1455, %v1463
      %v1465 = vlaneseq
      %v1466 = vshrl.u32 %v1465, 7
      %v1467 = vsub.s32 2, %v1466
      %v1468 = vrot.slane %v1455, %v1467
      %v1470 = vcombine.low %v1460, %v1464
      %v1472 = vmul.f32 %v1453, %v1470
      %v1473 = vmul.f32 %v1454, %v1468
      %1474 = vst [vmem:[#allocation3] sm:$0x3f] 0
      %v1476 = vcombine.high %v1472, %v1472
      %v1478 = vpack.c.bf16 %v1472, %v1472
      %v1479 = vpack.c.bf16 %v1476, %v1476
      %v1480 = vpack.c.bf16 %v1473, %v1473
      %v1484 = vcombine.low %v1478, %v1479
      %v1486 = vunpack.c.l.s4 1983009808
      %v1487 = vunpack.c.0.s8 %v1486
      %v1488 = vlaneseq
      %v1489 = vshrl.u32 %v1488, 7
      %v1490 = vsub.s32 %v1487, %v1489
      %v1491 = vrot.slane %v1484, %v1490
      %v1493 = vunpack.c.l.s4 1983009808
      %v1494 = vunpack.c.0.s8 %v1493
      %v1495 = vlaneseq
      %v1496 = vshrl.u32 %v1495, 7
      %v1497 = vsub.s32 %v1494, %v1496
      %v1498 = vrot.slane %v1480, %v1497
      %v1499 = vcombine.low %v1491, %v1498
      %1500 = vrot.lane.b32.xlu0 %v1499, 19
      %v1501 = vpop.permute.xlu0 %1500
      %v1502 = vrot.slane %v1501, 6
      %vm1503 = vcmask 154624
      %v1504 = vsel %vm1503, %v1502, %v1501
      %vm1506 = vcmask 1041560
      %vm1507 = vcmask 1043458
      %vm1508 = vmor %vm1507, %vm1506
      %vm1509 = vcmask 414724
      %vm1510 = vmor %vm1509, %vm1508
      %1511 = vst.msk [vmem:[#allocation3] sm:$0x3f] %vm1510, %v1504
      %1512 = vst [vmem:[#allocation2] sm:$0xff] 0.0
      %1513 = vst.msk [vmem:[#allocation2 + $0x8] sm:$0xf] %vm254, 0.0
      %v1514 = vld [vmem:[#allocation2] sm:$0xff]
      %v1515 = vld [vmem:[#allocation2 + $0x8] sm:$0xf]
      %v1516 = vld [vmem:[%s3] sm:$0x3]
      %v1517 = vld [vmem:[#allocation3] sm:$0x3f]
      %v1519 = vcombine.high %v1517, %v1517
      %v1521 = vunpack.c.l.s4 1983009808
      %v1522 = vunpack.c.0.s8 %v1521
      %v1523 = vlaneseq
      %v1524 = vshrl.u32 %v1523, 7
      %v1525 = vsub.s32 %v1522, %v1524
      %v1526 = vrot.slane %v1517, %v1525
      %v1528 = vunpack.c.l.s4 1983009808
      %v1529 = vunpack.c.0.s8 %v1528
      %v1530 = vlaneseq
      %v1531 = vshrl.u32 %v1530, 7
      %v1532 = vsub.s32 %v1529, %v1531
      %v1533 = vrot.slane %v1519, %v1532
      %v1534 = vcombine.high %v1526, %v1526
      %v1536 = vsel %vm277, %v1516, 0
      %v1539 = vsel %vm281, %v1526, 0
      %v1542 = vsel %vm281, %v1534, 0
      %v1545 = vsel %vm281, %v1533, 0
      %1547 = vmatprep.subr.bf16.mxu0 %v1542
      %1548 = vmatpush1.bf16.msra.mxu0 %v1539
      %1549 = vmatprep.subr.bf16.mxu0 0
      %1550 = vmatpush1.bf16.msra.mxu0 0
      %1551 = vmatprep.subr.bf16.mxu0 0
      %1552 = vmatpush1.bf16.msra.mxu0 0
      %1553 = vmatprep.subr.bf16.mxu0 0
      %1554 = vmatpush1.bf16.msra.mxu0 0
      %1555 = vmatprep.subr.bf16.mxu0 0
      %1556 = vmatpush1.bf16.msra.mxu0 0
      %1557 = vmatprep.subr.bf16.mxu0 0
      %1558 = vmatpush1.bf16.msra.mxu0 0
      %1559 = vmatprep.subr.bf16.mxu0 0
      %1560 = vmatpush1.bf16.msra.mxu0 0
      %1561 = vmatprep.subr.bf16.mxu0 0
      %1562 = vmatpush1.bf16.msra.mxu0 0
      %1563 = vmatprep.subr.bf16.mxu0 0
      %1564 = vmatpush1.bf16.msra.mxu0 0
      %1565 = vmatprep.subr.bf16.mxu0 0
      %1566 = vmatpush1.bf16.msra.mxu0 0
      %1567 = vmatprep.subr.bf16.mxu0 0
      %1568 = vmatpush1.bf16.msra.mxu0 0
      %1569 = vmatprep.subr.bf16.mxu0 0
      %1570 = vmatpush1.bf16.msra.mxu0 0
      %1571 = vmatprep.subr.bf16.mxu0 0
      %1572 = vmatpush1.bf16.msra.mxu0 0
      %1573 = vmatprep.subr.bf16.mxu0 0
      %1574 = vmatpush1.bf16.msra.mxu0 0
      %1575 = vmatprep.subr.bf16.mxu0 0
      %1576 = vmatpush1.bf16.msra.mxu0 0
      %1577 = vmatprep.subr.bf16.mxu0 0
      %1578 = vmatpush1.bf16.msra.mxu0 0
      %1579 = vmatprep.mubr.bf16.mxu0 0
      %1580 = vmatmul.mubr.bf16.gmra.mrb[0].mxu0 %v1536
      %v1581 = vpop.f32.mrb[0].mxu0
      %v1582 = vadd.f32 0.0, %v1581
      %v1583 = vpop.f32.mrb[0].mxu0
      %v1584 = vadd.f32 0.0, %v1583
      %v1585 = vpop.f32.mrb[0].mxu0
      %v1586 = vpop.f32.mrb[0].mxu0
      %1587 = vdwg.mxu0
      %1588 = vmatprep.subr.bf16.mxu0 0
      %1589 = vmatpush1.bf16.msra.mxu0 %v1545
      %1590 = vmatprep.subr.bf16.mxu0 0
      %1591 = vmatpush1.bf16.msra.mxu0 0
      %1592 = vmatprep.subr.bf16.mxu0 0
      %1593 = vmatpush1.bf16.msra.mxu0 0
      %1594 = vmatprep.subr.bf16.mxu0 0
      %1595 = vmatpush1.bf16.msra.mxu0 0
      %1596 = vmatprep.subr.bf16.mxu0 0
      %1597 = vmatpush1.bf16.msra.mxu0 0
      %1598 = vmatprep.subr.bf16.mxu0 0
      %1599 = vmatpush1.bf16.msra.mxu0 0
      %1600 = vmatprep.subr.bf16.mxu0 0
      %1601 = vmatpush1.bf16.msra.mxu0 0
      %1602 = vmatprep.subr.bf16.mxu0 0
      %1603 = vmatpush1.bf16.msra.mxu0 0
      %1604 = vmatprep.subr.bf16.mxu0 0
      %1605 = vmatpush1.bf16.msra.mxu0 0
      %1606 = vmatprep.subr.bf16.mxu0 0
      %1607 = vmatpush1.bf16.msra.mxu0 0
      %1608 = vmatprep.subr.bf16.mxu0 0
      %1609 = vmatpush1.bf16.msra.mxu0 0
      %1610 = vmatprep.subr.bf16.mxu0 0
      %1611 = vmatpush1.bf16.msra.mxu0 0
      %1612 = vmatprep.subr.bf16.mxu0 0
      %1613 = vmatpush1.bf16.msra.mxu0 0
      %1614 = vmatprep.subr.bf16.mxu0 0
      %1615 = vmatpush1.bf16.msra.mxu0 0
      %1616 = vmatprep.subr.bf16.mxu0 0
      %1617 = vmatpush1.bf16.msra.mxu0 0
      %1618 = vmatprep.subr.bf16.mxu0 0
      %1619 = vmatpush1.bf16.msra.mxu0 0
      %1620 = vmatprep.mubr.bf16.mxu0 0
      %1621 = vmatmul.mubr.bf16.gmra.mrb[0].mxu0 %v1536
      %v1622 = vpop.f32.mrb[0].mxu0
      %v1623 = vadd.f32 0.0, %v1622
      %v1624 = vpop.f32.mrb[0].mxu0
      %v1625 = vpop.f32.mrb[0].mxu0
      %v1626 = vpop.f32.mrb[0].mxu0
      %1627 = vdwg.mxu0
      %v1630 = vcombine.low %v1582, %v1584
      %v1632 = vadd.f32 %v1514, %v1630
      %v1633 = vadd.f32 %v1515, %v1623
      %1634 = vst [vmem:[#allocation2] sm:$0xff] %v1632
      %1635 = vst.msk [vmem:[#allocation2 + $0x8] sm:$0xf] %vm254, %v1633
      %v1636 = vld [vmem:[#allocation2] sm:$0xff]
      %v1637 = vld [vmem:[#allocation2 + $0x8] sm:$0xf]
      %s1638 = scalar_lea.vmem %s3, 2
      %v1639 = vld [vmem:[%s1638] sm:$0x3]
      %v1640 = vld [vmem:[#allocation3] sm:$0x3f]
      %v1642 = vcombine.high %v1640, %v1640
      %v1644 = vunpack.c.l.s4 1983009808
      %v1645 = vunpack.c.0.s8 %v1644
      %v1646 = vlaneseq
      %v1647 = vshrl.u32 %v1646, 7
      %v1648 = vsub.s32 %v1645, %v1647
      %v1649 = vrot.slane %v1640, %v1648
      %v1651 = vunpack.c.l.s4 1983009808
      %v1652 = vunpack.c.0.s8 %v1651
      %v1653 = vlaneseq
      %v1654 = vshrl.u32 %v1653, 7
      %v1655 = vsub.s32 %v1652, %v1654
      %v1656 = vrot.slane %v1642, %v1655
      %v1657 = vcombine.high %v1649, %v1649
      %1658 = vrot.lane.b32.xlu0 %v1649, 127
      %v1659 = vpop.permute.xlu0 %1658
      %1660 = vrot.lane.b32.xlu0 %v1657, 127
      %v1661 = vpop.permute.xlu0 %1660
      %1662 = vrot.lane.b32.xlu0 %v1656, 127
      %v1663 = vpop.permute.xlu0 %1662
      %v1664 = vsel %vm408, %v1659, %v1661
      %v1665 = vsel %vm408, %v1661, %v1663
      %v1667 = vsel %vm277, %v1639, 0
      %v1670 = vsel %vm281, %v1664, 0
      %v1673 = vsel %vm281, %v1665, 0
      %v1676 = vsel %vm281, %v1663, 0
      %1678 = vmatprep.subr.bf16.mxu0 %v1673
      %1679 = vmatpush1.bf16.msra.mxu0 %v1670
      %1680 = vmatprep.subr.bf16.mxu0 0
      %1681 = vmatpush1.bf16.msra.mxu0 0
      %1682 = vmatprep.subr.bf16.mxu0 0
      %1683 = vmatpush1.bf16.msra.mxu0 0
      %1684 = vmatprep.subr.bf16.mxu0 0
      %1685 = vmatpush1.bf16.msra.mxu0 0
      %1686 = vmatprep.subr.bf16.mxu0 0
      %1687 = vmatpush1.bf16.msra.mxu0 0
      %1688 = vmatprep.subr.bf16.mxu0 0
      %1689 = vmatpush1.bf16.msra.mxu0 0
      %1690 = vmatprep.subr.bf16.mxu0 0
      %1691 = vmatpush1.bf16.msra.mxu0 0
      %1692 = vmatprep.subr.bf16.mxu0 0
      %1693 = vmatpush1.bf16.msra.mxu0 0
      %1694 = vmatprep.subr.bf16.mxu0 0
      %1695 = vmatpush1.bf16.msra.mxu0 0
      %1696 = vmatprep.subr.bf16.mxu0 0
      %1697 = vmatpush1.bf16.msra.mxu0 0
      %1698 = vmatprep.subr.bf16.mxu0 0
      %1699 = vmatpush1.bf16.msra.mxu0 0
      %1700 = vmatprep.subr.bf16.mxu0 0
      %1701 = vmatpush1.bf16.msra.mxu0 0
      %1702 = vmatprep.subr.bf16.mxu0 0
      %1703 = vmatpush1.bf16.msra.mxu0 0
      %1704 = vmatprep.subr.bf16.mxu0 0
      %1705 = vmatpush1.bf16.msra.mxu0 0
      %1706 = vmatprep.subr.bf16.mxu0 0
      %1707 = vmatpush1.bf16.msra.mxu0 0
      %1708 = vmatprep.subr.bf16.mxu0 0
      %1709 = vmatpush1.bf16.msra.mxu0 0
      %1710 = vmatprep.mubr.bf16.mxu0 0
      %1711 = vmatmul.mubr.bf16.gmra.mrb[0].mxu0 %v1667
      %v1712 = vpop.f32.mrb[0].mxu0
      %v1713 = vadd.f32 0.0, %v1712
      %v1714 = vpop.f32.mrb[0].mxu0
      %v1715 = vadd.f32 0.0, %v1714
      %v1716 = vpop.f32.mrb[0].mxu0
      %v1717 = vpop.f32.mrb[0].mxu0
      %1718 = vdwg.mxu0
      %1719 = vmatprep.subr.bf16.mxu0 0
      %1720 = vmatpush1.bf16.msra.mxu0 %v1676
      %1721 = vmatprep.subr.bf16.mxu0 0
      %1722 = vmatpush1.bf16.msra.mxu0 0
      %1723 = vmatprep.subr.bf16.mxu0 0
      %1724 = vmatpush1.bf16.msra.mxu0 0
      %1725 = vmatprep.subr.bf16.mxu0 0
      %1726 = vmatpush1.bf16.msra.mxu0 0
      %1727 = vmatprep.subr.bf16.mxu0 0
      %1728 = vmatpush1.bf16.msra.mxu0 0
      %1729 = vmatprep.subr.bf16.mxu0 0
      %1730 = vmatpush1.bf16.msra.mxu0 0
      %1731 = vmatprep.subr.bf16.mxu0 0
      %1732 = vmatpush1.bf16.msra.mxu0 0
      %1733 = vmatprep.subr.bf16.mxu0 0
      %1734 = vmatpush1.bf16.msra.mxu0 0
      %1735 = vmatprep.subr.bf16.mxu0 0
      %1736 = vmatpush1.bf16.msra.mxu0 0
      %1737 = vmatprep.subr.bf16.mxu0 0
      %1738 = vmatpush1.bf16.msra.mxu0 0
      %1739 = vmatprep.subr.bf16.mxu0 0
      %1740 = vmatpush1.bf16.msra.mxu0 0
      %1741 = vmatprep.subr.bf16.mxu0 0
      %1742 = vmatpush1.bf16.msra.mxu0 0
      %1743 = vmatprep.subr.bf16.mxu0 0
      %1744 = vmatpush1.bf16.msra.mxu0 0
      %1745 = vmatprep.subr.bf16.mxu0 0
      %1746 = vmatpush1.bf16.msra.mxu0 0
      %1747 = vmatprep.subr.bf16.mxu0 0
      %1748 = vmatpush1.bf16.msra.mxu0 0
      %1749 = vmatprep.subr.bf16.mxu0 0
      %1750 = vmatpush1.bf16.msra.mxu0 0
      %1751 = vmatprep.mubr.bf16.mxu0 0
      %1752 = vmatmul.mubr.bf16.gmra.mrb[0].mxu0 %v1667
      %v1753 = vpop.f32.mrb[0].mxu0
      %v1754 = vadd.f32 0.0, %v1753
      %v1755 = vpop.f32.mrb[0].mxu0
      %v1756 = vpop.f32.mrb[0].mxu0
      %v1757 = vpop.f32.mrb[0].mxu0
      %1758 = vdwg.mxu0
      %v1761 = vcombine.low %v1713, %v1715
      %v1763 = vadd.f32 %v1636, %v1761
      %v1764 = vadd.f32 %v1637, %v1754
      %1765 = vst [vmem:[#allocation2] sm:$0xff] %v1763
      %1766 = vst.msk [vmem:[#allocation2 + $0x8] sm:$0xf] %vm254, %v1764
      %v1767 = vld [vmem:[#allocation2] sm:$0xff]
      %v1768 = vld [vmem:[#allocation2 + $0x8] sm:$0xf]
      %s1769 = scalar_lea.vmem %s3, 4
      %v1770 = vld [vmem:[%s1769] sm:$0x3]
      %v1771 = vld [vmem:[#allocation3] sm:$0x3f]
      %v1773 = vcombine.high %v1771, %v1771
      %v1775 = vunpack.c.l.s4 1983009808
      %v1776 = vunpack.c.0.s8 %v1775
      %v1777 = vlaneseq
      %v1778 = vshrl.u32 %v1777, 7
      %v1779 = vsub.s32 %v1776, %v1778
      %v1780 = vrot.slane %v1771, %v1779
      %v1782 = vunpack.c.l.s4 1983009808
      %v1783 = vunpack.c.0.s8 %v1782
      %v1784 = vlaneseq
      %v1785 = vshrl.u32 %v1784, 7
      %v1786 = vsub.s32 %v1783, %v1785
      %v1787 = vrot.slane %v1773, %v1786
      %v1788 = vcombine.high %v1780, %v1780
      %1789 = vrot.lane.b32.xlu0 %v1780, 126
      %v1790 = vpop.permute.xlu0 %1789
      %1791 = vrot.lane.b32.xlu0 %v1788, 126
      %v1792 = vpop.permute.xlu0 %1791
      %1793 = vrot.lane.b32.xlu0 %v1787, 126
      %v1794 = vpop.permute.xlu0 %1793
      %v1795 = vsel %vm540, %v1790, %v1792
      %v1796 = vsel %vm540, %v1792, %v1794
      %v1798 = vsel %vm277, %v1770, 0
      %v1801 = vsel %vm281, %v1795, 0
      %v1804 = vsel %vm281, %v1796, 0
      %v1807 = vsel %vm281, %v1794, 0
      %1809 = vmatprep.subr.bf16.mxu0 %v1804
      %1810 = vmatpush1.bf16.msra.mxu0 %v1801
      %1811 = vmatprep.subr.bf16.mxu0 0
      %1812 = vmatpush1.bf16.msra.mxu0 0
      %1813 = vmatprep.subr.bf16.mxu0 0
      %1814 = vmatpush1.bf16.msra.mxu0 0
      %1815 = vmatprep.subr.bf16.mxu0 0
      %1816 = vmatpush1.bf16.msra.mxu0 0
      %1817 = vmatprep.subr.bf16.mxu0 0
      %1818 = vmatpush1.bf16.msra.mxu0 0
      %1819 = vmatprep.subr.bf16.mxu0 0
      %1820 = vmatpush1.bf16.msra.mxu0 0
      %1821 = vmatprep.subr.bf16.mxu0 0
      %1822 = vmatpush1.bf16.msra.mxu0 0
      %1823 = vmatprep.subr.bf16.mxu0 0
      %1824 = vmatpush1.bf16.msra.mxu0 0
      %1825 = vmatprep.subr.bf16.mxu0 0
      %1826 = vmatpush1.bf16.msra.mxu0 0
      %1827 = vmatprep.subr.bf16.mxu0 0
      %1828 = vmatpush1.bf16.msra.mxu0 0
      %1829 = vmatprep.subr.bf16.mxu0 0
      %1830 = vmatpush1.bf16.msra.mxu0 0
      %1831 = vmatprep.subr.bf16.mxu0 0
      %1832 = vmatpush1.bf16.msra.mxu0 0
      %1833 = vmatprep.subr.bf16.mxu0 0
      %1834 = vmatpush1.bf16.msra.mxu0 0
      %1835 = vmatprep.subr.bf16.mxu0 0
      %1836 = vmatpush1.bf16.msra.mxu0 0
      %1837 = vmatprep.subr.bf16.mxu0 0
      %1838 = vmatpush1.bf16.msra.mxu0 0
      %1839 = vmatprep.subr.bf16.mxu0 0
      %1840 = vmatpush1.bf16.msra.mxu0 0
      %1841 = vmatprep.mubr.bf16.mxu0 0
      %1842 = vmatmul.mubr.bf16.gmra.mrb[0].mxu0 %v1798
      %v1843 = vpop.f32.mrb[0].mxu0
      %v1844 = vadd.f32 0.0, %v1843
      %v1845 = vpop.f32.mrb[0].mxu0
      %v1846 = vadd.f32 0.0, %v1845
      %v1847 = vpop.f32.mrb[0].mxu0
      %v1848 = vpop.f32.mrb[0].mxu0
      %1849 = vdwg.mxu0
      %1850 = vmatprep.subr.bf16.mxu0 0
      %1851 = vmatpush1.bf16.msra.mxu0 %v1807
      %1852 = vmatprep.subr.bf16.mxu0 0
      %1853 = vmatpush1.bf16.msra.mxu0 0
      %1854 = vmatprep.subr.bf16.mxu0 0
      %1855 = vmatpush1.bf16.msra.mxu0 0
      %1856 = vmatprep.subr.bf16.mxu0 0
      %1857 = vmatpush1.bf16.msra.mxu0 0
      %1858 = vmatprep.subr.bf16.mxu0 0
      %1859 = vmatpush1.bf16.msra.mxu0 0
      %1860 = vmatprep.subr.bf16.mxu0 0
      %1861 = vmatpush1.bf16.msra.mxu0 0
      %1862 = vmatprep.subr.bf16.mxu0 0
      %1863 = vmatpush1.bf16.msra.mxu0 0
      %1864 = vmatprep.subr.bf16.mxu0 0
      %1865 = vmatpush1.bf16.msra.mxu0 0
      %1866 = vmatprep.subr.bf16.mxu0 0
      %1867 = vmatpush1.bf16.msra.mxu0 0
      %1868 = vmatprep.subr.bf16.mxu0 0
      %1869 = vmatpush1.bf16.msra.mxu0 0
      %1870 = vmatprep.subr.bf16.mxu0 0
      %1871 = vmatpush1.bf16.msra.mxu0 0
      %1872 = vmatprep.subr.bf16.mxu0 0
      %1873 = vmatpush1.bf16.msra.mxu0 0
      %1874 = vmatprep.subr.bf16.mxu0 0
      %1875 = vmatpush1.bf16.msra.mxu0 0
      %1876 = vmatprep.subr.bf16.mxu0 0
      %1877 = vmatpush1.bf16.msra.mxu0 0
      %1878 = vmatprep.subr.bf16.mxu0 0
      %1879 = vmatpush1.bf16.msra.mxu0 0
      %1880 = vmatprep.subr.bf16.mxu0 0
      %1881 = vmatpush1.bf16.msra.mxu0 0
      %1882 = vmatprep.mubr.bf16.mxu0 0
      %1883 = vmatmul.mubr.bf16.gmra.mrb[0].mxu0 %v1798
      %v1884 = vpop.f32.mrb[0].mxu0
      %v1885 = vadd.f32 0.0, %v1884
      %v1886 = vpop.f32.mrb[0].mxu0
      %v1887 = vpop.f32.mrb[0].mxu0
      %v1888 = vpop.f32.mrb[0].mxu0
      %1889 = vdwg.mxu0
      %v1892 = vcombine.low %v1844, %v1846
      %v1894 = vadd.f32 %v1767, %v1892
      %v1895 = vadd.f32 %v1768, %v1885
      %1896 = vst [vmem:[#allocation2] sm:$0xff] %v1894
      %1897 = vst.msk [vmem:[#allocation2 + $0x8] sm:$0xf] %vm254, %v1895
      %v1898 = vld [vmem:[#allocation2] sm:$0xff]
      %v1899 = vld [vmem:[#allocation2 + $0x8] sm:$0xf]
      %s1900 = scalar_lea.vmem %s3, 6
      %v1901 = vld [vmem:[%s1900] sm:$0x3]
      %v1902 = vld [vmem:[#allocation3] sm:$0x3f]
      %v1904 = vcombine.high %v1902, %v1902
      %v1906 = vunpack.c.l.s4 1983009808
      %v1907 = vunpack.c.0.s8 %v1906
      %v1908 = vlaneseq
      %v1909 = vshrl.u32 %v1908, 7
      %v1910 = vsub.s32 %v1907, %v1909
      %v1911 = vrot.slane %v1902, %v1910
      %v1913 = vunpack.c.l.s4 1983009808
      %v1914 = vunpack.c.0.s8 %v1913
      %v1915 = vlaneseq
      %v1916 = vshrl.u32 %v1915, 7
      %v1917 = vsub.s32 %v1914, %v1916
      %v1918 = vrot.slane %v1904, %v1917
      %v1919 = vcombine.high %v1911, %v1911
      %1920 = vrot.lane.b32.xlu0 %v1911, 110
      %v1921 = vpop.permute.xlu0 %1920
      %1922 = vrot.lane.b32.xlu0 %v1919, 110
      %v1923 = vpop.permute.xlu0 %1922
      %1924 = vrot.lane.b32.xlu0 %v1918, 110
      %v1925 = vpop.permute.xlu0 %1924
      %v1926 = vsel %vm672, %v1921, %v1923
      %v1927 = vsel %vm672, %v1923, %v1925
      %v1929 = vsel %vm277, %v1901, 0
      %v1932 = vsel %vm281, %v1926, 0
      %v1935 = vsel %vm281, %v1927, 0
      %v1938 = vsel %vm281, %v1925, 0
      %1940 = vmatprep.subr.bf16.mxu0 %v1935
      %1941 = vmatpush1.bf16.msra.mxu0 %v1932
      %1942 = vmatprep.subr.bf16.mxu0 0
      %1943 = vmatpush1.bf16.msra.mxu0 0
      %1944 = vmatprep.subr.bf16.mxu0 0
      %1945 = vmatpush1.bf16.msra.mxu0 0
      %1946 = vmatprep.subr.bf16.mxu0 0
      %1947 = vmatpush1.bf16.msra.mxu0 0
      %1948 = vmatprep.subr.bf16.mxu0 0
      %1949 = vmatpush1.bf16.msra.mxu0 0
      %1950 = vmatprep.subr.bf16.mxu0 0
      %1951 = vmatpush1.bf16.msra.mxu0 0
      %1952 = vmatprep.subr.bf16.mxu0 0
      %1953 = vmatpush1.bf16.msra.mxu0 0
      %1954 = vmatprep.subr.bf16.mxu0 0
      %1955 = vmatpush1.bf16.msra.mxu0 0
      %1956 = vmatprep.subr.bf16.mxu0 0
      %1957 = vmatpush1.bf16.msra.mxu0 0
      %1958 = vmatprep.subr.bf16.mxu0 0
      %1959 = vmatpush1.bf16.msra.mxu0 0
      %1960 = vmatprep.subr.bf16.mxu0 0
      %1961 = vmatpush1.bf16.msra.mxu0 0
      %1962 = vmatprep.subr.bf16.mxu0 0
      %1963 = vmatpush1.bf16.msra.mxu0 0
      %1964 = vmatprep.subr.bf16.mxu0 0
      %1965 = vmatpush1.bf16.msra.mxu0 0
      %1966 = vmatprep.subr.bf16.mxu0 0
      %1967 = vmatpush1.bf16.msra.mxu0 0
      %1968 = vmatprep.subr.bf16.mxu0 0
      %1969 = vmatpush1.bf16.msra.mxu0 0
      %1970 = vmatprep.subr.bf16.mxu0 0
      %1971 = vmatpush1.bf16.msra.mxu0 0
      %1972 = vmatprep.mubr.bf16.mxu0 0
      %1973 = vmatmul.mubr.bf16.gmra.mrb[0].mxu0 %v1929
      %v1974 = vpop.f32.mrb[0].mxu0
      %v1975 = vadd.f32 0.0, %v1974
      %v1976 = vpop.f32.mrb[0].mxu0
      %v1977 = vadd.f32 0.0, %v1976
      %v1978 = vpop.f32.mrb[0].mxu0
      %v1979 = vpop.f32.mrb[0].mxu0
      %1980 = vdwg.mxu0
      %1981 = vmatprep.subr.bf16.mxu0 0
      %1982 = vmatpush1.bf16.msra.mxu0 %v1938
      %1983 = vmatprep.subr.bf16.mxu0 0
      %1984 = vmatpush1.bf16.msra.mxu0 0
      %1985 = vmatprep.subr.bf16.mxu0 0
      %1986 = vmatpush1.bf16.msra.mxu0 0
      %1987 = vmatprep.subr.bf16.mxu0 0
      %1988 = vmatpush1.bf16.msra.mxu0 0
      %1989 = vmatprep.subr.bf16.mxu0 0
      %1990 = vmatpush1.bf16.msra.mxu0 0
      %1991 = vmatprep.subr.bf16.mxu0 0
      %1992 = vmatpush1.bf16.msra.mxu0 0
      %1993 = vmatprep.subr.bf16.mxu0 0
      %1994 = vmatpush1.bf16.msra.mxu0 0
      %1995 = vmatprep.subr.bf16.mxu0 0
      %1996 = vmatpush1.bf16.msra.mxu0 0
      %1997 = vmatprep.subr.bf16.mxu0 0
      %1998 = vmatpush1.bf16.msra.mxu0 0
      %1999 = vmatprep.subr.bf16.mxu0 0
      %2000 = vmatpush1.bf16.msra.mxu0 0
      %2001 = vmatprep.subr.bf16.mxu0 0
      %2002 = vmatpush1.bf16.msra.mxu0 0
      %2003 = vmatprep.subr.bf16.mxu0 0
      %2004 = vmatpush1.bf16.msra.mxu0 0
      %2005 = vmatprep.subr.bf16.mxu0 0
      %2006 = vmatpush1.bf16.msra.mxu0 0
      %2007 = vmatprep.subr.bf16.mxu0 0
      %2008 = vmatpush1.bf16.msra.mxu0 0
      %2009 = vmatprep.subr.bf16.mxu0 0
      %2010 = vmatpush1.bf16.msra.mxu0 0
      %2011 = vmatprep.subr.bf16.mxu0 0
      %2012 = vmatpush1.bf16.msra.mxu0 0
      %2013 = vmatprep.mubr.bf16.mxu0 0
      %2014 = vmatmul.mubr.bf16.gmra.mrb[0].mxu0 %v1929
      %v2015 = vpop.f32.mrb[0].mxu0
      %v2016 = vadd.f32 0.0, %v2015
      %v2017 = vpop.f32.mrb[0].mxu0
      %v2018 = vpop.f32.mrb[0].mxu0
      %v2019 = vpop.f32.mrb[0].mxu0
      %2020 = vdwg.mxu0
      %v2023 = vcombine.low %v1975, %v1977
      %v2025 = vadd.f32 %v1898, %v2023
      %v2026 = vadd.f32 %v1899, %v2016
      %2027 = vst [vmem:[#allocation2] sm:$0xff] %v2025
      %2028 = vst.msk [vmem:[#allocation2 + $0x8] sm:$0xf] %vm254, %v2026
      %v2029 = vld [vmem:[#allocation2] sm:$0xff]
      %v2030 = vld [vmem:[#allocation2 + $0x8] sm:$0xf]
      %s2031 = scalar_lea.vmem %s3, 8
      %v2032 = vld [vmem:[%s2031] sm:$0x3]
      %v2033 = vld [vmem:[#allocation3] sm:$0x3f]
      %v2035 = vcombine.high %v2033, %v2033
      %v2037 = vunpack.c.l.s4 1983009808
      %v2038 = vunpack.c.0.s8 %v2037
      %v2039 = vlaneseq
      %v2040 = vshrl.u32 %v2039, 7
      %v2041 = vsub.s32 %v2038, %v2040
      %v2042 = vrot.slane %v2033, %v2041
      %v2044 = vunpack.c.l.s4 1983009808
      %v2045 = vunpack.c.0.s8 %v2044
      %v2046 = vlaneseq
      %v2047 = vshrl.u32 %v2046, 7
      %v2048 = vsub.s32 %v2045, %v2047
      %v2049 = vrot.slane %v2035, %v2048
      %v2050 = vcombine.high %v2042, %v2042
      %2051 = vrot.lane.b32.xlu0 %v2042, 109
      %v2052 = vpop.permute.xlu0 %2051
      %2053 = vrot.lane.b32.xlu0 %v2050, 109
      %v2054 = vpop.permute.xlu0 %2053
      %2055 = vrot.lane.b32.xlu0 %v2049, 109
      %v2056 = vpop.permute.xlu0 %2055
      %v2057 = vsel %vm804, %v2052, %v2054
      %v2058 = vsel %vm804, %v2054, %v2056
      %v2060 = vsel %vm277, %v2032, 0
      %v2063 = vsel %vm281, %v2057, 0
      %v2066 = vsel %vm281, %v2058, 0
      %v2069 = vsel %vm281, %v2056, 0
      %2071 = vmatprep.subr.bf16.mxu0 %v2066
      %2072 = vmatpush1.bf16.msra.mxu0 %v2063
      %2073 = vmatprep.subr.bf16.mxu0 0
      %2074 = vmatpush1.bf16.msra.mxu0 0
      %2075 = vmatprep.subr.bf16.mxu0 0
      %2076 = vmatpush1.bf16.msra.mxu0 0
      %2077 = vmatprep.subr.bf16.mxu0 0
      %2078 = vmatpush1.bf16.msra.mxu0 0
      %2079 = vmatprep.subr.bf16.mxu0 0
      %2080 = vmatpush1.bf16.msra.mxu0 0
      %2081 = vmatprep.subr.bf16.mxu0 0
      %2082 = vmatpush1.bf16.msra.mxu0 0
      %2083 = vmatprep.subr.bf16.mxu0 0
      %2084 = vmatpush1.bf16.msra.mxu0 0
      %2085 = vmatprep.subr.bf16.mxu0 0
      %2086 = vmatpush1.bf16.msra.mxu0 0
      %2087 = vmatprep.subr.bf16.mxu0 0
      %2088 = vmatpush1.bf16.msra.mxu0 0
      %2089 = vmatprep.subr.bf16.mxu0 0
      %2090 = vmatpush1.bf16.msra.mxu0 0
      %2091 = vmatprep.subr.bf16.mxu0 0
      %2092 = vmatpush1.bf16.msra.mxu0 0
      %2093 = vmatprep.subr.bf16.mxu0 0
      %2094 = vmatpush1.bf16.msra.mxu0 0
      %2095 = vmatprep.subr.bf16.mxu0 0
      %2096 = vmatpush1.bf16.msra.mxu0 0
      %2097 = vmatprep.subr.bf16.mxu0 0
      %2098 = vmatpush1.bf16.msra.mxu0 0
      %2099 = vmatprep.subr.bf16.mxu0 0
      %2100 = vmatpush1.bf16.msra.mxu0 0
      %2101 = vmatprep.subr.bf16.mxu0 0
      %2102 = vmatpush1.bf16.msra.mxu0 0
      %2103 = vmatprep.mubr.bf16.mxu0 0
      %2104 = vmatmul.mubr.bf16.gmra.mrb[0].mxu0 %v2060
      %v2105 = vpop.f32.mrb[0].mxu0
      %v2106 = vadd.f32 0.0, %v2105
      %v2107 = vpop.f32.mrb[0].mxu0
      %v2108 = vadd.f32 0.0, %v2107
      %v2109 = vpop.f32.mrb[0].mxu0
      %v2110 = vpop.f32.mrb[0].mxu0
      %2111 = vdwg.mxu0
      %2112 = vmatprep.subr.bf16.mxu0 0
      %2113 = vmatpush1.bf16.msra.mxu0 %v2069
      %2114 = vmatprep.subr.bf16.mxu0 0
      %2115 = vmatpush1.bf16.msra.mxu0 0
      %2116 = vmatprep.subr.bf16.mxu0 0
      %2117 = vmatpush1.bf16.msra.mxu0 0
      %2118 = vmatprep.subr.bf16.mxu0 0
      %2119 = vmatpush1.bf16.msra.mxu0 0
      %2120 = vmatprep.subr.bf16.mxu0 0
      %2121 = vmatpush1.bf16.msra.mxu0 0
      %2122 = vmatprep.subr.bf16.mxu0 0
      %2123 = vmatpush1.bf16.msra.mxu0 0
      %2124 = vmatprep.subr.bf16.mxu0 0
      %2125 = vmatpush1.bf16.msra.mxu0 0
      %2126 = vmatprep.subr.bf16.mxu0 0
      %2127 = vmatpush1.bf16.msra.mxu0 0
      %2128 = vmatprep.subr.bf16.mxu0 0
      %2129 = vmatpush1.bf16.msra.mxu0 0
      %2130 = vmatprep.subr.bf16.mxu0 0
      %2131 = vmatpush1.bf16.msra.mxu0 0
      %2132 = vmatprep.subr.bf16.mxu0 0
      %2133 = vmatpush1.bf16.msra.mxu0 0
      %2134 = vmatprep.subr.bf16.mxu0 0
      %2135 = vmatpush1.bf16.msra.mxu0 0
      %2136 = vmatprep.subr.bf16.mxu0 0
      %2137 = vmatpush1.bf16.msra.mxu0 0
      %2138 = vmatprep.subr.bf16.mxu0 0
      %2139 = vmatpush1.bf16.msra.mxu0 0
      %2140 = vmatprep.subr.bf16.mxu0 0
      %2141 = vmatpush1.bf16.msra.mxu0 0
      %2142 = vmatprep.subr.bf16.mxu0 0
      %2143 = vmatpush1.bf16.msra.mxu0 0
      %2144 = vmatprep.mubr.bf16.mxu0 0
      %2145 = vmatmul.mubr.bf16.gmra.mrb[0].mxu0 %v2060
      %v2146 = vpop.f32.mrb[0].mxu0
      %v2147 = vadd.f32 0.0, %v2146
      %v2148 = vpop.f32.mrb[0].mxu0
      %v2149 = vpop.f32.mrb[0].mxu0
      %v2150 = vpop.f32.mrb[0].mxu0
      %2151 = vdwg.mxu0
      %v2154 = vcombine.low %v2106, %v2108
      %v2156 = vadd.f32 %v2029, %v2154
      %v2157 = vadd.f32 %v2030, %v2147
      %2158 = vst [vmem:[#allocation2] sm:$0xff] %v2156
      %2159 = vst.msk [vmem:[#allocation2 + $0x8] sm:$0xf] %vm254, %v2157
      %v2160 = vld [vmem:[#allocation2] sm:$0xff]
      %v2161 = vld [vmem:[#allocation2 + $0x8] sm:$0xf]
      %s2162 = scalar_lea.vmem %s3, 10
      %v2163 = vld [vmem:[%s2162] sm:$0x3]
      %v2164 = vld [vmem:[#allocation3] sm:$0x3f]
      %v2166 = vcombine.high %v2164, %v2164
      %v2168 = vunpack.c.l.s4 1983009808
      %v2169 = vunpack.c.0.s8 %v2168
      %v2170 = vlaneseq
      %v2171 = vshrl.u32 %v2170, 7
      %v2172 = vsub.s32 %v2169, %v2171
      %v2173 = vrot.slane %v2164, %v2172
      %v2175 = vunpack.c.l.s4 1983009808
      %v2176 = vunpack.c.0.s8 %v2175
      %v2177 = vlaneseq
      %v2178 = vshrl.u32 %v2177, 7
      %v2179 = vsub.s32 %v2176, %v2178
      %v2180 = vrot.slane %v2166, %v2179
      %v2181 = vcombine.high %v2173, %v2173
      %2182 = vrot.lane.b32.xlu0 %v2173, 108
      %v2183 = vpop.permute.xlu0 %2182
      %2184 = vrot.lane.b32.xlu0 %v2181, 108
      %v2185 = vpop.permute.xlu0 %2184
      %2186 = vrot.lane.b32.xlu0 %v2180, 108
      %v2187 = vpop.permute.xlu0 %2186
      %v2188 = vsel %vm936, %v2183, %v2185
      %v2189 = vsel %vm936, %v2185, %v2187
      %v2191 = vsel %vm277, %v2163, 0
      %v2194 = vsel %vm281, %v2188, 0
      %v2197 = vsel %vm281, %v2189, 0
      %v2200 = vsel %vm281, %v2187, 0
      %2202 = vmatprep.subr.bf16.mxu0 %v2197
      %2203 = vmatpush1.bf16.msra.mxu0 %v2194
      %2204 = vmatprep.subr.bf16.mxu0 0
      %2205 = vmatpush1.bf16.msra.mxu0 0
      %2206 = vmatprep.subr.bf16.mxu0 0
      %2207 = vmatpush1.bf16.msra.mxu0 0
      %2208 = vmatprep.subr.bf16.mxu0 0
      %2209 = vmatpush1.bf16.msra.mxu0 0
      %2210 = vmatprep.subr.bf16.mxu0 0
      %2211 = vmatpush1.bf16.msra.mxu0 0
      %2212 = vmatprep.subr.bf16.mxu0 0
      %2213 = vmatpush1.bf16.msra.mxu0 0
      %2214 = vmatprep.subr.bf16.mxu0 0
      %2215 = vmatpush1.bf16.msra.mxu0 0
      %2216 = vmatprep.subr.bf16.mxu0 0
      %2217 = vmatpush1.bf16.msra.mxu0 0
      %2218 = vmatprep.subr.bf16.mxu0 0
      %2219 = vmatpush1.bf16.msra.mxu0 0
      %2220 = vmatprep.subr.bf16.mxu0 0
      %2221 = vmatpush1.bf16.msra.mxu0 0
      %2222 = vmatprep.subr.bf16.mxu0 0
      %2223 = vmatpush1.bf16.msra.mxu0 0
      %2224 = vmatprep.subr.bf16.mxu0 0
      %2225 = vmatpush1.bf16.msra.mxu0 0
      %2226 = vmatprep.subr.bf16.mxu0 0
      %2227 = vmatpush1.bf16.msra.mxu0 0
      %2228 = vmatprep.subr.bf16.mxu0 0
      %2229 = vmatpush1.bf16.msra.mxu0 0
      %2230 = vmatprep.subr.bf16.mxu0 0
      %2231 = vmatpush1.bf16.msra.mxu0 0
      %2232 = vmatprep.subr.bf16.mxu0 0
      %2233 = vmatpush1.bf16.msra.mxu0 0
      %2234 = vmatprep.mubr.bf16.mxu0 0
      %2235 = vmatmul.mubr.bf16.gmra.mrb[0].mxu0 %v2191
      %v2236 = vpop.f32.mrb[0].mxu0
      %v2237 = vadd.f32 0.0, %v2236
      %v2238 = vpop.f32.mrb[0].mxu0
      %v2239 = vadd.f32 0.0, %v2238
      %v2240 = vpop.f32.mrb[0].mxu0
      %v2241 = vpop.f32.mrb[0].mxu0
      %2242 = vdwg.mxu0
      %2243 = vmatprep.subr.bf16.mxu0 0
      %2244 = vmatpush1.bf16.msra.mxu0 %v2200
      %2245 = vmatprep.subr.bf16.mxu0 0
      %2246 = vmatpush1.bf16.msra.mxu0 0
      %2247 = vmatprep.subr.bf16.mxu0 0
      %2248 = vmatpush1.bf16.msra.mxu0 0
      %2249 = vmatprep.subr.bf16.mxu0 0
      %2250 = vmatpush1.bf16.msra.mxu0 0
      %2251 = vmatprep.subr.bf16.mxu0 0
      %2252 = vmatpush1.bf16.msra.mxu0 0
      %2253 = vmatprep.subr.bf16.mxu0 0
      %2254 = vmatpush1.bf16.msra.mxu0 0
      %2255 = vmatprep.subr.bf16.mxu0 0
      %2256 = vmatpush1.bf16.msra.mxu0 0
      %2257 = vmatprep.subr.bf16.mxu0 0
      %2258 = vmatpush1.bf16.msra.mxu0 0
      %2259 = vmatprep.subr.bf16.mxu0 0
      %2260 = vmatpush1.bf16.msra.mxu0 0
      %2261 = vmatprep.subr.bf16.mxu0 0
      %2262 = vmatpush1.bf16.msra.mxu0 0
      %2263 = vmatprep.subr.bf16.mxu0 0
      %2264 = vmatpush1.bf16.msra.mxu0 0
      %2265 = vmatprep.subr.bf16.mxu0 0
      %2266 = vmatpush1.bf16.msra.mxu0 0
      %2267 = vmatprep.subr.bf16.mxu0 0
      %2268 = vmatpush1.bf16.msra.mxu0 0
      %2269 = vmatprep.subr.bf16.mxu0 0
      %2270 = vmatpush1.bf16.msra.mxu0 0
      %2271 = vmatprep.subr.bf16.mxu0 0
      %2272 = vmatpush1.bf16.msra.mxu0 0
      %2273 = vmatprep.subr.bf16.mxu0 0
      %2274 = vmatpush1.bf16.msra.mxu0 0
      %2275 = vmatprep.mubr.bf16.mxu0 0
      %2276 = vmatmul.mubr.bf16.gmra.mrb[0].mxu0 %v2191
      %v2277 = vpop.f32.mrb[0].mxu0
      %v2278 = vadd.f32 0.0, %v2277
      %v2279 = vpop.f32.mrb[0].mxu0
      %v2280 = vpop.f32.mrb[0].mxu0
      %v2281 = vpop.f32.mrb[0].mxu0
      %2282 = vdwg.mxu0
      %v2285 = vcombine.low %v2237, %v2239
      %v2287 = vadd.f32 %v2160, %v2285
      %v2288 = vadd.f32 %v2161, %v2278
      %2289 = vst [vmem:[#allocation2] sm:$0xff] %v2287
      %2290 = vst.msk [vmem:[#allocation2 + $0x8] sm:$0xf] %vm254, %v2288
      %v2291 = vld [vmem:[#allocation2] sm:$0xff]
      %v2292 = vld [vmem:[#allocation2 + $0x8] sm:$0xf]
      %s2293 = scalar_lea.vmem %s3, 12
      %v2294 = vld [vmem:[%s2293] sm:$0x3]
      %v2295 = vld [vmem:[#allocation3] sm:$0x3f]
      %v2297 = vcombine.high %v2295, %v2295
      %v2299 = vunpack.c.l.s4 1983009808
      %v2300 = vunpack.c.0.s8 %v2299
      %v2301 = vlaneseq
      %v2302 = vshrl.u32 %v2301, 7
      %v2303 = vsub.s32 %v2300, %v2302
      %v2304 = vrot.slane %v2295, %v2303
      %v2306 = vunpack.c.l.s4 1983009808
      %v2307 = vunpack.c.0.s8 %v2306
      %v2308 = vlaneseq
      %v2309 = vshrl.u32 %v2308, 7
      %v2310 = vsub.s32 %v2307, %v2309
      %v2311 = vrot.slane %v2297, %v2310
      %v2312 = vcombine.high %v2304, %v2304
      %2313 = vrot.lane.b32.xlu0 %v2304, 92
      %v2314 = vpop.permute.xlu0 %2313
      %2315 = vrot.lane.b32.xlu0 %v2312, 92
      %v2316 = vpop.permute.xlu0 %2315
      %2317 = vrot.lane.b32.xlu0 %v2311, 92
      %v2318 = vpop.permute.xlu0 %2317
      %v2319 = vsel %vm1068, %v2314, %v2316
      %v2320 = vsel %vm1068, %v2316, %v2318
      %v2322 = vsel %vm277, %v2294, 0
      %v2325 = vsel %vm281, %v2319, 0
      %v2328 = vsel %vm281, %v2320, 0
      %v2331 = vsel %vm281, %v2318, 0
      %2333 = vmatprep.subr.bf16.mxu0 %v2328
      %2334 = vmatpush1.bf16.msra.mxu0 %v2325
      %2335 = vmatprep.subr.bf16.mxu0 0
      %2336 = vmatpush1.bf16.msra.mxu0 0
      %2337 = vmatprep.subr.bf16.mxu0 0
      %2338 = vmatpush1.bf16.msra.mxu0 0
      %2339 = vmatprep.subr.bf16.mxu0 0
      %2340 = vmatpush1.bf16.msra.mxu0 0
      %2341 = vmatprep.subr.bf16.mxu0 0
      %2342 = vmatpush1.bf16.msra.mxu0 0
      %2343 = vmatprep.subr.bf16.mxu0 0
      %2344 = vmatpush1.bf16.msra.mxu0 0
      %2345 = vmatprep.subr.bf16.mxu0 0
      %2346 = vmatpush1.bf16.msra.mxu0 0
      %2347 = vmatprep.subr.bf16.mxu0 0
      %2348 = vmatpush1.bf16.msra.mxu0 0
      %2349 = vmatprep.subr.bf16.mxu0 0
      %2350 = vmatpush1.bf16.msra.mxu0 0
      %2351 = vmatprep.subr.bf16.mxu0 0
      %2352 = vmatpush1.bf16.msra.mxu0 0
      %2353 = vmatprep.subr.bf16.mxu0 0
      %2354 = vmatpush1.bf16.msra.mxu0 0
      %2355 = vmatprep.subr.bf16.mxu0 0
      %2356 = vmatpush1.bf16.msra.mxu0 0
      %2357 = vmatprep.subr.bf16.mxu0 0
      %2358 = vmatpush1.bf16.msra.mxu0 0
      %2359 = vmatprep.subr.bf16.mxu0 0
      %2360 = vmatpush1.bf16.msra.mxu0 0
      %2361 = vmatprep.subr.bf16.mxu0 0
      %2362 = vmatpush1.bf16.msra.mxu0 0
      %2363 = vmatprep.subr.bf16.mxu0 0
      %2364 = vmatpush1.bf16.msra.mxu0 0
      %2365 = vmatprep.mubr.bf16.mxu0 0
      %2366 = vmatmul.mubr.bf16.gmra.mrb[0].mxu0 %v2322
      %v2367 = vpop.f32.mrb[0].mxu0
      %v2368 = vadd.f32 0.0, %v2367
      %v2369 = vpop.f32.mrb[0].mxu0
      %v2370 = vadd.f32 0.0, %v2369
      %v2371 = vpop.f32.mrb[0].mxu0
      %v2372 = vpop.f32.mrb[0].mxu0
      %2373 = vdwg.mxu0
      %2374 = vmatprep.subr.bf16.mxu0 0
      %2375 = vmatpush1.bf16.msra.mxu0 %v2331
      %2376 = vmatprep.subr.bf16.mxu0 0
      %2377 = vmatpush1.bf16.msra.mxu0 0
      %2378 = vmatprep.subr.bf16.mxu0 0
      %2379 = vmatpush1.bf16.msra.mxu0 0
      %2380 = vmatprep.subr.bf16.mxu0 0
      %2381 = vmatpush1.bf16.msra.mxu0 0
      %2382 = vmatprep.subr.bf16.mxu0 0
      %2383 = vmatpush1.bf16.msra.mxu0 0
      %2384 = vmatprep.subr.bf16.mxu0 0
      %2385 = vmatpush1.bf16.msra.mxu0 0
      %2386 = vmatprep.subr.bf16.mxu0 0
      %2387 = vmatpush1.bf16.msra.mxu0 0
      %2388 = vmatprep.subr.bf16.mxu0 0
      %2389 = vmatpush1.bf16.msra.mxu0 0
      %2390 = vmatprep.subr.bf16.mxu0 0
      %2391 = vmatpush1.bf16.msra.mxu0 0
      %2392 = vmatprep.subr.bf16.mxu0 0
      %2393 = vmatpush1.bf16.msra.mxu0 0
      %2394 = vmatprep.subr.bf16.mxu0 0
      %2395 = vmatpush1.bf16.msra.mxu0 0
      %2396 = vmatprep.subr.bf16.mxu0 0
      %2397 = vmatpush1.bf16.msra.mxu0 0
      %2398 = vmatprep.subr.bf16.mxu0 0
      %2399 = vmatpush1.bf16.msra.mxu0 0
      %2400 = vmatprep.subr.bf16.mxu0 0
      %2401 = vmatpush1.bf16.msra.mxu0 0
      %2402 = vmatprep.subr.bf16.mxu0 0
      %2403 = vmatpush1.bf16.msra.mxu0 0
      %2404 = vmatprep.subr.bf16.mxu0 0
      %2405 = vmatpush1.bf16.msra.mxu0 0
      %2406 = vmatprep.mubr.bf16.mxu0 0
      %2407 = vmatmul.mubr.bf16.gmra.mrb[0].mxu0 %v2322
      %v2408 = vpop.f32.mrb[0].mxu0
      %v2409 = vadd.f32 0.0, %v2408
      %v2410 = vpop.f32.mrb[0].mxu0
      %v2411 = vpop.f32.mrb[0].mxu0
      %v2412 = vpop.f32.mrb[0].mxu0
      %2413 = vdwg.mxu0
      %v2416 = vcombine.low %v2368, %v2370
      %v2418 = vadd.f32 %v2291, %v2416
      %v2419 = vadd.f32 %v2292, %v2409
      %2420 = vst [vmem:[#allocation2] sm:$0xff] %v2418
      %2421 = vst.msk [vmem:[#allocation2 + $0x8] sm:$0xf] %vm254, %v2419
      %v2422 = vld [vmem:[#allocation2] sm:$0xff]
      %v2423 = vld [vmem:[#allocation2 + $0x8] sm:$0xf]
      %s2424 = scalar_lea.vmem %s3, 14
      %v2425 = vld [vmem:[%s2424] sm:$0x3]
      %v2426 = vld [vmem:[#allocation3] sm:$0x3f]
      %v2428 = vcombine.high %v2426, %v2426
      %v2430 = vunpack.c.l.s4 1983009808
      %v2431 = vunpack.c.0.s8 %v2430
      %v2432 = vlaneseq
      %v2433 = vshrl.u32 %v2432, 7
      %v2434 = vsub.s32 %v2431, %v2433
      %v2435 = vrot.slane %v2426, %v2434
      %v2437 = vunpack.c.l.s4 1983009808
      %v2438 = vunpack.c.0.s8 %v2437
      %v2439 = vlaneseq
      %v2440 = vshrl.u32 %v2439, 7
      %v2441 = vsub.s32 %v2438, %v2440
      %v2442 = vrot.slane %v2428, %v2441
      %v2443 = vcombine.high %v2435, %v2435
      %2444 = vrot.lane.b32.xlu0 %v2435, 91
      %v2445 = vpop.permute.xlu0 %2444
      %2446 = vrot.lane.b32.xlu0 %v2443, 91
      %v2447 = vpop.permute.xlu0 %2446
      %2448 = vrot.lane.b32.xlu0 %v2442, 91
      %v2449 = vpop.permute.xlu0 %2448
      %v2450 = vsel %vm1200, %v2445, %v2447
      %v2451 = vsel %vm1200, %v2447, %v2449
      %v2453 = vsel %vm277, %v2425, 0
      %v2456 = vsel %vm281, %v2450, 0
      %v2459 = vsel %vm281, %v2451, 0
      %v2462 = vsel %vm281, %v2449, 0
      %2464 = vmatprep.subr.bf16.mxu0 %v2459
      %2465 = vmatpush1.bf16.msra.mxu0 %v2456
      %2466 = vmatprep.subr.bf16.mxu0 0
      %2467 = vmatpush1.bf16.msra.mxu0 0
      %2468 = vmatprep.subr.bf16.mxu0 0
      %2469 = vmatpush1.bf16.msra.mxu0 0
      %2470 = vmatprep.subr.bf16.mxu0 0
      %2471 = vmatpush1.bf16.msra.mxu0 0
      %2472 = vmatprep.subr.bf16.mxu0 0
      %2473 = vmatpush1.bf16.msra.mxu0 0
      %2474 = vmatprep.subr.bf16.mxu0 0
      %2475 = vmatpush1.bf16.msra.mxu0 0
      %2476 = vmatprep.subr.bf16.mxu0 0
      %2477 = vmatpush1.bf16.msra.mxu0 0
      %2478 = vmatprep.subr.bf16.mxu0 0
      %2479 = vmatpush1.bf16.msra.mxu0 0
      %2480 = vmatprep.subr.bf16.mxu0 0
      %2481 = vmatpush1.bf16.msra.mxu0 0
      %2482 = vmatprep.subr.bf16.mxu0 0
      %2483 = vmatpush1.bf16.msra.mxu0 0
      %2484 = vmatprep.subr.bf16.mxu0 0
      %2485 = vmatpush1.bf16.msra.mxu0 0
      %2486 = vmatprep.subr.bf16.mxu0 0
      %2487 = vmatpush1.bf16.msra.mxu0 0
      %2488 = vmatprep.subr.bf16.mxu0 0
      %2489 = vmatpush1.bf16.msra.mxu0 0
      %2490 = vmatprep.subr.bf16.mxu0 0
      %2491 = vmatpush1.bf16.msra.mxu0 0
      %2492 = vmatprep.subr.bf16.mxu0 0
      %2493 = vmatpush1.bf16.msra.mxu0 0
      %2494 = vmatprep.subr.bf16.mxu0 0
      %2495 = vmatpush1.bf16.msra.mxu0 0
      %2496 = vmatprep.mubr.bf16.mxu0 0
      %2497 = vmatmul.mubr.bf16.gmra.mrb[0].mxu0 %v2453
      %v2498 = vpop.f32.mrb[0].mxu0
      %v2499 = vadd.f32 0.0, %v2498
      %v2500 = vpop.f32.mrb[0].mxu0
      %v2501 = vadd.f32 0.0, %v2500
      %v2502 = vpop.f32.mrb[0].mxu0
      %v2503 = vpop.f32.mrb[0].mxu0
      %2504 = vdwg.mxu0
      %2505 = vmatprep.subr.bf16.mxu0 0
      %2506 = vmatpush1.bf16.msra.mxu0 %v2462
      %2507 = vmatprep.subr.bf16.mxu0 0
      %2508 = vmatpush1.bf16.msra.mxu0 0
      %2509 = vmatprep.subr.bf16.mxu0 0
      %2510 = vmatpush1.bf16.msra.mxu0 0
      %2511 = vmatprep.subr.bf16.mxu0 0
      %2512 = vmatpush1.bf16.msra.mxu0 0
      %2513 = vmatprep.subr.bf16.mxu0 0
      %2514 = vmatpush1.bf16.msra.mxu0 0
      %2515 = vmatprep.subr.bf16.mxu0 0
      %2516 = vmatpush1.bf16.msra.mxu0 0
      %2517 = vmatprep.subr.bf16.mxu0 0
      %2518 = vmatpush1.bf16.msra.mxu0 0
      %2519 = vmatprep.subr.bf16.mxu0 0
      %2520 = vmatpush1.bf16.msra.mxu0 0
      %2521 = vmatprep.subr.bf16.mxu0 0
      %2522 = vmatpush1.bf16.msra.mxu0 0
      %2523 = vmatprep.subr.bf16.mxu0 0
      %2524 = vmatpush1.bf16.msra.mxu0 0
      %2525 = vmatprep.subr.bf16.mxu0 0
      %2526 = vmatpush1.bf16.msra.mxu0 0
      %2527 = vmatprep.subr.bf16.mxu0 0
      %2528 = vmatpush1.bf16.msra.mxu0 0
      %2529 = vmatprep.subr.bf16.mxu0 0
      %2530 = vmatpush1.bf16.msra.mxu0 0
      %2531 = vmatprep.subr.bf16.mxu0 0
      %2532 = vmatpush1.bf16.msra.mxu0 0
      %2533 = vmatprep.subr.bf16.mxu0 0
      %2534 = vmatpush1.bf16.msra.mxu0 0
      %2535 = vmatprep.subr.bf16.mxu0 0
      %2536 = vmatpush1.bf16.msra.mxu0 0
      %2537 = vmatprep.mubr.bf16.mxu0 0
      %2538 = vmatmul.mubr.bf16.gmra.mrb[0].mxu0 %v2453
      %v2539 = vpop.f32.mrb[0].mxu0
      %v2540 = vadd.f32 0.0, %v2539
      %v2541 = vpop.f32.mrb[0].mxu0
      %v2542 = vpop.f32.mrb[0].mxu0
      %v2543 = vpop.f32.mrb[0].mxu0
      %2544 = vdwg.mxu0
      %v2547 = vcombine.low %v2499, %v2501
      %v2549 = vadd.f32 %v2422, %v2547
      %v2550 = vadd.f32 %v2423, %v2540
      %2551 = vst [vmem:[#allocation2] sm:$0xff] %v2549
      %2552 = vst.msk [vmem:[#allocation2 + $0x8] sm:$0xf] %vm254, %v2550
      %v2553 = vld [vmem:[#allocation2] sm:$0xff]
      %v2554 = vld [vmem:[#allocation2 + $0x8] sm:$0xf]
      %s2555 = scalar_lea.vmem %s3, 16
      %v2556 = vld [vmem:[%s2555] sm:$0x3]
      %v2557 = vld [vmem:[#allocation3] sm:$0x3f]
      %v2559 = vcombine.high %v2557, %v2557
      %v2561 = vunpack.c.l.s4 1983009808
      %v2562 = vunpack.c.0.s8 %v2561
      %v2563 = vlaneseq
      %v2564 = vshrl.u32 %v2563, 7
      %v2565 = vsub.s32 %v2562, %v2564
      %v2566 = vrot.slane %v2557, %v2565
      %v2568 = vunpack.c.l.s4 1983009808
      %v2569 = vunpack.c.0.s8 %v2568
      %v2570 = vlaneseq
      %v2571 = vshrl.u32 %v2570, 7
      %v2572 = vsub.s32 %v2569, %v2571
      %v2573 = vrot.slane %v2559, %v2572
      %v2574 = vcombine.high %v2566, %v2566
      %2575 = vrot.lane.b32.xlu0 %v2566, 90
      %v2576 = vpop.permute.xlu0 %2575
      %2577 = vrot.lane.b32.xlu0 %v2574, 90
      %v2578 = vpop.permute.xlu0 %2577
      %2579 = vrot.lane.b32.xlu0 %v2573, 90
      %v2580 = vpop.permute.xlu0 %2579
      %v2581 = vsel %vm1332, %v2576, %v2578
      %v2582 = vsel %vm1332, %v2578, %v2580
      %v2584 = vsel %vm277, %v2556, 0
      %v2587 = vsel %vm281, %v2581, 0
      %v2590 = vsel %vm281, %v2582, 0
      %v2593 = vsel %vm281, %v2580, 0
      %2595 = vmatprep.subr.bf16.mxu0 %v2590
      %2596 = vmatpush1.bf16.msra.mxu0 %v2587
      %2597 = vmatprep.subr.bf16.mxu0 0
      %2598 = vmatpush1.bf16.msra.mxu0 0
      %2599 = vmatprep.subr.bf16.mxu0 0
      %2600 = vmatpush1.bf16.msra.mxu0 0
      %2601 = vmatprep.subr.bf16.mxu0 0
      %2602 = vmatpush1.bf16.msra.mxu0 0
      %2603 = vmatprep.subr.bf16.mxu0 0
      %2604 = vmatpush1.bf16.msra.mxu0 0
      %2605 = vmatprep.subr.bf16.mxu0 0
      %2606 = vmatpush1.bf16.msra.mxu0 0
      %2607 = vmatprep.subr.bf16.mxu0 0
      %2608 = vmatpush1.bf16.msra.mxu0 0
      %2609 = vmatprep.subr.bf16.mxu0 0
      %2610 = vmatpush1.bf16.msra.mxu0 0
      %2611 = vmatprep.subr.bf16.mxu0 0
      %2612 = vmatpush1.bf16.msra.mxu0 0
      %2613 = vmatprep.subr.bf16.mxu0 0
      %2614 = vmatpush1.bf16.msra.mxu0 0
      %2615 = vmatprep.subr.bf16.mxu0 0
      %2616 = vmatpush1.bf16.msra.mxu0 0
      %2617 = vmatprep.subr.bf16.mxu0 0
      %2618 = vmatpush1.bf16.msra.mxu0 0
      %2619 = vmatprep.subr.bf16.mxu0 0
      %2620 = vmatpush1.bf16.msra.mxu0 0
      %2621 = vmatprep.subr.bf16.mxu0 0
      %2622 = vmatpush1.bf16.msra.mxu0 0
      %2623 = vmatprep.subr.bf16.mxu0 0
      %2624 = vmatpush1.bf16.msra.mxu0 0
      %2625 = vmatprep.subr.bf16.mxu0 0
      %2626 = vmatpush1.bf16.msra.mxu0 0
      %2627 = vmatprep.mubr.bf16.mxu0 0
      %2628 = vmatmul.mubr.bf16.gmra.mrb[0].mxu0 %v2584
      %v2629 = vpop.f32.mrb[0].mxu0
      %v2630 = vadd.f32 0.0, %v2629
      %v2631 = vpop.f32.mrb[0].mxu0
      %v2632 = vadd.f32 0.0, %v2631
      %v2633 = vpop.f32.mrb[0].mxu0
      %v2634 = vpop.f32.mrb[0].mxu0
      %2635 = vdwg.mxu0
      %2636 = vmatprep.subr.bf16.mxu0 0
      %2637 = vmatpush1.bf16.msra.mxu0 %v2593
      %2638 = vmatprep.subr.bf16.mxu0 0
      %2639 = vmatpush1.bf16.msra.mxu0 0
      %2640 = vmatprep.subr.bf16.mxu0 0
      %2641 = vmatpush1.bf16.msra.mxu0 0
      %2642 = vmatprep.subr.bf16.mxu0 0
      %2643 = vmatpush1.bf16.msra.mxu0 0
      %2644 = vmatprep.subr.bf16.mxu0 0
      %2645 = vmatpush1.bf16.msra.mxu0 0
      %2646 = vmatprep.subr.bf16.mxu0 0
      %2647 = vmatpush1.bf16.msra.mxu0 0
      %2648 = vmatprep.subr.bf16.mxu0 0
      %2649 = vmatpush1.bf16.msra.mxu0 0
      %2650 = vmatprep.subr.bf16.mxu0 0
      %2651 = vmatpush1.bf16.msra.mxu0 0
      %2652 = vmatprep.subr.bf16.mxu0 0
      %2653 = vmatpush1.bf16.msra.mxu0 0
      %2654 = vmatprep.subr.bf16.mxu0 0
      %2655 = vmatpush1.bf16.msra.mxu0 0
      %2656 = vmatprep.subr.bf16.mxu0 0
      %2657 = vmatpush1.bf16.msra.mxu0 0
      %2658 = vmatprep.subr.bf16.mxu0 0
      %2659 = vmatpush1.bf16.msra.mxu0 0
      %2660 = vmatprep.subr.bf16.mxu0 0
      %2661 = vmatpush1.bf16.msra.mxu0 0
      %2662 = vmatprep.subr.bf16.mxu0 0
      %2663 = vmatpush1.bf16.msra.mxu0 0
      %2664 = vmatprep.subr.bf16.mxu0 0
      %2665 = vmatpush1.bf16.msra.mxu0 0
      %2666 = vmatprep.subr.bf16.mxu0 0
      %2667 = vmatpush1.bf16.msra.mxu0 0
      %2668 = vmatprep.mubr.bf16.mxu0 0
      %2669 = vmatmul.mubr.bf16.gmra.mrb[0].mxu0 %v2584
      %v2670 = vpop.f32.mrb[0].mxu0
      %v2671 = vadd.f32 0.0, %v2670
      %v2672 = vpop.f32.mrb[0].mxu0
      %v2673 = vpop.f32.mrb[0].mxu0
      %v2674 = vpop.f32.mrb[0].mxu0
      %2675 = vdwg.mxu0
      %v2678 = vcombine.low %v2630, %v2632
      %v2680 = vadd.f32 %v2553, %v2678
      %v2681 = vadd.f32 %v2554, %v2671
      %2682 = vst [vmem:[#allocation2] sm:$0xff] %v2680
      %2683 = vst.msk [vmem:[#allocation2 + $0x8] sm:$0xf] %vm254, %v2681
      %v2684 = vld [vmem:[%s246] sm:$0x3f]
      %v2685 = vunpack.c.l.bf16 %v2684
      %v2686 = vunpack.c.h.bf16 %v2684
      %v2687 = vld [vmem:[#allocation2] sm:$0xff]
      %v2688 = vld [vmem:[#allocation2 + $0x8] sm:$0xf]
      %v2689 = vld [vmem:[%s4] sm:$0xf]
      %2691 = vset.pattern.permute.xlu0 0
      %2692 = vperm.xlu0 %2691, %v2689
      %v2693 = vpop.permute.xlu0 %2692
      %v2695 = vunpack.c.l.s4 839922192
      %v2696 = vunpack.c.0.s8 %v2695
      %v2697 = vlaneseq
      %v2698 = vshrl.u32 %v2697, 7
      %v2699 = vsub.s32 %v2696, %v2698
      %v2700 = vrot.slane %v2693, %v2699
      %v2702 = vadd.f32 %v2687, %v2700
      %v2703 = vadd.f32 %v2688, %v2700
      %2706 = vrot.lane.b32.xlu0 %v2685, 109
      %v2707 = vpop.permute.xlu0 %2706
      %2708 = vrot.lane.b32.xlu0 %v2686, 109
      %v2709 = vpop.permute.xlu0 %2708
      %v2710 = vrot.slane %v2707, 4
      %v2711 = vrot.slane %v2709, 4
      %vm2712 = vcmask 1043456
      %v2713 = vsel %vm2712, %v2710, %v2711
      %vm2714 = vcmask 891904
      %v2715 = vsel %vm2714, %v2707, %v2713
      %v2718 = vadd.f32 %v2702, %v2715
      %v2719 = vadd.f32 %v2703, %v2709
      %v2720 = vmax.f32 %v2718, 0.0
      %v2721 = vmax.f32 %v2719, 0.0
      %2722 = vst [vmem:[%s251] sm:$0xff] %v2720
      %2723 = vst.msk [vmem:[%s251 + $0x8] sm:$0xf] %vm254, %v2721
      %p2724 = scmp.lt.s32.totalorder %s17, 1
      %s2725 = scalar_select %p2724, %s17, 1
      %s2726 = smul.addr %s2725, 3
      %s2727 = smul.addr %s2726, 4
      %s2728 = scalar_lea.vmem %s6, %s2727
      // Predicated region
      $region45: #{basic_block_forward.1} parent=43 // pred_check
        %p2729 = pneg %p166
      $region46: #{basic_block_forward.1} parent=43 // pred_check_branch
        %2731 = sbr.rel (%p2729) target = $region48
      $region47: #{basic_block_forward.1} parent=43 // pred_region
        _
      $region48: #{basic_block_forward.1} parent=43 // pred_fallthru
        _
    $region44: #{basic_block_forward.1} parent=5 // pred_fallthru
      _
    %p2732 = scmp.le.s32.totalorder 2, %s12
    // Predicated region
    $region49: #{basic_block_forward.1} parent=5 // pred_check
      %p2733 = pneg %p2732
    $region50: #{basic_block_forward.1} parent=5 // pred_check_branch
      %2735 = sbr.rel (%p2733) target = $region52
    $region51: #{basic_block_forward.1} parent=5 // pred_region
      %s2736 = ssub.s32 %s12, 2
      // Predicated region
      $region53: #{basic_block_forward.1} parent=51 // pred_check
        %p2737 = pneg %p172
      $region54: #{basic_block_forward.1} parent=51 // pred_check_branch
        %2739 = sbr.rel (%p2737) target = $region56
      $region55: #{basic_block_forward.1} parent=51 // pred_region
        %p2740 = scmp.lt.s32.totalorder %s18, 1
        %s2741 = scalar_select %p2740, %s18, 1
        %s2742 = smul.addr %s2741, 3
        %s2743 = smul.addr %s2742, 4
        %s2744 = scalar_lea.vmem %s6, %s2743
      $region56: #{basic_block_forward.1} parent=51 // pred_fallthru
        _
    $region52: #{basic_block_forward.1} parent=5 // pred_fallthru
      _
  $region6: #{basic_block_forward.1} parent=0 // loop_footer
    %s16 = sadd.s32 1, %s12
  $region7: #{basic_block_forward.1} parent=0 // loop_footer_branch
    %11 = sbr.rel target = $region3
  $region8: #{basic_block_forward.1} parent=0 // loop_exit
    _

</llo_original>
